<compile_context>
chip_gen: v7x
topology: tpu7x:2x2x1
jax: 0.10.0
libtpu: 0.0.40
codegen_flags: <defaults>
</compile_context>

<pallas_src>
import functools

import jax
import jax.numpy as jnp
from jax.experimental import pallas as pl
from jax.experimental.pallas import tpu as pltpu


def _round_up(x, m):
    return (x + m - 1) // m * m


# ----------------------------- Pallas kernel --------------------------------
def _fused_matmul_bias_act_kernel(x_ref, w_ref, b_ref, o_ref, acc_ref, *, slope):
    """One (TM,TN) output tile; K is the trailing 'arbitrary' grid axis."""
    k = pl.program_id(2)

    @pl.when(k == 0)
    def _():
        acc_ref[...] = jnp.zeros_like(acc_ref)

    # bf16 x bf16 -> f32 accumulation on the MXU.
    acc_ref[...] += jnp.dot(x_ref[...], w_ref[...], preferred_element_type=jnp.float32)

    @pl.when(k == pl.num_programs(2) - 1)
    def _():
        y = acc_ref[...] + b_ref[...]              # bias in f32
        y = jnp.where(y >= 0.0, y, slope * y)      # LeakyReLU (slope=1.0 -> identity)
        o_ref[...] = y.astype(o_ref.dtype)


def fused_matmul_bias_act(x, w, b, slope=1.0, out_dtype=jnp.float32):
    """y = leaky_relu(x @ w + b, slope) with M/N/K tiling, bf16 MXU inputs, f32 accum.

    x: (M, K), w: (K, N), b: (N,).  Zero-padded to tile multiples; padding is sliced off.
    """
    M, K = x.shape
    K2, N = w.shape
    assert K == K2

    # Tile sizes: multiples of (8, 128); sized to stay well under v7x's 64 MiB VMEM
    # (double-buffered bf16 tiles + f32 accumulator ~ 11 MiB worst case).
    TM = min(512, _round_up(M, 8))
    TK = min(2048, _round_up(K, 128))
    TN = min(512, _round_up(N, 128))
    Mp, Kp, Np = _round_up(M, TM), _round_up(K, TK), _round_up(N, TN)

    xb = jnp.pad(x.astype(jnp.bfloat16), ((0, Mp - M), (0, Kp - K)))
    wb = jnp.pad(w.astype(jnp.bfloat16), ((0, Kp - K), (0, Np - N)))
    bb = jnp.pad(b.reshape(1, N).astype(jnp.float32), ((0, 0), (0, Np - N)))

    grid = (Mp // TM, Np // TN, Kp // TK)
    kern = functools.partial(_fused_matmul_bias_act_kernel, slope=slope)

    out = pl.pallas_call(
        kern,
        out_shape=jax.ShapeDtypeStruct((Mp, Np), out_dtype),
        grid_spec=pltpu.PrefetchScalarGridSpec(
            num_scalar_prefetch=0,
            grid=grid,
            in_specs=[
                pl.BlockSpec((TM, TK), lambda i, j, k: (i, k)),   # activations / patches
                pl.BlockSpec((TK, TN), lambda i, j, k: (k, j)),   # weights
                pl.BlockSpec((1, TN), lambda i, j, k: (0, j)),    # bias (f32)
            ],
            out_specs=pl.BlockSpec((TM, TN), lambda i, j, k: (i, j)),
            scratch_shapes=[pltpu.VMEM((TM, TN), jnp.float32)],   # f32 accumulator
        ),
        compiler_params=pltpu.CompilerParams(
            dimension_semantics=("parallel", "parallel", "arbitrary")),
    )(xb, wb, bb)
    return out[:M, :N]


# ------------------------------ JAX glue -------------------------------------
def im2col_3d(x_ndhwc, ksize=4, stride=2, pad=1):
    """Pure data movement: extract (k^3 * C) patches per output voxel (kept in bf16)."""
    N, D, H, W, C = x_ndhwc.shape
    Do = (D + 2 * pad - ksize) // stride + 1
    Ho = (H + 2 * pad - ksize) // stride + 1
    Wo = (W + 2 * pad - ksize) // stride + 1
    xp = jnp.pad(x_ndhwc, ((0, 0), (pad, pad), (pad, pad), (pad, pad), (0, 0)))
    taps = []
    for kd in range(ksize):
        for kh in range(ksize):
            for kw in range(ksize):
                sl = jax.lax.slice(
                    xp,
                    (0, kd, kh, kw, 0),
                    (N,
                     kd + stride * (Do - 1) + 1,
                     kh + stride * (Ho - 1) + 1,
                     kw + stride * (Wo - 1) + 1,
                     C),
                    (1, stride, stride, stride, 1))
                taps.append(sl)  # (N, Do, Ho, Wo, C)
    patches = jnp.stack(taps, axis=4)  # (N, Do, Ho, Wo, k^3, C)  tap-major, chan-minor
    patches = patches.reshape(N * Do * Ho * Wo, ksize ** 3 * C)
    return patches, (N, Do, Ho, Wo)


def conv3d_lrelu(x_ndhwc, w_oidhw, b, slope=0.01, out_dtype=jnp.bfloat16):
    """Conv3d(kernel=4, stride=2, pad=1) + LeakyReLU; all FLOPs inside the Pallas kernel."""
    Cout, Cin, kd, kh, kw = w_oidhw.shape
    patches, (N, Do, Ho, Wo) = im2col_3d(
        x_ndhwc.astype(jnp.bfloat16), ksize=kd, stride=2, pad=1)
    # weight rows ordered (kd, kh, kw, Cin) to match the patch layout above
    w_mat = jnp.transpose(w_oidhw, (2, 3, 4, 1, 0)).reshape(kd * kh * kw * Cin, Cout)
    y = fused_matmul_bias_act(patches, w_mat, b, slope=slope, out_dtype=out_dtype)
    return y.reshape(N, Do, Ho, Wo, Cout)


# ----------------------------- parameters ------------------------------------
def init_params(key, param):
    dim, nf_in, res, ks = param['n_features'], param['c_in'], param['res'], 4
    chans = [nf_in, dim, 2 * dim, 4 * dim, 8 * dim]
    params = {}
    for li in range(4):
        key, k1, k2 = jax.random.split(key, 3)
        cin, cout = chans[li], chans[li + 1]
        params[f'conv{li}_w'] = 0.05 * jax.random.normal(k1, (cout, cin, ks, ks, ks), jnp.float32)
        params[f'conv{li}_b'] = 0.05 * jax.random.normal(k2, (cout,), jnp.float32)
    c_in_lin = int(8 * dim * res ** 3 / 8 ** 4)
    key, k1, k2 = jax.random.split(key, 3)
    params['lin_w'] = 0.05 * jax.random.normal(k1, (1, c_in_lin), jnp.float32)  # torch layout
    params['lin_b'] = 0.05 * jax.random.normal(k2, (1,), jnp.float32)
    return params


# ------------------------------- forward --------------------------------------
def netD_3d_forward(params, x_ncdhw, slope=0.01):
    bs = x_ncdhw.shape[0]
    x = jnp.transpose(x_ncdhw, (0, 2, 3, 4, 1))            # NCDHW -> NDHWC (once, on input)
    for li in range(4):
        x = conv3d_lrelu(x, params[f'conv{li}_w'], params[f'conv{li}_b'],
                         slope=slope, out_dtype=jnp.bfloat16)
    # Flatten NDHWC directly; permute the Linear weight (trace-time, tiny) to NDHWC
    # flatten order instead of transposing the activation back to NCDHW.
    _, D, H, W, C = x.shape
    x_flat = x.reshape(bs, D * H * W * C)
    w_lin = params['lin_w']                                  # (1, C*D*H*W), torch order
    w_ndhwc = jnp.transpose(w_lin.reshape(1, C, D, H, W), (0, 2, 3, 4, 1))
    w_ndhwc = w_ndhwc.reshape(1, D * H * W * C)
    return fused_matmul_bias_act(x_flat, w_ndhwc.T, params['lin_b'],
                                 slope=1.0, out_dtype=jnp.float32)


# ---------------------------- pure-JAX reference -------------------------------
def reference_forward(params, x_ncdhw, slope=0.01):
    x = x_ncdhw
    dn = jax.lax.conv_dimension_numbers(x.shape, params['conv0_w'].shape,
                                        ('NCDHW', 'OIDHW', 'NCDHW'))
    for li in range(4):
        w, b = params[f'conv{li}_w'], params[f'conv{li}_b']
        x = jax.lax.conv_general_dilated(x, w, (2, 2, 2), [(1, 1)] * 3,
                                         dimension_numbers=dn)
        x = x + b.reshape(1, -1, 1, 1, 1)
        x = jnp.where(x >= 0, x, slope * x)
    x = x.reshape(x.shape[0], -1)
    return x @ params['lin_w'].T + params['lin_b']


if __name__ == "__main__":
    # small, self-consistent shapes: res=16 -> after 4 stride-2 convs spatial = 1^3,
    # linear c_in = 8*dim = 32
    param = {'n_features': 4, 'c_in': 2, 'non_linearity': 'leaky_relu', 'res': 16}
    key = jax.random.PRNGKey(0)
    kx, kp = jax.random.split(key)
    x = jax.random.normal(
        kx, (2, param['c_in'], param['res'], param['res'], param['res']), jnp.float32)
    params = init_params(kp, param)

    y = jax.jit(netD_3d_forward)(params, x)
    y = jax.block_until_ready(y)

    y_ref = reference_forward(params, x)
    assert y.shape == (2, 1)
    # bf16 MXU inputs with f32 accumulation: compare against the f32 reference with a
    # tolerance appropriate for bf16 (~3 decimal digits) across 5 stacked matmuls.
    assert bool(jnp.allclose(y, y_ref, rtol=2e-2, atol=2e-2)), (y, y_ref)
    print("KERNEL_OK")
</pallas_src>

<mosaic_0001>
module attributes {stable_mosaic.version = 11 : i64} {
  func.func @_fused_matmul_bias_act_kernel(%arg0: i32, %arg1: i32, %arg2: i32, %arg3: memref<512x128xbf16, #tpu.memory_space<vmem>>, %arg4: memref<128x128xbf16, #tpu.memory_space<vmem>>, %arg5: memref<1x128xf32, #tpu.memory_space<vmem>>, %arg6: memref<512x128xbf16, #tpu.memory_space<vmem>>, %arg7: memref<512x128xf32, #tpu.memory_space<vmem>>) attributes {dimension_semantics = [#tpu.dimension_semantics<parallel>, #tpu.dimension_semantics<parallel>, #tpu.dimension_semantics<arbitrary>], iteration_bounds = array<i64: 2, 1, 1>, scalar_prefetch = 0 : i64, scratch_operands = 1 : i64, tpu.core_type = #tpu.core_type<tc>, window_params = [{transform_indices = @transform_0, window_bounds = array<i64: 512, 128>}, {transform_indices = @transform_1, window_bounds = array<i64: 128, 128>}, {transform_indices = @transform_2, window_bounds = array<i64: 1, 128>}, {transform_indices = @transform_3, window_bounds = array<i64: 512, 128>}]} {
    %c0_i32 = arith.constant 0 : i32
    %0 = arith.cmpi eq, %arg2, %c0_i32 : i32
    %1 = arith.extui %0 : i1 to i32
    %c0_i32_0 = arith.constant 0 : i32
    %2 = arith.cmpi ne, %1, %c0_i32_0 : i32
    scf.if %2 {
      %cst_10 = arith.constant 0.000000e+00 : f32
      %12 = vector.broadcast %cst_10 : f32 to vector<512x128xf32>
      %c0_11 = arith.constant 0 : index
      %c0_12 = arith.constant 0 : index
      %13 = vector.load %arg7[%c0_11, %c0_12] : memref<512x128xf32, #tpu.memory_space<vmem>>, vector<512x128xf32>
      tpu.vector_store %arg7[%c0_11, %c0_12], %12 {strides = array<i32>} : memref<512x128xf32, #tpu.memory_space<vmem>>, vector<512x128xf32>,
    } else {
    }
    %c0 = arith.constant 0 : index
    %c0_1 = arith.constant 0 : index
    %3 = vector.load %arg7[%c0, %c0_1] : memref<512x128xf32, #tpu.memory_space<vmem>>, vector<512x128xf32>
    %c0_2 = arith.constant 0 : index
    %c0_3 = arith.constant 0 : index
    %4 = vector.load %arg3[%c0_2, %c0_3] : memref<512x128xbf16, #tpu.memory_space<vmem>>, vector<512x128xbf16>
    %c0_4 = arith.constant 0 : index
    %c0_5 = arith.constant 0 : index
    %5 = vector.load %arg4[%c0_4, %c0_5] : memref<128x128xbf16, #tpu.memory_space<vmem>>, vector<128x128xbf16>
    %cst = arith.constant dense<0.000000e+00> : vector<512x128xf32>
    %6 = tpu.matmul %4, %5, %cst {dimension_numbers = #tpu.dot_dimension_numbers<[1], [0], [0], [1], [0, 0, 1, 1], [], []>} : vector<512x128xbf16>, vector<128x128xbf16>, vector<512x128xf32> -> vector<512x128xf32>
    %7 = arith.addf %3, %6 : vector<512x128xf32>
    %c0_6 = arith.constant 0 : index
    %c0_7 = arith.constant 0 : index
    %8 = vector.load %arg7[%c0_6, %c0_7] : memref<512x128xf32, #tpu.memory_space<vmem>>, vector<512x128xf32>
    tpu.vector_store %arg7[%c0_6, %c0_7], %7 {strides = array<i32>} : memref<512x128xf32, #tpu.memory_space<vmem>>, vector<512x128xf32>,
    %c0_i32_8 = arith.constant 0 : i32
    %9 = arith.cmpi eq, %arg2, %c0_i32_8 : i32
    %10 = arith.extui %9 : i1 to i32
    %c0_i32_9 = arith.constant 0 : i32
    %11 = arith.cmpi ne, %10, %c0_i32_9 : i32
    scf.if %11 {
      %c0_10 = arith.constant 0 : index
      %c0_11 = arith.constant 0 : index
      %12 = vector.load %arg7[%c0_10, %c0_11] : memref<512x128xf32, #tpu.memory_space<vmem>>, vector<512x128xf32>
      %c0_12 = arith.constant 0 : index
      %c0_13 = arith.constant 0 : index
      %13 = vector.load %arg5[%c0_12, %c0_13] : memref<1x128xf32, #tpu.memory_space<vmem>>, vector<1x128xf32>
      %14 = vector.broadcast %13 : vector<1x128xf32> to vector<512x128xf32>
      %15 = arith.addf %12, %14 : vector<512x128xf32>
      %cst_14 = arith.constant 0.000000e+00 : f32
      %16 = vector.broadcast %cst_14 : f32 to vector<512x128xf32>
      %17 = arith.cmpf oge, %15, %16 : vector<512x128xf32>
      %cst_15 = arith.constant 0.00999999977 : f32
      %18 = vector.broadcast %cst_15 : f32 to vector<512x128xf32>
      %19 = arith.mulf %18, %15 : vector<512x128xf32>
      %20 = arith.select %17, %15, %19 : vector<512x128xi1>, vector<512x128xf32>
      %21 = arith.truncf %20 : vector<512x128xf32> to vector<512x128xbf16>
      %c0_16 = arith.constant 0 : index
      %c0_17 = arith.constant 0 : index
      %22 = vector.load %arg6[%c0_16, %c0_17] : memref<512x128xbf16, #tpu.memory_space<vmem>>, vector<512x128xbf16>
      tpu.vector_store %arg6[%c0_16, %c0_17], %21 {strides = array<i32>} : memref<512x128xbf16, #tpu.memory_space<vmem>>, vector<512x128xbf16>,
    } else {
    }
    return
  }
  func.func @transform_0(%arg0: i32, %arg1: i32, %arg2: i32) -> (i32, i32) {
    %c0_i32 = arith.constant 0 : i32
    return %arg0, %arg2 : i32, i32
  }
  func.func @transform_1(%arg0: i32, %arg1: i32, %arg2: i32) -> (i32, i32) {
    %c0_i32 = arith.constant 0 : i32
    return %arg2, %arg1 : i32, i32
  }
  func.func @transform_2(%arg0: i32, %arg1: i32, %arg2: i32) -> (i32, i32) {
    %c0_i32 = arith.constant 0 : i32
    %c0_i32_0 = arith.constant 0 : i32
    return %c0_i32, %arg1 : i32, i32
  }
  func.func @transform_3(%arg0: i32, %arg1: i32, %arg2: i32) -> (i32, i32) {
    %c0_i32 = arith.constant 0 : i32
    return %arg0, %arg1 : i32, i32
  }
}

module attributes {stable_mosaic.version = 11 : i64} {
  func.func @_fused_matmul_bias_act_kernel(%arg0: i32, %arg1: i32, %arg2: i32, %arg3: memref<128x256xbf16, #tpu.memory_space<vmem>>, %arg4: memref<256x128xbf16, #tpu.memory_space<vmem>>, %arg5: memref<1x128xf32, #tpu.memory_space<vmem>>, %arg6: memref<128x128xbf16, #tpu.memory_space<vmem>>, %arg7: memref<128x128xf32, #tpu.memory_space<vmem>>) attributes {dimension_semantics = [#tpu.dimension_semantics<parallel>, #tpu.dimension_semantics<parallel>, #tpu.dimension_semantics<arbitrary>], iteration_bounds = array<i64: 1, 1, 1>, scalar_prefetch = 0 : i64, scratch_operands = 1 : i64, tpu.core_type = #tpu.core_type<tc>, window_params = [{transform_indices = @transform_0, window_bounds = array<i64: 128, 256>}, {transform_indices = @transform_1, window_bounds = array<i64: 256, 128>}, {transform_indices = @transform_2, window_bounds = array<i64: 1, 128>}, {transform_indices = @transform_3, window_bounds = array<i64: 128, 128>}]} {
    %c0_i32 = arith.constant 0 : i32
    %0 = arith.cmpi eq, %arg2, %c0_i32 : i32
    %1 = arith.extui %0 : i1 to i32
    %c0_i32_0 = arith.constant 0 : i32
    %2 = arith.cmpi ne, %1, %c0_i32_0 : i32
    scf.if %2 {
      %cst_10 = arith.constant 0.000000e+00 : f32
      %12 = vector.broadcast %cst_10 : f32 to vector<128x128xf32>
      %c0_11 = arith.constant 0 : index
      %c0_12 = arith.constant 0 : index
      %13 = vector.load %arg7[%c0_11, %c0_12] : memref<128x128xf32, #tpu.memory_space<vmem>>, vector<128x128xf32>
      tpu.vector_store %arg7[%c0_11, %c0_12], %12 {strides = array<i32>} : memref<128x128xf32, #tpu.memory_space<vmem>>, vector<128x128xf32>,
    } else {
    }
    %c0 = arith.constant 0 : index
    %c0_1 = arith.constant 0 : index
    %3 = vector.load %arg7[%c0, %c0_1] : memref<128x128xf32, #tpu.memory_space<vmem>>, vector<128x128xf32>
    %c0_2 = arith.constant 0 : index
    %c0_3 = arith.constant 0 : index
    %4 = vector.load %arg3[%c0_2, %c0_3] : memref<128x256xbf16, #tpu.memory_space<vmem>>, vector<128x256xbf16>
    %c0_4 = arith.constant 0 : index
    %c0_5 = arith.constant 0 : index
    %5 = vector.load %arg4[%c0_4, %c0_5] : memref<256x128xbf16, #tpu.memory_space<vmem>>, vector<256x128xbf16>
    %cst = arith.constant dense<0.000000e+00> : vector<128x128xf32>
    %6 = tpu.matmul %4, %5, %cst {dimension_numbers = #tpu.dot_dimension_numbers<[1], [0], [0], [1], [0, 0, 1, 1], [], []>} : vector<128x256xbf16>, vector<256x128xbf16>, vector<128x128xf32> -> vector<128x128xf32>
    %7 = arith.addf %3, %6 : vector<128x128xf32>
    %c0_6 = arith.constant 0 : index
    %c0_7 = arith.constant 0 : index
    %8 = vector.load %arg7[%c0_6, %c0_7] : memref<128x128xf32, #tpu.memory_space<vmem>>, vector<128x128xf32>
    tpu.vector_store %arg7[%c0_6, %c0_7], %7 {strides = array<i32>} : memref<128x128xf32, #tpu.memory_space<vmem>>, vector<128x128xf32>,
    %c0_i32_8 = arith.constant 0 : i32
    %9 = arith.cmpi eq, %arg2, %c0_i32_8 : i32
    %10 = arith.extui %9 : i1 to i32
    %c0_i32_9 = arith.constant 0 : i32
    %11 = arith.cmpi ne, %10, %c0_i32_9 : i32
    scf.if %11 {
      %c0_10 = arith.constant 0 : index
      %c0_11 = arith.constant 0 : index
      %12 = vector.load %arg7[%c0_10, %c0_11] : memref<128x128xf32, #tpu.memory_space<vmem>>, vector<128x128xf32>
      %c0_12 = arith.constant 0 : index
      %c0_13 = arith.constant 0 : index
      %13 = vector.load %arg5[%c0_12, %c0_13] : memref<1x128xf32, #tpu.memory_space<vmem>>, vector<1x128xf32>
      %14 = vector.broadcast %13 : vector<1x128xf32> to vector<128x128xf32>
      %15 = arith.addf %12, %14 : vector<128x128xf32>
      %cst_14 = arith.constant 0.000000e+00 : f32
      %16 = vector.broadcast %cst_14 : f32 to vector<128x128xf32>
      %17 = arith.cmpf oge, %15, %16 : vector<128x128xf32>
      %cst_15 = arith.constant 0.00999999977 : f32
      %18 = vector.broadcast %cst_15 : f32 to vector<128x128xf32>
      %19 = arith.mulf %18, %15 : vector<128x128xf32>
      %20 = arith.select %17, %15, %19 : vector<128x128xi1>, vector<128x128xf32>
      %21 = arith.truncf %20 : vector<128x128xf32> to vector<128x128xbf16>
      %c0_16 = arith.constant 0 : index
      %c0_17 = arith.constant 0 : index
      %22 = vector.load %arg6[%c0_16, %c0_17] : memref<128x128xbf16, #tpu.memory_space<vmem>>, vector<128x128xbf16>
      tpu.vector_store %arg6[%c0_16, %c0_17], %21 {strides = array<i32>} : memref<128x128xbf16, #tpu.memory_space<vmem>>, vector<128x128xbf16>,
    } else {
    }
    return
  }
  func.func @transform_0(%arg0: i32, %arg1: i32, %arg2: i32) -> (i32, i32) {
    %c0_i32 = arith.constant 0 : i32
    return %arg0, %arg2 : i32, i32
  }
  func.func @transform_1(%arg0: i32, %arg1: i32, %arg2: i32) -> (i32, i32) {
    %c0_i32 = arith.constant 0 : i32
    return %arg2, %arg1 : i32, i32
  }
  func.func @transform_2(%arg0: i32, %arg1: i32, %arg2: i32) -> (i32, i32) {
    %c0_i32 = arith.constant 0 : i32
    %c0_i32_0 = arith.constant 0 : i32
    return %c0_i32, %arg1 : i32, i32
  }
  func.func @transform_3(%arg0: i32, %arg1: i32, %arg2: i32) -> (i32, i32) {
    %c0_i32 = arith.constant 0 : i32
    return %arg0, %arg1 : i32, i32
  }
}

module attributes {stable_mosaic.version = 11 : i64} {
  func.func @_fused_matmul_bias_act_kernel(%arg0: i32, %arg1: i32, %arg2: i32, %arg3: memref<16x512xbf16, #tpu.memory_space<vmem>>, %arg4: memref<512x128xbf16, #tpu.memory_space<vmem>>, %arg5: memref<1x128xf32, #tpu.memory_space<vmem>>, %arg6: memref<16x128xbf16, #tpu.memory_space<vmem>>, %arg7: memref<16x128xf32, #tpu.memory_space<vmem>>) attributes {dimension_semantics = [#tpu.dimension_semantics<parallel>, #tpu.dimension_semantics<parallel>, #tpu.dimension_semantics<arbitrary>], iteration_bounds = array<i64: 1, 1, 1>, scalar_prefetch = 0 : i64, scratch_operands = 1 : i64, tpu.core_type = #tpu.core_type<tc>, window_params = [{transform_indices = @transform_0, window_bounds = array<i64: 16, 512>}, {transform_indices = @transform_1, window_bounds = array<i64: 512, 128>}, {transform_indices = @transform_2, window_bounds = array<i64: 1, 128>}, {transform_indices = @transform_3, window_bounds = array<i64: 16, 128>}]} {
    %c0_i32 = arith.constant 0 : i32
    %0 = arith.cmpi eq, %arg2, %c0_i32 : i32
    %1 = arith.extui %0 : i1 to i32
    %c0_i32_0 = arith.constant 0 : i32
    %2 = arith.cmpi ne, %1, %c0_i32_0 : i32
    scf.if %2 {
      %cst_10 = arith.constant 0.000000e+00 : f32
      %12 = vector.broadcast %cst_10 : f32 to vector<16x128xf32>
      %c0_11 = arith.constant 0 : index
      %c0_12 = arith.constant 0 : index
      %13 = vector.load %arg7[%c0_11, %c0_12] : memref<16x128xf32, #tpu.memory_space<vmem>>, vector<16x128xf32>
      tpu.vector_store %arg7[%c0_11, %c0_12], %12 {strides = array<i32>} : memref<16x128xf32, #tpu.memory_space<vmem>>, vector<16x128xf32>,
    } else {
    }
    %c0 = arith.constant 0 : index
    %c0_1 = arith.constant 0 : index
    %3 = vector.load %arg7[%c0, %c0_1] : memref<16x128xf32, #tpu.memory_space<vmem>>, vector<16x128xf32>
    %c0_2 = arith.constant 0 : index
    %c0_3 = arith.constant 0 : index
    %4 = vector.load %arg3[%c0_2, %c0_3] : memref<16x512xbf16, #tpu.memory_space<vmem>>, vector<16x512xbf16>
    %c0_4 = arith.constant 0 : index
    %c0_5 = arith.constant 0 : index
    %5 = vector.load %arg4[%c0_4, %c0_5] : memref<512x128xbf16, #tpu.memory_space<vmem>>, vector<512x128xbf16>
    %cst = arith.constant dense<0.000000e+00> : vector<16x128xf32>
    %6 = tpu.matmul %4, %5, %cst {dimension_numbers = #tpu.dot_dimension_numbers<[1], [0], [0], [1], [0, 0, 1, 1], [], []>} : vector<16x512xbf16>, vector<512x128xbf16>, vector<16x128xf32> -> vector<16x128xf32>
    %7 = arith.addf %3, %6 : vector<16x128xf32>
    %c0_6 = arith.constant 0 : index
    %c0_7 = arith.constant 0 : index
    %8 = vector.load %arg7[%c0_6, %c0_7] : memref<16x128xf32, #tpu.memory_space<vmem>>, vector<16x128xf32>
    tpu.vector_store %arg7[%c0_6, %c0_7], %7 {strides = array<i32>} : memref<16x128xf32, #tpu.memory_space<vmem>>, vector<16x128xf32>,
    %c0_i32_8 = arith.constant 0 : i32
    %9 = arith.cmpi eq, %arg2, %c0_i32_8 : i32
    %10 = arith.extui %9 : i1 to i32
    %c0_i32_9 = arith.constant 0 : i32
    %11 = arith.cmpi ne, %10, %c0_i32_9 : i32
    scf.if %11 {
      %c0_10 = arith.constant 0 : index
      %c0_11 = arith.constant 0 : index
      %12 = vector.load %arg7[%c0_10, %c0_11] : memref<16x128xf32, #tpu.memory_space<vmem>>, vector<16x128xf32>
      %c0_12 = arith.constant 0 : index
      %c0_13 = arith.constant 0 : index
      %13 = vector.load %arg5[%c0_12, %c0_13] : memref<1x128xf32, #tpu.memory_space<vmem>>, vector<1x128xf32>
      %14 = vector.broadcast %13 : vector<1x128xf32> to vector<16x128xf32>
      %15 = arith.addf %12, %14 : vector<16x128xf32>
      %cst_14 = arith.constant 0.000000e+00 : f32
      %16 = vector.broadcast %cst_14 : f32 to vector<16x128xf32>
      %17 = arith.cmpf oge, %15, %16 : vector<16x128xf32>
      %cst_15 = arith.constant 0.00999999977 : f32
      %18 = vector.broadcast %cst_15 : f32 to vector<16x128xf32>
      %19 = arith.mulf %18, %15 : vector<16x128xf32>
      %20 = arith.select %17, %15, %19 : vector<16x128xi1>, vector<16x128xf32>
      %21 = arith.truncf %20 : vector<16x128xf32> to vector<16x128xbf16>
      %c0_16 = arith.constant 0 : index
      %c0_17 = arith.constant 0 : index
      %22 = vector.load %arg6[%c0_16, %c0_17] : memref<16x128xbf16, #tpu.memory_space<vmem>>, vector<16x128xbf16>
      tpu.vector_store %arg6[%c0_16, %c0_17], %21 {strides = array<i32>} : memref<16x128xbf16, #tpu.memory_space<vmem>>, vector<16x128xbf16>,
    } else {
    }
    return
  }
  func.func @transform_0(%arg0: i32, %arg1: i32, %arg2: i32) -> (i32, i32) {
    %c0_i32 = arith.constant 0 : i32
    return %arg0, %arg2 : i32, i32
  }
  func.func @transform_1(%arg0: i32, %arg1: i32, %arg2: i32) -> (i32, i32) {
    %c0_i32 = arith.constant 0 : i32
    return %arg2, %arg1 : i32, i32
  }
  func.func @transform_2(%arg0: i32, %arg1: i32, %arg2: i32) -> (i32, i32) {
    %c0_i32 = arith.constant 0 : i32
    %c0_i32_0 = arith.constant 0 : i32
    return %c0_i32, %arg1 : i32, i32
  }
  func.func @transform_3(%arg0: i32, %arg1: i32, %arg2: i32) -> (i32, i32) {
    %c0_i32 = arith.constant 0 : i32
    return %arg0, %arg1 : i32, i32
  }
}

module attributes {stable_mosaic.version = 11 : i64} {
  func.func @_fused_matmul_bias_act_kernel(%arg0: i32, %arg1: i32, %arg2: i32, %arg3: memref<8x1024xbf16, #tpu.memory_space<vmem>>, %arg4: memref<1024x128xbf16, #tpu.memory_space<vmem>>, %arg5: memref<1x128xf32, #tpu.memory_space<vmem>>, %arg6: memref<8x128xbf16, #tpu.memory_space<vmem>>, %arg7: memref<8x128xf32, #tpu.memory_space<vmem>>) attributes {dimension_semantics = [#tpu.dimension_semantics<parallel>, #tpu.dimension_semantics<parallel>, #tpu.dimension_semantics<arbitrary>], iteration_bounds = array<i64: 1, 1, 1>, scalar_prefetch = 0 : i64, scratch_operands = 1 : i64, tpu.core_type = #tpu.core_type<tc>, window_params = [{transform_indices = @transform_0, window_bounds = array<i64: 8, 1024>}, {transform_indices = @transform_1, window_bounds = array<i64: 1024, 128>}, {transform_indices = @transform_2, window_bounds = array<i64: 1, 128>}, {transform_indices = @transform_3, window_bounds = array<i64: 8, 128>}]} {
    %c0_i32 = arith.constant 0 : i32
    %0 = arith.cmpi eq, %arg2, %c0_i32 : i32
    %1 = arith.extui %0 : i1 to i32
    %c0_i32_0 = arith.constant 0 : i32
    %2 = arith.cmpi ne, %1, %c0_i32_0 : i32
    scf.if %2 {
      %cst_10 = arith.constant 0.000000e+00 : f32
      %12 = vector.broadcast %cst_10 : f32 to vector<8x128xf32>
      %c0_11 = arith.constant 0 : index
      %c0_12 = arith.constant 0 : index
      %13 = vector.load %arg7[%c0_11, %c0_12] : memref<8x128xf32, #tpu.memory_space<vmem>>, vector<8x128xf32>
      tpu.vector_store %arg7[%c0_11, %c0_12], %12 {strides = array<i32>} : memref<8x128xf32, #tpu.memory_space<vmem>>, vector<8x128xf32>,
    } else {
    }
    %c0 = arith.constant 0 : index
    %c0_1 = arith.constant 0 : index
    %3 = vector.load %arg7[%c0, %c0_1] : memref<8x128xf32, #tpu.memory_space<vmem>>, vector<8x128xf32>
    %c0_2 = arith.constant 0 : index
    %c0_3 = arith.constant 0 : index
    %4 = vector.load %arg3[%c0_2, %c0_3] : memref<8x1024xbf16, #tpu.memory_space<vmem>>, vector<8x1024xbf16>
    %c0_4 = arith.constant 0 : index
    %c0_5 = arith.constant 0 : index
    %5 = vector.load %arg4[%c0_4, %c0_5] : memref<1024x128xbf16, #tpu.memory_space<vmem>>, vector<1024x128xbf16>
    %cst = arith.constant dense<0.000000e+00> : vector<8x128xf32>
    %6 = tpu.matmul %4, %5, %cst {dimension_numbers = #tpu.dot_dimension_numbers<[1], [0], [0], [1], [0, 0, 1, 1], [], []>} : vector<8x1024xbf16>, vector<1024x128xbf16>, vector<8x128xf32> -> vector<8x128xf32>
    %7 = arith.addf %3, %6 : vector<8x128xf32>
    %c0_6 = arith.constant 0 : index
    %c0_7 = arith.constant 0 : index
    %8 = vector.load %arg7[%c0_6, %c0_7] : memref<8x128xf32, #tpu.memory_space<vmem>>, vector<8x128xf32>
    tpu.vector_store %arg7[%c0_6, %c0_7], %7 {strides = array<i32>} : memref<8x128xf32, #tpu.memory_space<vmem>>, vector<8x128xf32>,
    %c0_i32_8 = arith.constant 0 : i32
    %9 = arith.cmpi eq, %arg2, %c0_i32_8 : i32
    %10 = arith.extui %9 : i1 to i32
    %c0_i32_9 = arith.constant 0 : i32
    %11 = arith.cmpi ne, %10, %c0_i32_9 : i32
    scf.if %11 {
      %c0_10 = arith.constant 0 : index
      %c0_11 = arith.constant 0 : index
      %12 = vector.load %arg7[%c0_10, %c0_11] : memref<8x128xf32, #tpu.memory_space<vmem>>, vector<8x128xf32>
      %c0_12 = arith.constant 0 : index
      %c0_13 = arith.constant 0 : index
      %13 = vector.load %arg5[%c0_12, %c0_13] : memref<1x128xf32, #tpu.memory_space<vmem>>, vector<1x128xf32>
      %14 = vector.broadcast %13 : vector<1x128xf32> to vector<8x128xf32>
      %15 = arith.addf %12, %14 : vector<8x128xf32>
      %cst_14 = arith.constant 0.000000e+00 : f32
      %16 = vector.broadcast %cst_14 : f32 to vector<8x128xf32>
      %17 = arith.cmpf oge, %15, %16 : vector<8x128xf32>
      %cst_15 = arith.constant 0.00999999977 : f32
      %18 = vector.broadcast %cst_15 : f32 to vector<8x128xf32>
      %19 = arith.mulf %18, %15 : vector<8x128xf32>
      %20 = arith.select %17, %15, %19 : vector<8x128xi1>, vector<8x128xf32>
      %21 = arith.truncf %20 : vector<8x128xf32> to vector<8x128xbf16>
      %c0_16 = arith.constant 0 : index
      %c0_17 = arith.constant 0 : index
      %22 = vector.load %arg6[%c0_16, %c0_17] : memref<8x128xbf16, #tpu.memory_space<vmem>>, vector<8x128xbf16>
      tpu.vector_store %arg6[%c0_16, %c0_17], %21 {strides = array<i32>} : memref<8x128xbf16, #tpu.memory_space<vmem>>, vector<8x128xbf16>,
    } else {
    }
    return
  }
  func.func @transform_0(%arg0: i32, %arg1: i32, %arg2: i32) -> (i32, i32) {
    %c0_i32 = arith.constant 0 : i32
    return %arg0, %arg2 : i32, i32
  }
  func.func @transform_1(%arg0: i32, %arg1: i32, %arg2: i32) -> (i32, i32) {
    %c0_i32 = arith.constant 0 : i32
    return %arg2, %arg1 : i32, i32
  }
  func.func @transform_2(%arg0: i32, %arg1: i32, %arg2: i32) -> (i32, i32) {
    %c0_i32 = arith.constant 0 : i32
    %c0_i32_0 = arith.constant 0 : i32
    return %c0_i32, %arg1 : i32, i32
  }
  func.func @transform_3(%arg0: i32, %arg1: i32, %arg2: i32) -> (i32, i32) {
    %c0_i32 = arith.constant 0 : i32
    return %arg0, %arg1 : i32, i32
  }
}

module attributes {stable_mosaic.version = 11 : i64} {
  func.func @_fused_matmul_bias_act_kernel(%arg0: i32, %arg1: i32, %arg2: i32, %arg3: memref<8x128xbf16, #tpu.memory_space<vmem>>, %arg4: memref<128x128xbf16, #tpu.memory_space<vmem>>, %arg5: memref<1x128xf32, #tpu.memory_space<vmem>>, %arg6: memref<8x128xf32, #tpu.memory_space<vmem>>, %arg7: memref<8x128xf32, #tpu.memory_space<vmem>>) attributes {dimension_semantics = [#tpu.dimension_semantics<parallel>, #tpu.dimension_semantics<parallel>, #tpu.dimension_semantics<arbitrary>], iteration_bounds = array<i64: 1, 1, 1>, scalar_prefetch = 0 : i64, scratch_operands = 1 : i64, tpu.core_type = #tpu.core_type<tc>, window_params = [{transform_indices = @transform_0, window_bounds = array<i64: 8, 128>}, {transform_indices = @transform_1, window_bounds = array<i64: 128, 128>}, {transform_indices = @transform_2, window_bounds = array<i64: 1, 128>}, {transform_indices = @transform_3, window_bounds = array<i64: 8, 128>}]} {
    %c0_i32 = arith.constant 0 : i32
    %0 = arith.cmpi eq, %arg2, %c0_i32 : i32
    %1 = arith.extui %0 : i1 to i32
    %c0_i32_0 = arith.constant 0 : i32
    %2 = arith.cmpi ne, %1, %c0_i32_0 : i32
    scf.if %2 {
      %cst_10 = arith.constant 0.000000e+00 : f32
      %12 = vector.broadcast %cst_10 : f32 to vector<8x128xf32>
      %c0_11 = arith.constant 0 : index
      %c0_12 = arith.constant 0 : index
      %13 = vector.load %arg7[%c0_11, %c0_12] : memref<8x128xf32, #tpu.memory_space<vmem>>, vector<8x128xf32>
      tpu.vector_store %arg7[%c0_11, %c0_12], %12 {strides = array<i32>} : memref<8x128xf32, #tpu.memory_space<vmem>>, vector<8x128xf32>,
    } else {
    }
    %c0 = arith.constant 0 : index
    %c0_1 = arith.constant 0 : index
    %3 = vector.load %arg7[%c0, %c0_1] : memref<8x128xf32, #tpu.memory_space<vmem>>, vector<8x128xf32>
    %c0_2 = arith.constant 0 : index
    %c0_3 = arith.constant 0 : index
    %4 = vector.load %arg3[%c0_2, %c0_3] : memref<8x128xbf16, #tpu.memory_space<vmem>>, vector<8x128xbf16>
    %c0_4 = arith.constant 0 : index
    %c0_5 = arith.constant 0 : index
    %5 = vector.load %arg4[%c0_4, %c0_5] : memref<128x128xbf16, #tpu.memory_space<vmem>>, vector<128x128xbf16>
    %cst = arith.constant dense<0.000000e+00> : vector<8x128xf32>
    %6 = tpu.matmul %4, %5, %cst {dimension_numbers = #tpu.dot_dimension_numbers<[1], [0], [0], [1], [0, 0, 1, 1], [], []>} : vector<8x128xbf16>, vector<128x128xbf16>, vector<8x128xf32> -> vector<8x128xf32>
    %7 = arith.addf %3, %6 : vector<8x128xf32>
    %c0_6 = arith.constant 0 : index
    %c0_7 = arith.constant 0 : index
    %8 = vector.load %arg7[%c0_6, %c0_7] : memref<8x128xf32, #tpu.memory_space<vmem>>, vector<8x128xf32>
    tpu.vector_store %arg7[%c0_6, %c0_7], %7 {strides = array<i32>} : memref<8x128xf32, #tpu.memory_space<vmem>>, vector<8x128xf32>,
    %c0_i32_8 = arith.constant 0 : i32
    %9 = arith.cmpi eq, %arg2, %c0_i32_8 : i32
    %10 = arith.extui %9 : i1 to i32
    %c0_i32_9 = arith.constant 0 : i32
    %11 = arith.cmpi ne, %10, %c0_i32_9 : i32
    scf.if %11 {
      %c0_10 = arith.constant 0 : index
      %c0_11 = arith.constant 0 : index
      %12 = vector.load %arg7[%c0_10, %c0_11] : memref<8x128xf32, #tpu.memory_space<vmem>>, vector<8x128xf32>
      %c0_12 = arith.constant 0 : index
      %c0_13 = arith.constant 0 : index
      %13 = vector.load %arg5[%c0_12, %c0_13] : memref<1x128xf32, #tpu.memory_space<vmem>>, vector<1x128xf32>
      %14 = vector.broadcast %13 : vector<1x128xf32> to vector<8x128xf32>
      %15 = arith.addf %12, %14 : vector<8x128xf32>
      %cst_14 = arith.constant 0.000000e+00 : f32
      %16 = vector.broadcast %cst_14 : f32 to vector<8x128xf32>
      %17 = arith.cmpf oge, %15, %16 : vector<8x128xf32>
      %cst_15 = arith.constant 1.000000e+00 : f32
      %18 = vector.broadcast %cst_15 : f32 to vector<8x128xf32>
      %19 = arith.mulf %18, %15 : vector<8x128xf32>
      %20 = arith.select %17, %15, %19 : vector<8x128xi1>, vector<8x128xf32>
      %c0_16 = arith.constant 0 : index
      %c0_17 = arith.constant 0 : index
      %21 = vector.load %arg6[%c0_16, %c0_17] : memref<8x128xf32, #tpu.memory_space<vmem>>, vector<8x128xf32>
      tpu.vector_store %arg6[%c0_16, %c0_17], %20 {strides = array<i32>} : memref<8x128xf32, #tpu.memory_space<vmem>>, vector<8x128xf32>,
    } else {
    }
    return
  }
  func.func @transform_0(%arg0: i32, %arg1: i32, %arg2: i32) -> (i32, i32) {
    %c0_i32 = arith.constant 0 : i32
    return %arg0, %arg2 : i32, i32
  }
  func.func @transform_1(%arg0: i32, %arg1: i32, %arg2: i32) -> (i32, i32) {
    %c0_i32 = arith.constant 0 : i32
    return %arg2, %arg1 : i32, i32
  }
  func.func @transform_2(%arg0: i32, %arg1: i32, %arg2: i32) -> (i32, i32) {
    %c0_i32 = arith.constant 0 : i32
    %c0_i32_0 = arith.constant 0 : i32
    return %c0_i32, %arg1 : i32, i32
  }
  func.func @transform_3(%arg0: i32, %arg1: i32, %arg2: i32) -> (i32, i32) {
    %c0_i32 = arith.constant 0 : i32
    return %arg0, %arg1 : i32, i32
  }
}

</mosaic_0001>

<llo_original>
// kernel: netD_3d_forward.5
$region0: #{netD_3d_forward.5}
  #allocation0 [shape = 'u32[]', space=smem, size = 0x4, offset = 0x4, fixed_abs, tag = 'smem constant byte address 0x4 - core index']
  #allocation1 [shape = 'u32[144,128]{1,0:T(1,128)}', space=vmem, size = 0x12000, scoped, tag = 'internal scratch']
  #allocation2 [shape = 'f32[512,128]{1,0:T(8,128)}', space=vmem, size = 0x40000, scoped, tag = 'scratch operand']
  %s0 = inlined_call_operand.vmem [shape: bf16[1024,128], index: 0, kind: input, shape index: {}]
  %s1 = inlined_call_operand.vmem [shape: bf16[128,128], index: 1, kind: input, shape index: {}]
  %s2 = inlined_call_operand.vmem [shape: f32[1,128], index: 2, kind: input, shape index: {}]
  %s3 = inlined_call_operand.vmem [shape: bf16[1024,128], index: 3, kind: output, shape index: {}]
  %s4 = sld [smem:[#allocation0]]
  $region53: #{netD_3d_forward.5} parent=0
    _
  %s6 = ssub.s32 1, %s4
  %s7 = scalar_select 0, %s6, %s4
  loop: start=0, step=1, limit=4
  $region2: #{netD_3d_forward.5} parent=0 // loop_pre_header
    _
  $region3: #{netD_3d_forward.5} parent=0 // loop_header
    %s9 = sphi 0, %s13
    %p10 = scmp.ge.s32.totalorder %s9, 4
    %s16 = sphi 0, %s35
    %s17 = sphi 0, %s31
    %s18 = sphi 0, %s27
    %s19 = sphi 0, %s16
    %s20 = sphi 0, %s17
    %s21 = sphi 0, %s18
    %s22 = sphi 0, %s19
    %s23 = sphi 0, %s20
    %s24 = sphi 0, %s21
    %s40 = sphi 0, %s42
    %s43 = sphi 0, %s40
    %s44 = sphi 0, %s43
    %s60 = sphi 0, %s44
    %s68 = sphi 0, %s70
    %s71 = sphi 0, %s68
    %s72 = sphi 0, %s71
    %s88 = sphi 0, %s72
    %s94 = sphi 0, %s96
    %s97 = sphi 0, %s94
    %s98 = sphi 0, %s97
    %s114 = sphi 0, %s98
    %s122 = sphi 0, %s124
    %s125 = sphi 0, %s122
    %s126 = sphi 0, %s125
    %s142 = sphi 0, %s126
  $region4: #{netD_3d_forward.5} parent=0 // loop_header_branch
    %12 = sbr.rel (%p10) target = $region8
  $region5: #{netD_3d_forward.5} parent=0 // loop_body
    %s14 = ssub.s32 %s9, 1
    %s15 = ssub.s32 %s9, 2
    %s25 = sadd.s32 1, %s18
    %p26 = scmp.ge.s32.totalorder %s25, 1
    %s27 = scalar_select %p26, 0, %s25
    %s28 = sadd.s32 1, %s17
    %s29 = scalar_select %p26, %s28, %s17
    %p30 = scmp.ge.s32.totalorder %s29, 1
    %s31 = scalar_select %p30, 0, %s29
    %s32 = sadd.s32 1, %s16
    %s33 = scalar_select %p30, %s32, %s16
    %p34 = scmp.ge.s32.totalorder %s33, 2
    %s35 = scalar_select %p34, 0, %s33
    %s36 = ssub.s32 %s16, %s35
    %s37 = ssub.s32 %s18, %s27
    %s38 = sor.u32 %s36, %s37
    %p39 = scmp.eq.s32.totalorder %s38, 0
    %s41 = sadd.s32 %s40, 1
    %s42 = scalar_select %p39, %s40, %s41
    %p45 = pneg %p39
    %p46 = scmp.eq.s32.totalorder %s9, 1
    %p47 = por %p45, %p46
    %p48 = scmp.ne.s32.totalorder %s40, %s43
    %p49 = scmp.eq.s32.totalorder %s9, 0
    %p50 = por %p48, %p49
    %p51 = scmp.ne.s32.totalorder %s40, %s43
    %p52 = scmp.eq.s32.totalorder %s14, 1
    %p53 = por %p51, %p52
    %p54 = scmp.ne.s32.totalorder %s43, %s44
    %p55 = scmp.eq.s32.totalorder %s14, 0
    %p56 = por %p54, %p55
    %p57 = scmp.ne.s32.totalorder %s43, %s44
    %p58 = scmp.eq.s32.totalorder %s15, 1
    %p59 = por %p57, %p58
    %p61 = scmp.ne.s32.totalorder %s44, %s60
    %p62 = scmp.eq.s32.totalorder %s15, 0
    %p63 = por %p61, %p62
    %s64 = ssub.s32 %s18, %s27
    %s65 = ssub.s32 %s17, %s31
    %s66 = sor.u32 %s64, %s65
    %p67 = scmp.eq.s32.totalorder %s66, 0
    %s69 = sadd.s32 %s68, 1
    %s70 = scalar_select %p67, %s68, %s69
    %p73 = pneg %p67
    %p74 = scmp.eq.s32.totalorder %s9, 1
    %p75 = por %p73, %p74
    %p76 = scmp.ne.s32.totalorder %s68, %s71
    %p77 = scmp.eq.s32.totalorder %s9, 0
    %p78 = por %p76, %p77
    %p79 = scmp.ne.s32.totalorder %s68, %s71
    %p80 = scmp.eq.s32.totalorder %s14, 1
    %p81 = por %p79, %p80
    %p82 = scmp.ne.s32.totalorder %s71, %s72
    %p83 = scmp.eq.s32.totalorder %s14, 0
    %p84 = por %p82, %p83
    %p85 = scmp.ne.s32.totalorder %s71, %s72
    %p86 = scmp.eq.s32.totalorder %s15, 1
    %p87 = por %p85, %p86
    %p89 = scmp.ne.s32.totalorder %s72, %s88
    %p90 = scmp.eq.s32.totalorder %s15, 0
    %p91 = por %p89, %p90
    %s92 = ssub.s32 %s17, %s31
    %p93 = scmp.eq.s32.totalorder %s92, 0
    %s95 = sadd.s32 %s94, 1
    %s96 = scalar_select %p93, %s94, %s95
    %p99 = pneg %p93
    %p100 = scmp.eq.s32.totalorder %s9, 1
    %p101 = por %p99, %p100
    %p102 = scmp.ne.s32.totalorder %s94, %s97
    %p103 = scmp.eq.s32.totalorder %s9, 0
    %p104 = por %p102, %p103
    %p105 = scmp.ne.s32.totalorder %s94, %s97
    %p106 = scmp.eq.s32.totalorder %s14, 1
    %p107 = por %p105, %p106
    %p108 = scmp.ne.s32.totalorder %s97, %s98
    %p109 = scmp.eq.s32.totalorder %s14, 0
    %p110 = por %p108, %p109
    %p111 = scmp.ne.s32.totalorder %s97, %s98
    %p112 = scmp.eq.s32.totalorder %s15, 1
    %p113 = por %p111, %p112
    %p115 = scmp.ne.s32.totalorder %s98, %s114
    %p116 = scmp.eq.s32.totalorder %s15, 0
    %p117 = por %p115, %p116
    %s118 = ssub.s32 %s16, %s35
    %s119 = ssub.s32 %s17, %s31
    %s120 = sor.u32 %s118, %s119
    %p121 = scmp.eq.s32.totalorder %s120, 0
    %s123 = sadd.s32 %s122, 1
    %s124 = scalar_select %p121, %s122, %s123
    %p127 = pneg %p121
    %p128 = scmp.eq.s32.totalorder %s9, 1
    %p129 = por %p127, %p128
    %p130 = scmp.ne.s32.totalorder %s122, %s125
    %p131 = scmp.eq.s32.totalorder %s9, 0
    %p132 = por %p130, %p131
    %p133 = scmp.ne.s32.totalorder %s122, %s125
    %p134 = scmp.eq.s32.totalorder %s14, 1
    %p135 = por %p133, %p134
    %p136 = scmp.ne.s32.totalorder %s125, %s126
    %p137 = scmp.eq.s32.totalorder %s14, 0
    %p138 = por %p136, %p137
    %p139 = scmp.ne.s32.totalorder %s125, %s126
    %p140 = scmp.eq.s32.totalorder %s15, 1
    %p141 = por %p139, %p140
    %p143 = scmp.ne.s32.totalorder %s126, %s142
    %p144 = scmp.eq.s32.totalorder %s15, 0
    %p145 = por %p143, %p144
    %p146 = scmp.le.s32.totalorder 1, %s9
    %p147 = scmp.lt.s32.totalorder %s9, 3
    %p148 = pnand %p146, %p147
    %p149 = pneg %p148
    // Predicated region
    $region9: #{netD_3d_forward.5} parent=5 // pred_check
      _
    $region10: #{netD_3d_forward.5} parent=5 // pred_check_branch
      %151 = sbr.rel (%p148) target = $region12
    $region11: #{netD_3d_forward.5} parent=5 // pred_region
      %s152 = ssub.s32 %s9, 1
      // Predicated region
      $region13: #{netD_3d_forward.5} parent=11 // pred_check
        %p153 = pneg %p84
      $region14: #{netD_3d_forward.5} parent=11 // pred_check_branch
        %155 = sbr.rel (%p153) target = $region16
      $region15: #{netD_3d_forward.5} parent=11 // pred_region
        %s156 = smul.u32 16, %s21
        %p157 = scmp.lt.s32.totalorder %s156, 15
        %s158 = scalar_select %p157, %s156, 15
        %p159 = scmp.lt.s32.totalorder %s20, 0
        %s160 = scalar_select %p159, %s20, 0
        %s161 = sadd.s32 %s160, %s158
        %s162 = smul.addr %s161, 4
        %s163 = scalar_lea.vmem %s1, %s162
        %s164 = smul.u32 16, %s21
      $region16: #{netD_3d_forward.5} parent=11 // pred_fallthru
        _
      // Predicated region
      $region17: #{netD_3d_forward.5} parent=11 // pred_check
        %p165 = pneg %p110
      $region18: #{netD_3d_forward.5} parent=11 // pred_check_branch
        %167 = sbr.rel (%p165) target = $region20
      $region19: #{netD_3d_forward.5} parent=11 // pred_region
        %p168 = scmp.lt.s32.totalorder %s20, 0
        %s169 = scalar_select %p168, %s20, 0
        %s170 = scalar_lea.vmem %s2, %s169
      $region20: #{netD_3d_forward.5} parent=11 // pred_fallthru
        _
    $region12: #{netD_3d_forward.5} parent=5 // pred_fallthru
      _
    %p171 = scmp.lt.s32.totalorder %s9, 2
    // Predicated region
    $region21: #{netD_3d_forward.5} parent=5 // pred_check
      %p172 = pneg %p171
    $region22: #{netD_3d_forward.5} parent=5 // pred_check_branch
      %174 = sbr.rel (%p172) target = $region24
    $region23: #{netD_3d_forward.5} parent=5 // pred_region
      // Predicated region
      $region25: #{netD_3d_forward.5} parent=23 // pred_check
        %p175 = pneg %p50
      $region26: #{netD_3d_forward.5} parent=23 // pred_check_branch
        %177 = sbr.rel (%p175) target = $region28
      $region27: #{netD_3d_forward.5} parent=23 // pred_region
        %s178 = smul.u32 64, %s16
        %p179 = scmp.lt.s32.totalorder %s178, 127
        %s180 = scalar_select %p179, %s178, 127
        %p181 = scmp.lt.s32.totalorder %s18, 0
        %s182 = scalar_select %p181, %s18, 0
        %s183 = sadd.s32 %s182, %s180
        %s184 = smul.addr %s183, 4
        %s185 = scalar_lea.vmem %s0, %s184
        %s186 = smul.u32 64, %s16
      $region28: #{netD_3d_forward.5} parent=23 // pred_fallthru
        _
    $region24: #{netD_3d_forward.5} parent=5 // pred_fallthru
      _
    %p187 = scmp.le.s32.totalorder 1, %s9
    %p188 = scmp.lt.s32.totalorder %s9, 3
    %p189 = pnand %p187, %p188
    %p190 = pneg %p189
    // Predicated region
    $region29: #{netD_3d_forward.5} parent=5 // pred_check
      _
    $region30: #{netD_3d_forward.5} parent=5 // pred_check_branch
      %192 = sbr.rel (%p189) target = $region32
    $region31: #{netD_3d_forward.5} parent=5 // pred_region
      %s193 = ssub.s32 %s9, 1
      %s194 = smul.u32 64, %s19
      %p195 = scmp.lt.s32.totalorder %s194, 127
      %s196 = scalar_select %p195, %s194, 127
      %p197 = scmp.lt.s32.totalorder %s21, 0
      %s198 = scalar_select %p197, %s21, 0
      %s199 = sadd.s32 %s198, %s196
      %s200 = smul.addr %s199, 4
      %s201 = scalar_lea.vmem %s0, %s200
      %p202 = pneg %p56
      %p203 = pneg %p53
      %s204 = smul.u32 16, %s21
      %p205 = scmp.lt.s32.totalorder %s204, 15
      %s206 = scalar_select %p205, %s204, 15
      %p207 = scmp.lt.s32.totalorder %s20, 0
      %s208 = scalar_select %p207, %s20, 0
      %s209 = sadd.s32 %s208, %s206
      %s210 = smul.addr %s209, 4
      %s211 = scalar_lea.vmem %s1, %s210
      %p212 = pneg %p84
      %p213 = pneg %p81
      %p214 = scmp.lt.s32.totalorder %s20, 0
      %s215 = scalar_select %p214, %s20, 0
      %s216 = scalar_lea.vmem %s2, %s215
      %p217 = pneg %p110
      %p218 = pneg %p107
      %p219 = pneg %p138
      %p220 = pneg %p135
      %s221 = smul.u32 64, %s19
      %p222 = scmp.lt.s32.totalorder %s221, 127
      %s223 = scalar_select %p222, %s221, 127
      %p224 = scmp.lt.s32.totalorder %s20, 0
      %s225 = scalar_select %p224, %s20, 0
      %s226 = sadd.s32 %s225, %s223
      %s227 = smul.addr %s226, 4
      %s228 = scalar_lea.vmem %s3, %s227
      %s229 = smul.u32 64, %s19
      %p230 = scmp.lt.s32.totalorder %s229, 127
      %s231 = scalar_select %p230, %s229, 127
      %p232 = scmp.lt.s32.totalorder %s21, 0
      %s233 = scalar_select %p232, %s21, 0
      %s234 = sadd.s32 %s233, %s231
      %s235 = smul.addr %s234, 4
      %s236 = scalar_lea.vmem %s0, %s235
      %s237 = smul.u32 64, %s19
      %s238 = smul.u32 16, %s21
      %p239 = scmp.lt.s32.totalorder %s238, 15
      %s240 = scalar_select %p239, %s238, 15
      %p241 = scmp.lt.s32.totalorder %s20, 0
      %s242 = scalar_select %p241, %s20, 0
      %s243 = sadd.s32 %s242, %s240
      %s244 = smul.addr %s243, 4
      %s245 = scalar_lea.vmem %s1, %s244
      %s246 = smul.u32 16, %s21
      %p247 = scmp.lt.s32.totalorder %s20, 0
      %s248 = scalar_select %p247, %s20, 0
      %s249 = scalar_lea.vmem %s2, %s248
      %s250 = smul.u32 64, %s19
      %p251 = scmp.lt.s32.totalorder %s250, 127
      %s252 = scalar_select %p251, %s250, 127
      %p253 = scmp.lt.s32.totalorder %s20, 0
      %s254 = scalar_select %p253, %s20, 0
      %s255 = sadd.s32 %s254, %s252
      %s256 = smul.addr %s255, 4
      %s257 = scalar_lea.vmem %s3, %s256
      %s258 = smul.u32 64, %s19
      %p260 = scmp.eq.s32.totalorder %s21, 0
      // Predicated region
      $region33: #{netD_3d_forward.5} parent=31 // pred_check
        %p261 = pneg %p260
      $region34: #{netD_3d_forward.5} parent=31 // pred_check_branch
        %263 = sbr.rel (%p261) target = $region36
      $region35: #{netD_3d_forward.5} parent=31 // pred_region
        %264 = vst [vmem:[#allocation2] sm:$0xff] 0.0
        %265 = vst [vmem:[#allocation2 + $0x8] sm:$0xff] 0.0
        %266 = vst [vmem:[#allocation2 + $0x10] sm:$0xff] 0.0
        %267 = vst [vmem:[#allocation2 + $0x18] sm:$0xff] 0.0
        %268 = vst [vmem:[#allocation2 + $0x20] sm:$0xff] 0.0
        %269 = vst [vmem:[#allocation2 + $0x28] sm:$0xff] 0.0
        %270 = vst [vmem:[#allocation2 + $0x30] sm:$0xff] 0.0
        %271 = vst [vmem:[#allocation2 + $0x38] sm:$0xff] 0.0
        %272 = vst [vmem:[#allocation2 + $0x40] sm:$0xff] 0.0
        %273 = vst [vmem:[#allocation2 + $0x48] sm:$0xff] 0.0
        %274 = vst [vmem:[#allocation2 + $0x50] sm:$0xff] 0.0
        %275 = vst [vmem:[#allocation2 + $0x58] sm:$0xff] 0.0
        %276 = vst [vmem:[#allocation2 + $0x60] sm:$0xff] 0.0
        %277 = vst [vmem:[#allocation2 + $0x68] sm:$0xff] 0.0
        %278 = vst [vmem:[#allocation2 + $0x70] sm:$0xff] 0.0
        %279 = vst [vmem:[#allocation2 + $0x78] sm:$0xff] 0.0
        %280 = vst [vmem:[#allocation2 + $0x80] sm:$0xff] 0.0
        %281 = vst [vmem:[#allocation2 + $0x88] sm:$0xff] 0.0
        %282 = vst [vmem:[#allocation2 + $0x90] sm:$0xff] 0.0
        %283 = vst [vmem:[#allocation2 + $0x98] sm:$0xff] 0.0
        %284 = vst [vmem:[#allocation2 + $0xa0] sm:$0xff] 0.0
        %285 = vst [vmem:[#allocation2 + $0xa8] sm:$0xff] 0.0
        %286 = vst [vmem:[#allocation2 + $0xb0] sm:$0xff] 0.0
        %287 = vst [vmem:[#allocation2 + $0xb8] sm:$0xff] 0.0
        %288 = vst [vmem:[#allocation2 + $0xc0] sm:$0xff] 0.0
        %289 = vst [vmem:[#allocation2 + $0xc8] sm:$0xff] 0.0
        %290 = vst [vmem:[#allocation2 + $0xd0] sm:$0xff] 0.0
        %291 = vst [vmem:[#allocation2 + $0xd8] sm:$0xff] 0.0
        %292 = vst [vmem:[#allocation2 + $0xe0] sm:$0xff] 0.0
        %293 = vst [vmem:[#allocation2 + $0xe8] sm:$0xff] 0.0
        %294 = vst [vmem:[#allocation2 + $0xf0] sm:$0xff] 0.0
        %295 = vst [vmem:[#allocation2 + $0xf8] sm:$0xff] 0.0
        %296 = vst [vmem:[#allocation2 + $0x100] sm:$0xff] 0.0
        %297 = vst [vmem:[#allocation2 + $0x108] sm:$0xff] 0.0
        %298 = vst [vmem:[#allocation2 + $0x110] sm:$0xff] 0.0
        %299 = vst [vmem:[#allocation2 + $0x118] sm:$0xff] 0.0
        %300 = vst [vmem:[#allocation2 + $0x120] sm:$0xff] 0.0
        %301 = vst [vmem:[#allocation2 + $0x128] sm:$0xff] 0.0
        %302 = vst [vmem:[#allocation2 + $0x130] sm:$0xff] 0.0
        %303 = vst [vmem:[#allocation2 + $0x138] sm:$0xff] 0.0
        %304 = vst [vmem:[#allocation2 + $0x140] sm:$0xff] 0.0
        %305 = vst [vmem:[#allocation2 + $0x148] sm:$0xff] 0.0
        %306 = vst [vmem:[#allocation2 + $0x150] sm:$0xff] 0.0
        %307 = vst [vmem:[#allocation2 + $0x158] sm:$0xff] 0.0
        %308 = vst [vmem:[#allocation2 + $0x160] sm:$0xff] 0.0
        %309 = vst [vmem:[#allocation2 + $0x168] sm:$0xff] 0.0
        %310 = vst [vmem:[#allocation2 + $0x170] sm:$0xff] 0.0
        %311 = vst [vmem:[#allocation2 + $0x178] sm:$0xff] 0.0
        %312 = vst [vmem:[#allocation2 + $0x180] sm:$0xff] 0.0
        %313 = vst [vmem:[#allocation2 + $0x188] sm:$0xff] 0.0
        %314 = vst [vmem:[#allocation2 + $0x190] sm:$0xff] 0.0
        %315 = vst [vmem:[#allocation2 + $0x198] sm:$0xff] 0.0
        %316 = vst [vmem:[#allocation2 + $0x1a0] sm:$0xff] 0.0
        %317 = vst [vmem:[#allocation2 + $0x1a8] sm:$0xff] 0.0
        %318 = vst [vmem:[#allocation2 + $0x1b0] sm:$0xff] 0.0
        %319 = vst [vmem:[#allocation2 + $0x1b8] sm:$0xff] 0.0
        %320 = vst [vmem:[#allocation2 + $0x1c0] sm:$0xff] 0.0
        %321 = vst [vmem:[#allocation2 + $0x1c8] sm:$0xff] 0.0
        %322 = vst [vmem:[#allocation2 + $0x1d0] sm:$0xff] 0.0
        %323 = vst [vmem:[#allocation2 + $0x1d8] sm:$0xff] 0.0
        %324 = vst [vmem:[#allocation2 + $0x1e0] sm:$0xff] 0.0
        %325 = vst [vmem:[#allocation2 + $0x1e8] sm:$0xff] 0.0
        %326 = vst [vmem:[#allocation2 + $0x1f0] sm:$0xff] 0.0
        %327 = vst [vmem:[#allocation2 + $0x1f8] sm:$0xff] 0.0
      $region36: #{netD_3d_forward.5} parent=31 // pred_fallthru
        _
      %v328 = vld [vmem:[#allocation2] sm:$0xff]
      %v329 = vld [vmem:[#allocation2 + $0x8] sm:$0xff]
      %v330 = vld [vmem:[#allocation2 + $0x10] sm:$0xff]
      %v331 = vld [vmem:[#allocation2 + $0x18] sm:$0xff]
      %v332 = vld [vmem:[#allocation2 + $0x20] sm:$0xff]
      %v333 = vld [vmem:[#allocation2 + $0x28] sm:$0xff]
      %v334 = vld [vmem:[#allocation2 + $0x30] sm:$0xff]
      %v335 = vld [vmem:[#allocation2 + $0x38] sm:$0xff]
      %v336 = vld [vmem:[#allocation2 + $0x40] sm:$0xff]
      %v337 = vld [vmem:[#allocation2 + $0x48] sm:$0xff]
      %v338 = vld [vmem:[#allocation2 + $0x50] sm:$0xff]
      %v339 = vld [vmem:[#allocation2 + $0x58] sm:$0xff]
      %v340 = vld [vmem:[#allocation2 + $0x60] sm:$0xff]
      %v341 = vld [vmem:[#allocation2 + $0x68] sm:$0xff]
      %v342 = vld [vmem:[#allocation2 + $0x70] sm:$0xff]
      %v343 = vld [vmem:[#allocation2 + $0x78] sm:$0xff]
      %v344 = vld [vmem:[#allocation2 + $0x80] sm:$0xff]
      %v345 = vld [vmem:[#allocation2 + $0x88] sm:$0xff]
      %v346 = vld [vmem:[#allocation2 + $0x90] sm:$0xff]
      %v347 = vld [vmem:[#allocation2 + $0x98] sm:$0xff]
      %v348 = vld [vmem:[#allocation2 + $0xa0] sm:$0xff]
      %v349 = vld [vmem:[#allocation2 + $0xa8] sm:$0xff]
      %v350 = vld [vmem:[#allocation2 + $0xb0] sm:$0xff]
      %v351 = vld [vmem:[#allocation2 + $0xb8] sm:$0xff]
      %v352 = vld [vmem:[#allocation2 + $0xc0] sm:$0xff]
      %v353 = vld [vmem:[#allocation2 + $0xc8] sm:$0xff]
      %v354 = vld [vmem:[#allocation2 + $0xd0] sm:$0xff]
      %v355 = vld [vmem:[#allocation2 + $0xd8] sm:$0xff]
      %v356 = vld [vmem:[#allocation2 + $0xe0] sm:$0xff]
      %v357 = vld [vmem:[#allocation2 + $0xe8] sm:$0xff]
      %v358 = vld [vmem:[#allocation2 + $0xf0] sm:$0xff]
      %v359 = vld [vmem:[#allocation2 + $0xf8] sm:$0xff]
      %v360 = vld [vmem:[#allocation2 + $0x100] sm:$0xff]
      %v361 = vld [vmem:[#allocation2 + $0x108] sm:$0xff]
      %v362 = vld [vmem:[#allocation2 + $0x110] sm:$0xff]
      %v363 = vld [vmem:[#allocation2 + $0x118] sm:$0xff]
      %v364 = vld [vmem:[#allocation2 + $0x120] sm:$0xff]
      %v365 = vld [vmem:[#allocation2 + $0x128] sm:$0xff]
      %v366 = vld [vmem:[#allocation2 + $0x130] sm:$0xff]
      %v367 = vld [vmem:[#allocation2 + $0x138] sm:$0xff]
      %v368 = vld [vmem:[#allocation2 + $0x140] sm:$0xff]
      %v369 = vld [vmem:[#allocation2 + $0x148] sm:$0xff]
      %v370 = vld [vmem:[#allocation2 + $0x150] sm:$0xff]
      %v371 = vld [vmem:[#allocation2 + $0x158] sm:$0xff]
      %v372 = vld [vmem:[#allocation2 + $0x160] sm:$0xff]
      %v373 = vld [vmem:[#allocation2 + $0x168] sm:$0xff]
      %v374 = vld [vmem:[#allocation2 + $0x170] sm:$0xff]
      %v375 = vld [vmem:[#allocation2 + $0x178] sm:$0xff]
      %v376 = vld [vmem:[#allocation2 + $0x180] sm:$0xff]
      %v377 = vld [vmem:[#allocation2 + $0x188] sm:$0xff]
      %v378 = vld [vmem:[#allocation2 + $0x190] sm:$0xff]
      %v379 = vld [vmem:[#allocation2 + $0x198] sm:$0xff]
      %v380 = vld [vmem:[#allocation2 + $0x1a0] sm:$0xff]
      %v381 = vld [vmem:[#allocation2 + $0x1a8] sm:$0xff]
      %v382 = vld [vmem:[#allocation2 + $0x1b0] sm:$0xff]
      %v383 = vld [vmem:[#allocation2 + $0x1b8] sm:$0xff]
      %v384 = vld [vmem:[#allocation2 + $0x1c0] sm:$0xff]
      %v385 = vld [vmem:[#allocation2 + $0x1c8] sm:$0xff]
      %v386 = vld [vmem:[#allocation2 + $0x1d0] sm:$0xff]
      %v387 = vld [vmem:[#allocation2 + $0x1d8] sm:$0xff]
      %v388 = vld [vmem:[#allocation2 + $0x1e0] sm:$0xff]
      %v389 = vld [vmem:[#allocation2 + $0x1e8] sm:$0xff]
      %v390 = vld [vmem:[#allocation2 + $0x1f0] sm:$0xff]
      %v391 = vld [vmem:[#allocation2 + $0x1f8] sm:$0xff]
      %v392 = vld [vmem:[%s236] sm:$0xf]
      %v393 = vld [vmem:[%s236 + $0x4] sm:$0xf]
      %v394 = vld [vmem:[%s236 + $0x8] sm:$0xf]
      %v395 = vld [vmem:[%s236 + $0xc] sm:$0xf]
      %v396 = vld [vmem:[%s236 + $0x10] sm:$0xf]
      %v397 = vld [vmem:[%s236 + $0x14] sm:$0xf]
      %v398 = vld [vmem:[%s236 + $0x18] sm:$0xf]
      %v399 = vld [vmem:[%s236 + $0x1c] sm:$0xf]
      %v400 = vld [vmem:[%s236 + $0x20] sm:$0xf]
      %v401 = vld [vmem:[%s236 + $0x24] sm:$0xf]
      %v402 = vld [vmem:[%s236 + $0x28] sm:$0xf]
      %v403 = vld [vmem:[%s236 + $0x2c] sm:$0xf]
      %v404 = vld [vmem:[%s236 + $0x30] sm:$0xf]
      %v405 = vld [vmem:[%s236 + $0x34] sm:$0xf]
      %v406 = vld [vmem:[%s236 + $0x38] sm:$0xf]
      %v407 = vld [vmem:[%s236 + $0x3c] sm:$0xf]
      %v408 = vld [vmem:[%s236 + $0x40] sm:$0xf]
      %v409 = vld [vmem:[%s236 + $0x44] sm:$0xf]
      %v410 = vld [vmem:[%s236 + $0x48] sm:$0xf]
      %v411 = vld [vmem:[%s236 + $0x4c] sm:$0xf]
      %v412 = vld [vmem:[%s236 + $0x50] sm:$0xf]
      %v413 = vld [vmem:[%s236 + $0x54] sm:$0xf]
      %v414 = vld [vmem:[%s236 + $0x58] sm:$0xf]
      %v415 = vld [vmem:[%s236 + $0x5c] sm:$0xf]
      %v416 = vld [vmem:[%s236 + $0x60] sm:$0xf]
      %v417 = vld [vmem:[%s236 + $0x64] sm:$0xf]
      %v418 = vld [vmem:[%s236 + $0x68] sm:$0xf]
      %v419 = vld [vmem:[%s236 + $0x6c] sm:$0xf]
      %v420 = vld [vmem:[%s236 + $0x70] sm:$0xf]
      %v421 = vld [vmem:[%s236 + $0x74] sm:$0xf]
      %v422 = vld [vmem:[%s236 + $0x78] sm:$0xf]
      %v423 = vld [vmem:[%s236 + $0x7c] sm:$0xf]
      %v424 = vld [vmem:[%s236 + $0x80] sm:$0xf]
      %v425 = vld [vmem:[%s236 + $0x84] sm:$0xf]
      %v426 = vld [vmem:[%s236 + $0x88] sm:$0xf]
      %v427 = vld [vmem:[%s236 + $0x8c] sm:$0xf]
      %v428 = vld [vmem:[%s236 + $0x90] sm:$0xf]
      %v429 = vld [vmem:[%s236 + $0x94] sm:$0xf]
      %v430 = vld [vmem:[%s236 + $0x98] sm:$0xf]
      %v431 = vld [vmem:[%s236 + $0x9c] sm:$0xf]
      %v432 = vld [vmem:[%s236 + $0xa0] sm:$0xf]
      %v433 = vld [vmem:[%s236 + $0xa4] sm:$0xf]
      %v434 = vld [vmem:[%s236 + $0xa8] sm:$0xf]
      %v435 = vld [vmem:[%s236 + $0xac] sm:$0xf]
      %v436 = vld [vmem:[%s236 + $0xb0] sm:$0xf]
      %v437 = vld [vmem:[%s236 + $0xb4] sm:$0xf]
      %v438 = vld [vmem:[%s236 + $0xb8] sm:$0xf]
      %v439 = vld [vmem:[%s236 + $0xbc] sm:$0xf]
      %v440 = vld [vmem:[%s236 + $0xc0] sm:$0xf]
      %v441 = vld [vmem:[%s236 + $0xc4] sm:$0xf]
      %v442 = vld [vmem:[%s236 + $0xc8] sm:$0xf]
      %v443 = vld [vmem:[%s236 + $0xcc] sm:$0xf]
      %v444 = vld [vmem:[%s236 + $0xd0] sm:$0xf]
      %v445 = vld [vmem:[%s236 + $0xd4] sm:$0xf]
      %v446 = vld [vmem:[%s236 + $0xd8] sm:$0xf]
      %v447 = vld [vmem:[%s236 + $0xdc] sm:$0xf]
      %v448 = vld [vmem:[%s236 + $0xe0] sm:$0xf]
      %v449 = vld [vmem:[%s236 + $0xe4] sm:$0xf]
      %v450 = vld [vmem:[%s236 + $0xe8] sm:$0xf]
      %v451 = vld [vmem:[%s236 + $0xec] sm:$0xf]
      %v452 = vld [vmem:[%s236 + $0xf0] sm:$0xf]
      %v453 = vld [vmem:[%s236 + $0xf4] sm:$0xf]
      %v454 = vld [vmem:[%s236 + $0xf8] sm:$0xf]
      %v455 = vld [vmem:[%s236 + $0xfc] sm:$0xf]
      %v456 = vld [vmem:[%s245] sm:$0xf]
      %v457 = vld [vmem:[%s245 + $0x4] sm:$0xf]
      %v458 = vld [vmem:[%s245 + $0x8] sm:$0xf]
      %v459 = vld [vmem:[%s245 + $0xc] sm:$0xf]
      %v460 = vld [vmem:[%s245 + $0x10] sm:$0xf]
      %v461 = vld [vmem:[%s245 + $0x14] sm:$0xf]
      %v462 = vld [vmem:[%s245 + $0x18] sm:$0xf]
      %v463 = vld [vmem:[%s245 + $0x1c] sm:$0xf]
      %v464 = vld [vmem:[%s245 + $0x20] sm:$0xf]
      %v465 = vld [vmem:[%s245 + $0x24] sm:$0xf]
      %v466 = vld [vmem:[%s245 + $0x28] sm:$0xf]
      %v467 = vld [vmem:[%s245 + $0x2c] sm:$0xf]
      %v468 = vld [vmem:[%s245 + $0x30] sm:$0xf]
      %v469 = vld [vmem:[%s245 + $0x34] sm:$0xf]
      %v470 = vld [vmem:[%s245 + $0x38] sm:$0xf]
      %v471 = vld [vmem:[%s245 + $0x3c] sm:$0xf]
      %v536 = vunpack.c.l.b16 %v392
      %v537 = vunpack.c.l.b16 %v393
      %v538 = vunpack.c.l.b16 %v394
      %v539 = vunpack.c.l.b16 %v395
      %v540 = vunpack.c.l.b16 %v396
      %v541 = vunpack.c.l.b16 %v397
      %v542 = vunpack.c.l.b16 %v398
      %v543 = vunpack.c.l.b16 %v399
      %v544 = vunpack.c.l.b16 %v400
      %v545 = vunpack.c.l.b16 %v401
      %v546 = vunpack.c.l.b16 %v402
      %v547 = vunpack.c.l.b16 %v403
      %v548 = vunpack.c.l.b16 %v404
      %v549 = vunpack.c.l.b16 %v405
      %v550 = vunpack.c.l.b16 %v406
      %v551 = vunpack.c.l.b16 %v407
      %v552 = vunpack.c.l.b16 %v408
      %v553 = vunpack.c.l.b16 %v409
      %v554 = vunpack.c.l.b16 %v410
      %v555 = vunpack.c.l.b16 %v411
      %v556 = vunpack.c.l.b16 %v412
      %v557 = vunpack.c.l.b16 %v413
      %v558 = vunpack.c.l.b16 %v414
      %v559 = vunpack.c.l.b16 %v415
      %v560 = vunpack.c.l.b16 %v416
      %v561 = vunpack.c.l.b16 %v417
      %v562 = vunpack.c.l.b16 %v418
      %v563 = vunpack.c.l.b16 %v419
      %v564 = vunpack.c.l.b16 %v420
      %v565 = vunpack.c.l.b16 %v421
      %v566 = vunpack.c.l.b16 %v422
      %v567 = vunpack.c.l.b16 %v423
      %v568 = vunpack.c.l.b16 %v424
      %v569 = vunpack.c.l.b16 %v425
      %v570 = vunpack.c.l.b16 %v426
      %v571 = vunpack.c.l.b16 %v427
      %v572 = vunpack.c.l.b16 %v428
      %v573 = vunpack.c.l.b16 %v429
      %v574 = vunpack.c.l.b16 %v430
      %v575 = vunpack.c.l.b16 %v431
      %v576 = vunpack.c.l.b16 %v432
      %v577 = vunpack.c.l.b16 %v433
      %v578 = vunpack.c.l.b16 %v434
      %v579 = vunpack.c.l.b16 %v435
      %v580 = vunpack.c.l.b16 %v436
      %v581 = vunpack.c.l.b16 %v437
      %v582 = vunpack.c.l.b16 %v438
      %v583 = vunpack.c.l.b16 %v439
      %v584 = vunpack.c.l.b16 %v440
      %v585 = vunpack.c.l.b16 %v441
      %v586 = vunpack.c.l.b16 %v442
      %v587 = vunpack.c.l.b16 %v443
      %v588 = vunpack.c.l.b16 %v444
      %v589 = vunpack.c.l.b16 %v445
      %v590 = vunpack.c.l.b16 %v446
      %v591 = vunpack.c.l.b16 %v447
      %v592 = vunpack.c.l.b16 %v448
      %v593 = vunpack.c.l.b16 %v449
      %v594 = vunpack.c.l.b16 %v450
      %v595 = vunpack.c.l.b16 %v451
      %v596 = vunpack.c.l.b16 %v452
      %v597 = vunpack.c.l.b16 %v453
      %v598 = vunpack.c.l.b16 %v454
      %v599 = vunpack.c.l.b16 %v455
      %v600 = vpack.c.b16 %v537, %v536
      %v601 = vpack.c.b16 %v539, %v538
      %v602 = vpack.c.b16 %v541, %v540
      %v603 = vpack.c.b16 %v543, %v542
      %v604 = vpack.c.b16 %v545, %v544
      %v605 = vpack.c.b16 %v547, %v546
      %v606 = vpack.c.b16 %v549, %v548
      %v607 = vpack.c.b16 %v551, %v550
      %v608 = vpack.c.b16 %v553, %v552
      %v609 = vpack.c.b16 %v555, %v554
      %v610 = vpack.c.b16 %v557, %v556
      %v611 = vpack.c.b16 %v559, %v558
      %v612 = vpack.c.b16 %v561, %v560
      %v613 = vpack.c.b16 %v563, %v562
      %v614 = vpack.c.b16 %v565, %v564
      %v615 = vpack.c.b16 %v567, %v566
      %v616 = vpack.c.b16 %v569, %v568
      %v617 = vpack.c.b16 %v571, %v570
      %v618 = vpack.c.b16 %v573, %v572
      %v619 = vpack.c.b16 %v575, %v574
      %v620 = vpack.c.b16 %v577, %v576
      %v621 = vpack.c.b16 %v579, %v578
      %v622 = vpack.c.b16 %v581, %v580
      %v623 = vpack.c.b16 %v583, %v582
      %v624 = vpack.c.b16 %v585, %v584
      %v625 = vpack.c.b16 %v587, %v586
      %v626 = vpack.c.b16 %v589, %v588
      %v627 = vpack.c.b16 %v591, %v590
      %v628 = vpack.c.b16 %v593, %v592
      %v629 = vpack.c.b16 %v595, %v594
      %v630 = vpack.c.b16 %v597, %v596
      %v631 = vpack.c.b16 %v599, %v598
      %v680 = vunpack.c.l.b16 %v456
      %v681 = vunpack.c.l.b16 %v457
      %v682 = vunpack.c.l.b16 %v458
      %v683 = vunpack.c.l.b16 %v459
      %v684 = vunpack.c.l.b16 %v460
      %v685 = vunpack.c.l.b16 %v461
      %v686 = vunpack.c.l.b16 %v462
      %v687 = vunpack.c.l.b16 %v463
      %v688 = vunpack.c.l.b16 %v464
      %v689 = vunpack.c.l.b16 %v465
      %v690 = vunpack.c.l.b16 %v466
      %v691 = vunpack.c.l.b16 %v467
      %v692 = vunpack.c.l.b16 %v468
      %v693 = vunpack.c.l.b16 %v469
      %v694 = vunpack.c.l.b16 %v470
      %v695 = vunpack.c.l.b16 %v471
      %v696 = vpack.c.b16 %v681, %v680
      %v697 = vpack.c.b16 %v683, %v682
      %v698 = vpack.c.b16 %v685, %v684
      %v699 = vpack.c.b16 %v687, %v686
      %v700 = vpack.c.b16 %v689, %v688
      %v701 = vpack.c.b16 %v691, %v690
      %v702 = vpack.c.b16 %v693, %v692
      %v703 = vpack.c.b16 %v695, %v694
      %712 = vmatprep.subr.bf16.mxu0 0
      %713 = vmatpush1.bf16.msra.mxu0 %v696
      %714 = vmatprep.subr.bf16.mxu0 0
      %715 = vmatpush1.bf16.msra.mxu0 %v697
      %716 = vmatprep.subr.bf16.mxu0 0
      %717 = vmatpush1.bf16.msra.mxu0 %v698
      %718 = vmatprep.subr.bf16.mxu0 0
      %719 = vmatpush1.bf16.msra.mxu0 %v699
      %720 = vmatprep.subr.bf16.mxu0 0
      %721 = vmatpush1.bf16.msra.mxu0 %v700
      %722 = vmatprep.subr.bf16.mxu0 0
      %723 = vmatpush1.bf16.msra.mxu0 %v701
      %724 = vmatprep.subr.bf16.mxu0 0
      %725 = vmatpush1.bf16.msra.mxu0 %v702
      %726 = vmatprep.subr.bf16.mxu0 0
      %727 = vmatpush1.bf16.msra.mxu0 %v703
      %728 = vmatprep.subr.bf16.mxu0 0
      %729 = vmatpush1.bf16.msra.mxu0 0
      %730 = vmatprep.subr.bf16.mxu0 0
      %731 = vmatpush1.bf16.msra.mxu0 0
      %732 = vmatprep.subr.bf16.mxu0 0
      %733 = vmatpush1.bf16.msra.mxu0 0
      %734 = vmatprep.subr.bf16.mxu0 0
      %735 = vmatpush1.bf16.msra.mxu0 0
      %736 = vmatprep.subr.bf16.mxu0 0
      %737 = vmatpush1.bf16.msra.mxu0 0
      %738 = vmatprep.subr.bf16.mxu0 0
      %739 = vmatpush1.bf16.msra.mxu0 0
      %740 = vmatprep.subr.bf16.mxu0 0
      %741 = vmatpush1.bf16.msra.mxu0 0
      %742 = vmatprep.subr.bf16.mxu0 0
      %743 = vmatpush1.bf16.msra.mxu0 0
      %744 = vmatprep.mubr.bf16.mxu0 0
      %745 = vmatmul.mubr.bf16.gmra.mrb[0].mxu0 %v600
      %v746 = vpop.f32.mrb[0].mxu0
      %v747 = vadd.f32 0.0, %v746
      %v748 = vpop.f32.mrb[0].mxu0
      %v749 = vpop.f32.mrb[0].mxu0
      %v750 = vadd.f32 0.0, %v749
      %v751 = vpop.f32.mrb[0].mxu0
      %752 = vmatprep.mubr.bf16.mxu0 0
      %753 = vmatmul.mubr.bf16.gmra.mrb[0].mxu0 %v601
      %v754 = vpop.f32.mrb[0].mxu0
      %v755 = vadd.f32 0.0, %v754
      %v756 = vpop.f32.mrb[0].mxu0
      %v757 = vpop.f32.mrb[0].mxu0
      %v758 = vadd.f32 0.0, %v757
      %v759 = vpop.f32.mrb[0].mxu0
      %760 = vmatprep.mubr.bf16.mxu0 0
      %761 = vmatmul.mubr.bf16.gmra.mrb[0].mxu0 %v602
      %v762 = vpop.f32.mrb[0].mxu0
      %v763 = vadd.f32 0.0, %v762
      %v764 = vpop.f32.mrb[0].mxu0
      %v765 = vpop.f32.mrb[0].mxu0
      %v766 = vadd.f32 0.0, %v765
      %v767 = vpop.f32.mrb[0].mxu0
      %768 = vmatprep.mubr.bf16.mxu0 0
      %769 = vmatmul.mubr.bf16.gmra.mrb[0].mxu0 %v603
      %v770 = vpop.f32.mrb[0].mxu0
      %v771 = vadd.f32 0.0, %v770
      %v772 = vpop.f32.mrb[0].mxu0
      %v773 = vpop.f32.mrb[0].mxu0
      %v774 = vadd.f32 0.0, %v773
      %v775 = vpop.f32.mrb[0].mxu0
      %776 = vmatprep.mubr.bf16.mxu0 0
      %777 = vmatmul.mubr.bf16.gmra.mrb[0].mxu0 %v604
      %v778 = vpop.f32.mrb[0].mxu0
      %v779 = vadd.f32 0.0, %v778
      %v780 = vpop.f32.mrb[0].mxu0
      %v781 = vpop.f32.mrb[0].mxu0
      %v782 = vadd.f32 0.0, %v781
      %v783 = vpop.f32.mrb[0].mxu0
      %784 = vmatprep.mubr.bf16.mxu0 0
      %785 = vmatmul.mubr.bf16.gmra.mrb[0].mxu0 %v605
      %v786 = vpop.f32.mrb[0].mxu0
      %v787 = vadd.f32 0.0, %v786
      %v788 = vpop.f32.mrb[0].mxu0
      %v789 = vpop.f32.mrb[0].mxu0
      %v790 = vadd.f32 0.0, %v789
      %v791 = vpop.f32.mrb[0].mxu0
      %792 = vmatprep.mubr.bf16.mxu0 0
      %793 = vmatmul.mubr.bf16.gmra.mrb[0].mxu0 %v606
      %v794 = vpop.f32.mrb[0].mxu0
      %v795 = vadd.f32 0.0, %v794
      %v796 = vpop.f32.mrb[0].mxu0
      %v797 = vpop.f32.mrb[0].mxu0
      %v798 = vadd.f32 0.0, %v797
      %v799 = vpop.f32.mrb[0].mxu0
      %800 = vmatprep.mubr.bf16.mxu0 0
      %801 = vmatmul.mubr.bf16.gmra.mrb[0].mxu0 %v607
      %v802 = vpop.f32.mrb[0].mxu0
      %v803 = vadd.f32 0.0, %v802
      %v804 = vpop.f32.mrb[0].mxu0
      %v805 = vpop.f32.mrb[0].mxu0
      %v806 = vadd.f32 0.0, %v805
      %v807 = vpop.f32.mrb[0].mxu0
      %808 = vmatprep.mubr.bf16.mxu0 0
      %809 = vmatmul.mubr.bf16.gmra.mrb[0].mxu0 %v608
      %v810 = vpop.f32.mrb[0].mxu0
      %v811 = vadd.f32 0.0, %v810
      %v812 = vpop.f32.mrb[0].mxu0
      %v813 = vpop.f32.mrb[0].mxu0
      %v814 = vadd.f32 0.0, %v813
      %v815 = vpop.f32.mrb[0].mxu0
      %816 = vmatprep.mubr.bf16.mxu0 0
      %817 = vmatmul.mubr.bf16.gmra.mrb[0].mxu0 %v609
      %v818 = vpop.f32.mrb[0].mxu0
      %v819 = vadd.f32 0.0, %v818
      %v820 = vpop.f32.mrb[0].mxu0
      %v821 = vpop.f32.mrb[0].mxu0
      %v822 = vadd.f32 0.0, %v821
      %v823 = vpop.f32.mrb[0].mxu0
      %824 = vmatprep.mubr.bf16.mxu0 0
      %825 = vmatmul.mubr.bf16.gmra.mrb[0].mxu0 %v610
      %v826 = vpop.f32.mrb[0].mxu0
      %v827 = vadd.f32 0.0, %v826
      %v828 = vpop.f32.mrb[0].mxu0
      %v829 = vpop.f32.mrb[0].mxu0
      %v830 = vadd.f32 0.0, %v829
      %v831 = vpop.f32.mrb[0].mxu0
      %832 = vmatprep.mubr.bf16.mxu0 0
      %833 = vmatmul.mubr.bf16.gmra.mrb[0].mxu0 %v611
      %v834 = vpop.f32.mrb[0].mxu0
      %v835 = vadd.f32 0.0, %v834
      %v836 = vpop.f32.mrb[0].mxu0
      %v837 = vpop.f32.mrb[0].mxu0
      %v838 = vadd.f32 0.0, %v837
      %v839 = vpop.f32.mrb[0].mxu0
      %840 = vmatprep.mubr.bf16.mxu0 0
      %841 = vmatmul.mubr.bf16.gmra.mrb[0].mxu0 %v612
      %v842 = vpop.f32.mrb[0].mxu0
      %v843 = vadd.f32 0.0, %v842
      %v844 = vpop.f32.mrb[0].mxu0
      %v845 = vpop.f32.mrb[0].mxu0
      %v846 = vadd.f32 0.0, %v845
      %v847 = vpop.f32.mrb[0].mxu0
      %848 = vmatprep.mubr.bf16.mxu0 0
      %849 = vmatmul.mubr.bf16.gmra.mrb[0].mxu0 %v613
      %v850 = vpop.f32.mrb[0].mxu0
      %v851 = vadd.f32 0.0, %v850
      %v852 = vpop.f32.mrb[0].mxu0
      %v853 = vpop.f32.mrb[0].mxu0
      %v854 = vadd.f32 0.0, %v853
      %v855 = vpop.f32.mrb[0].mxu0
      %856 = vmatprep.mubr.bf16.mxu0 0
      %857 = vmatmul.mubr.bf16.gmra.mrb[0].mxu0 %v614
      %v858 = vpop.f32.mrb[0].mxu0
      %v859 = vadd.f32 0.0, %v858
      %v860 = vpop.f32.mrb[0].mxu0
      %v861 = vpop.f32.mrb[0].mxu0
      %v862 = vadd.f32 0.0, %v861
      %v863 = vpop.f32.mrb[0].mxu0
      %864 = vmatprep.mubr.bf16.mxu0 0
      %865 = vmatmul.mubr.bf16.gmra.mrb[0].mxu0 %v615
      %v866 = vpop.f32.mrb[0].mxu0
      %v867 = vadd.f32 0.0, %v866
      %v868 = vpop.f32.mrb[0].mxu0
      %v869 = vpop.f32.mrb[0].mxu0
      %v870 = vadd.f32 0.0, %v869
      %v871 = vpop.f32.mrb[0].mxu0
      %872 = vmatprep.mubr.bf16.mxu0 0
      %873 = vmatmul.mubr.bf16.gmra.mrb[0].mxu0 %v616
      %v874 = vpop.f32.mrb[0].mxu0
      %v875 = vadd.f32 0.0, %v874
      %v876 = vpop.f32.mrb[0].mxu0
      %v877 = vpop.f32.mrb[0].mxu0
      %v878 = vadd.f32 0.0, %v877
      %v879 = vpop.f32.mrb[0].mxu0
      %880 = vmatprep.mubr.bf16.mxu0 0
      %881 = vmatmul.mubr.bf16.gmra.mrb[0].mxu0 %v617
      %v882 = vpop.f32.mrb[0].mxu0
      %v883 = vadd.f32 0.0, %v882
      %v884 = vpop.f32.mrb[0].mxu0
      %v885 = vpop.f32.mrb[0].mxu0
      %v886 = vadd.f32 0.0, %v885
      %v887 = vpop.f32.mrb[0].mxu0
      %888 = vmatprep.mubr.bf16.mxu0 0
      %889 = vmatmul.mubr.bf16.gmra.mrb[0].mxu0 %v618
      %v890 = vpop.f32.mrb[0].mxu0
      %v891 = vadd.f32 0.0, %v890
      %v892 = vpop.f32.mrb[0].mxu0
      %v893 = vpop.f32.mrb[0].mxu0
      %v894 = vadd.f32 0.0, %v893
      %v895 = vpop.f32.mrb[0].mxu0
      %896 = vmatprep.mubr.bf16.mxu0 0
      %897 = vmatmul.mubr.bf16.gmra.mrb[0].mxu0 %v619
      %v898 = vpop.f32.mrb[0].mxu0
      %v899 = vadd.f32 0.0, %v898
      %v900 = vpop.f32.mrb[0].mxu0
      %v901 = vpop.f32.mrb[0].mxu0
      %v902 = vadd.f32 0.0, %v901
      %v903 = vpop.f32.mrb[0].mxu0
      %904 = vmatprep.mubr.bf16.mxu0 0
      %905 = vmatmul.mubr.bf16.gmra.mrb[0].mxu0 %v620
      %v906 = vpop.f32.mrb[0].mxu0
      %v907 = vadd.f32 0.0, %v906
      %v908 = vpop.f32.mrb[0].mxu0
      %v909 = vpop.f32.mrb[0].mxu0
      %v910 = vadd.f32 0.0, %v909
      %v911 = vpop.f32.mrb[0].mxu0
      %912 = vmatprep.mubr.bf16.mxu0 0
      %913 = vmatmul.mubr.bf16.gmra.mrb[0].mxu0 %v621
      %v914 = vpop.f32.mrb[0].mxu0
      %v915 = vadd.f32 0.0, %v914
      %v916 = vpop.f32.mrb[0].mxu0
      %v917 = vpop.f32.mrb[0].mxu0
      %v918 = vadd.f32 0.0, %v917
      %v919 = vpop.f32.mrb[0].mxu0
      %920 = vmatprep.mubr.bf16.mxu0 0
      %921 = vmatmul.mubr.bf16.gmra.mrb[0].mxu0 %v622
      %v922 = vpop.f32.mrb[0].mxu0
      %v923 = vadd.f32 0.0, %v922
      %v924 = vpop.f32.mrb[0].mxu0
      %v925 = vpop.f32.mrb[0].mxu0
      %v926 = vadd.f32 0.0, %v925
      %v927 = vpop.f32.mrb[0].mxu0
      %928 = vmatprep.mubr.bf16.mxu0 0
      %929 = vmatmul.mubr.bf16.gmra.mrb[0].mxu0 %v623
      %v930 = vpop.f32.mrb[0].mxu0
      %v931 = vadd.f32 0.0, %v930
      %v932 = vpop.f32.mrb[0].mxu0
      %v933 = vpop.f32.mrb[0].mxu0
      %v934 = vadd.f32 0.0, %v933
      %v935 = vpop.f32.mrb[0].mxu0
      %936 = vmatprep.mubr.bf16.mxu0 0
      %937 = vmatmul.mubr.bf16.gmra.mrb[0].mxu0 %v624
      %v938 = vpop.f32.mrb[0].mxu0
      %v939 = vadd.f32 0.0, %v938
      %v940 = vpop.f32.mrb[0].mxu0
      %v941 = vpop.f32.mrb[0].mxu0
      %v942 = vadd.f32 0.0, %v941
      %v943 = vpop.f32.mrb[0].mxu0
      %944 = vmatprep.mubr.bf16.mxu0 0
      %945 = vmatmul.mubr.bf16.gmra.mrb[0].mxu0 %v625
      %v946 = vpop.f32.mrb[0].mxu0
      %v947 = vadd.f32 0.0, %v946
      %v948 = vpop.f32.mrb[0].mxu0
      %v949 = vpop.f32.mrb[0].mxu0
      %v950 = vadd.f32 0.0, %v949
      %v951 = vpop.f32.mrb[0].mxu0
      %952 = vmatprep.mubr.bf16.mxu0 0
      %953 = vmatmul.mubr.bf16.gmra.mrb[0].mxu0 %v626
      %v954 = vpop.f32.mrb[0].mxu0
      %v955 = vadd.f32 0.0, %v954
      %v956 = vpop.f32.mrb[0].mxu0
      %v957 = vpop.f32.mrb[0].mxu0
      %v958 = vadd.f32 0.0, %v957
      %v959 = vpop.f32.mrb[0].mxu0
      %960 = vmatprep.mubr.bf16.mxu0 0
      %961 = vmatmul.mubr.bf16.gmra.mrb[0].mxu0 %v627
      %v962 = vpop.f32.mrb[0].mxu0
      %v963 = vadd.f32 0.0, %v962
      %v964 = vpop.f32.mrb[0].mxu0
      %v965 = vpop.f32.mrb[0].mxu0
      %v966 = vadd.f32 0.0, %v965
      %v967 = vpop.f32.mrb[0].mxu0
      %968 = vmatprep.mubr.bf16.mxu0 0
      %969 = vmatmul.mubr.bf16.gmra.mrb[0].mxu0 %v628
      %v970 = vpop.f32.mrb[0].mxu0
      %v971 = vadd.f32 0.0, %v970
      %v972 = vpop.f32.mrb[0].mxu0
      %v973 = vpop.f32.mrb[0].mxu0
      %v974 = vadd.f32 0.0, %v973
      %v975 = vpop.f32.mrb[0].mxu0
      %976 = vmatprep.mubr.bf16.mxu0 0
      %977 = vmatmul.mubr.bf16.gmra.mrb[0].mxu0 %v629
      %v978 = vpop.f32.mrb[0].mxu0
      %v979 = vadd.f32 0.0, %v978
      %v980 = vpop.f32.mrb[0].mxu0
      %v981 = vpop.f32.mrb[0].mxu0
      %v982 = vadd.f32 0.0, %v981
      %v983 = vpop.f32.mrb[0].mxu0
      %984 = vmatprep.mubr.bf16.mxu0 0
      %985 = vmatmul.mubr.bf16.gmra.mrb[0].mxu0 %v630
      %v986 = vpop.f32.mrb[0].mxu0
      %v987 = vadd.f32 0.0, %v986
      %v988 = vpop.f32.mrb[0].mxu0
      %v989 = vpop.f32.mrb[0].mxu0
      %v990 = vadd.f32 0.0, %v989
      %v991 = vpop.f32.mrb[0].mxu0
      %992 = vmatprep.mubr.bf16.mxu0 0
      %993 = vmatmul.mubr.bf16.gmra.mrb[0].mxu0 %v631
      %v994 = vpop.f32.mrb[0].mxu0
      %v995 = vadd.f32 0.0, %v994
      %v996 = vpop.f32.mrb[0].mxu0
      %v997 = vpop.f32.mrb[0].mxu0
      %v998 = vadd.f32 0.0, %v997
      %v999 = vpop.f32.mrb[0].mxu0
      %1000 = vdwg.mxu0
      %v1001 = vadd.f32 %v328, %v747
      %v1002 = vadd.f32 %v329, %v750
      %v1003 = vadd.f32 %v330, %v755
      %v1004 = vadd.f32 %v331, %v758
      %v1005 = vadd.f32 %v332, %v763
      %v1006 = vadd.f32 %v333, %v766
      %v1007 = vadd.f32 %v334, %v771
      %v1008 = vadd.f32 %v335, %v774
      %v1009 = vadd.f32 %v336, %v779
      %v1010 = vadd.f32 %v337, %v782
      %v1011 = vadd.f32 %v338, %v787
      %v1012 = vadd.f32 %v339, %v790
      %v1013 = vadd.f32 %v340, %v795
      %v1014 = vadd.f32 %v341, %v798
      %v1015 = vadd.f32 %v342, %v803
      %v1016 = vadd.f32 %v343, %v806
      %v1017 = vadd.f32 %v344, %v811
      %v1018 = vadd.f32 %v345, %v814
      %v1019 = vadd.f32 %v346, %v819
      %v1020 = vadd.f32 %v347, %v822
      %v1021 = vadd.f32 %v348, %v827
      %v1022 = vadd.f32 %v349, %v830
      %v1023 = vadd.f32 %v350, %v835
      %v1024 = vadd.f32 %v351, %v838
      %v1025 = vadd.f32 %v352, %v843
      %v1026 = vadd.f32 %v353, %v846
      %v1027 = vadd.f32 %v354, %v851
      %v1028 = vadd.f32 %v355, %v854
      %v1029 = vadd.f32 %v356, %v859
      %v1030 = vadd.f32 %v357, %v862
      %v1031 = vadd.f32 %v358, %v867
      %v1032 = vadd.f32 %v359, %v870
      %v1033 = vadd.f32 %v360, %v875
      %v1034 = vadd.f32 %v361, %v878
      %v1035 = vadd.f32 %v362, %v883
      %v1036 = vadd.f32 %v363, %v886
      %v1037 = vadd.f32 %v364, %v891
      %v1038 = vadd.f32 %v365, %v894
      %v1039 = vadd.f32 %v366, %v899
      %v1040 = vadd.f32 %v367, %v902
      %v1041 = vadd.f32 %v368, %v907
      %v1042 = vadd.f32 %v369, %v910
      %v1043 = vadd.f32 %v370, %v915
      %v1044 = vadd.f32 %v371, %v918
      %v1045 = vadd.f32 %v372, %v923
      %v1046 = vadd.f32 %v373, %v926
      %v1047 = vadd.f32 %v374, %v931
      %v1048 = vadd.f32 %v375, %v934
      %v1049 = vadd.f32 %v376, %v939
      %v1050 = vadd.f32 %v377, %v942
      %v1051 = vadd.f32 %v378, %v947
      %v1052 = vadd.f32 %v379, %v950
      %v1053 = vadd.f32 %v380, %v955
      %v1054 = vadd.f32 %v381, %v958
      %v1055 = vadd.f32 %v382, %v963
      %v1056 = vadd.f32 %v383, %v966
      %v1057 = vadd.f32 %v384, %v971
      %v1058 = vadd.f32 %v385, %v974
      %v1059 = vadd.f32 %v386, %v979
      %v1060 = vadd.f32 %v387, %v982
      %v1061 = vadd.f32 %v388, %v987
      %v1062 = vadd.f32 %v389, %v990
      %v1063 = vadd.f32 %v390, %v995
      %v1064 = vadd.f32 %v391, %v998
      %1065 = vst [vmem:[#allocation2] sm:$0xff] %v1001
      %1066 = vst [vmem:[#allocation2 + $0x8] sm:$0xff] %v1002
      %1067 = vst [vmem:[#allocation2 + $0x10] sm:$0xff] %v1003
      %1068 = vst [vmem:[#allocation2 + $0x18] sm:$0xff] %v1004
      %1069 = vst [vmem:[#allocation2 + $0x20] sm:$0xff] %v1005
      %1070 = vst [vmem:[#allocation2 + $0x28] sm:$0xff] %v1006
      %1071 = vst [vmem:[#allocation2 + $0x30] sm:$0xff] %v1007
      %1072 = vst [vmem:[#allocation2 + $0x38] sm:$0xff] %v1008
      %1073 = vst [vmem:[#allocation2 + $0x40] sm:$0xff] %v1009
      %1074 = vst [vmem:[#allocation2 + $0x48] sm:$0xff] %v1010
      %1075 = vst [vmem:[#allocation2 + $0x50] sm:$0xff] %v1011
      %1076 = vst [vmem:[#allocation2 + $0x58] sm:$0xff] %v1012
      %1077 = vst [vmem:[#allocation2 + $0x60] sm:$0xff] %v1013
      %1078 = vst [vmem:[#allocation2 + $0x68] sm:$0xff] %v1014
      %1079 = vst [vmem:[#allocation2 + $0x70] sm:$0xff] %v1015
      %1080 = vst [vmem:[#allocation2 + $0x78] sm:$0xff] %v1016
      %1081 = vst [vmem:[#allocation2 + $0x80] sm:$0xff] %v1017
      %1082 = vst [vmem:[#allocation2 + $0x88] sm:$0xff] %v1018
      %1083 = vst [vmem:[#allocation2 + $0x90] sm:$0xff] %v1019
      %1084 = vst [vmem:[#allocation2 + $0x98] sm:$0xff] %v1020
      %1085 = vst [vmem:[#allocation2 + $0xa0] sm:$0xff] %v1021
      %1086 = vst [vmem:[#allocation2 + $0xa8] sm:$0xff] %v1022
      %1087 = vst [vmem:[#allocation2 + $0xb0] sm:$0xff] %v1023
      %1088 = vst [vmem:[#allocation2 + $0xb8] sm:$0xff] %v1024
      %1089 = vst [vmem:[#allocation2 + $0xc0] sm:$0xff] %v1025
      %1090 = vst [vmem:[#allocation2 + $0xc8] sm:$0xff] %v1026
      %1091 = vst [vmem:[#allocation2 + $0xd0] sm:$0xff] %v1027
      %1092 = vst [vmem:[#allocation2 + $0xd8] sm:$0xff] %v1028
      %1093 = vst [vmem:[#allocation2 + $0xe0] sm:$0xff] %v1029
      %1094 = vst [vmem:[#allocation2 + $0xe8] sm:$0xff] %v1030
      %1095 = vst [vmem:[#allocation2 + $0xf0] sm:$0xff] %v1031
      %1096 = vst [vmem:[#allocation2 + $0xf8] sm:$0xff] %v1032
      %1097 = vst [vmem:[#allocation2 + $0x100] sm:$0xff] %v1033
      %1098 = vst [vmem:[#allocation2 + $0x108] sm:$0xff] %v1034
      %1099 = vst [vmem:[#allocation2 + $0x110] sm:$0xff] %v1035
      %1100 = vst [vmem:[#allocation2 + $0x118] sm:$0xff] %v1036
      %1101 = vst [vmem:[#allocation2 + $0x120] sm:$0xff] %v1037
      %1102 = vst [vmem:[#allocation2 + $0x128] sm:$0xff] %v1038
      %1103 = vst [vmem:[#allocation2 + $0x130] sm:$0xff] %v1039
      %1104 = vst [vmem:[#allocation2 + $0x138] sm:$0xff] %v1040
      %1105 = vst [vmem:[#allocation2 + $0x140] sm:$0xff] %v1041
      %1106 = vst [vmem:[#allocation2 + $0x148] sm:$0xff] %v1042
      %1107 = vst [vmem:[#allocation2 + $0x150] sm:$0xff] %v1043
      %1108 = vst [vmem:[#allocation2 + $0x158] sm:$0xff] %v1044
      %1109 = vst [vmem:[#allocation2 + $0x160] sm:$0xff] %v1045
      %1110 = vst [vmem:[#allocation2 + $0x168] sm:$0xff] %v1046
      %1111 = vst [vmem:[#allocation2 + $0x170] sm:$0xff] %v1047
      %1112 = vst [vmem:[#allocation2 + $0x178] sm:$0xff] %v1048
      %1113 = vst [vmem:[#allocation2 + $0x180] sm:$0xff] %v1049
      %1114 = vst [vmem:[#allocation2 + $0x188] sm:$0xff] %v1050
      %1115 = vst [vmem:[#allocation2 + $0x190] sm:$0xff] %v1051
      %1116 = vst [vmem:[#allocation2 + $0x198] sm:$0xff] %v1052
      %1117 = vst [vmem:[#allocation2 + $0x1a0] sm:$0xff] %v1053
      %1118 = vst [vmem:[#allocation2 + $0x1a8] sm:$0xff] %v1054
      %1119 = vst [vmem:[#allocation2 + $0x1b0] sm:$0xff] %v1055
      %1120 = vst [vmem:[#allocation2 + $0x1b8] sm:$0xff] %v1056
      %1121 = vst [vmem:[#allocation2 + $0x1c0] sm:$0xff] %v1057
      %1122 = vst [vmem:[#allocation2 + $0x1c8] sm:$0xff] %v1058
      %1123 = vst [vmem:[#allocation2 + $0x1d0] sm:$0xff] %v1059
      %1124 = vst [vmem:[#allocation2 + $0x1d8] sm:$0xff] %v1060
      %1125 = vst [vmem:[#allocation2 + $0x1e0] sm:$0xff] %v1061
      %1126 = vst [vmem:[#allocation2 + $0x1e8] sm:$0xff] %v1062
      %1127 = vst [vmem:[#allocation2 + $0x1f0] sm:$0xff] %v1063
      %1128 = vst [vmem:[#allocation2 + $0x1f8] sm:$0xff] %v1064
      // Predicated region
      $region37: #{netD_3d_forward.5} parent=31 // pred_check
        %p1129 = pneg %p260
      $region38: #{netD_3d_forward.5} parent=31 // pred_check_branch
        %1131 = sbr.rel (%p1129) target = $region40
      $region39: #{netD_3d_forward.5} parent=31 // pred_region
        %v1132 = vld [vmem:[#allocation2] sm:$0xff]
        %v1133 = vld [vmem:[#allocation2 + $0x8] sm:$0xff]
        %v1134 = vld [vmem:[#allocation2 + $0x10] sm:$0xff]
        %v1135 = vld [vmem:[#allocation2 + $0x18] sm:$0xff]
        %v1136 = vld [vmem:[#allocation2 + $0x20] sm:$0xff]
        %v1137 = vld [vmem:[#allocation2 + $0x28] sm:$0xff]
        %v1138 = vld [vmem:[#allocation2 + $0x30] sm:$0xff]
        %v1139 = vld [vmem:[#allocation2 + $0x38] sm:$0xff]
        %v1140 = vld [vmem:[#allocation2 + $0x40] sm:$0xff]
        %v1141 = vld [vmem:[#allocation2 + $0x48] sm:$0xff]
        %v1142 = vld [vmem:[#allocation2 + $0x50] sm:$0xff]
        %v1143 = vld [vmem:[#allocation2 + $0x58] sm:$0xff]
        %v1144 = vld [vmem:[#allocation2 + $0x60] sm:$0xff]
        %v1145 = vld [vmem:[#allocation2 + $0x68] sm:$0xff]
        %v1146 = vld [vmem:[#allocation2 + $0x70] sm:$0xff]
        %v1147 = vld [vmem:[#allocation2 + $0x78] sm:$0xff]
        %v1148 = vld [vmem:[#allocation2 + $0x80] sm:$0xff]
        %v1149 = vld [vmem:[#allocation2 + $0x88] sm:$0xff]
        %v1150 = vld [vmem:[#allocation2 + $0x90] sm:$0xff]
        %v1151 = vld [vmem:[#allocation2 + $0x98] sm:$0xff]
        %v1152 = vld [vmem:[#allocation2 + $0xa0] sm:$0xff]
        %v1153 = vld [vmem:[#allocation2 + $0xa8] sm:$0xff]
        %v1154 = vld [vmem:[#allocation2 + $0xb0] sm:$0xff]
        %v1155 = vld [vmem:[#allocation2 + $0xb8] sm:$0xff]
        %v1156 = vld [vmem:[#allocation2 + $0xc0] sm:$0xff]
        %v1157 = vld [vmem:[#allocation2 + $0xc8] sm:$0xff]
        %v1158 = vld [vmem:[#allocation2 + $0xd0] sm:$0xff]
        %v1159 = vld [vmem:[#allocation2 + $0xd8] sm:$0xff]
        %v1160 = vld [vmem:[#allocation2 + $0xe0] sm:$0xff]
        %v1161 = vld [vmem:[#allocation2 + $0xe8] sm:$0xff]
        %v1162 = vld [vmem:[#allocation2 + $0xf0] sm:$0xff]
        %v1163 = vld [vmem:[#allocation2 + $0xf8] sm:$0xff]
        %v1164 = vld [vmem:[#allocation2 + $0x100] sm:$0xff]
        %v1165 = vld [vmem:[#allocation2 + $0x108] sm:$0xff]
        %v1166 = vld [vmem:[#allocation2 + $0x110] sm:$0xff]
        %v1167 = vld [vmem:[#allocation2 + $0x118] sm:$0xff]
        %v1168 = vld [vmem:[#allocation2 + $0x120] sm:$0xff]
        %v1169 = vld [vmem:[#allocation2 + $0x128] sm:$0xff]
        %v1170 = vld [vmem:[#allocation2 + $0x130] sm:$0xff]
        %v1171 = vld [vmem:[#allocation2 + $0x138] sm:$0xff]
        %v1172 = vld [vmem:[#allocation2 + $0x140] sm:$0xff]
        %v1173 = vld [vmem:[#allocation2 + $0x148] sm:$0xff]
        %v1174 = vld [vmem:[#allocation2 + $0x150] sm:$0xff]
        %v1175 = vld [vmem:[#allocation2 + $0x158] sm:$0xff]
        %v1176 = vld [vmem:[#allocation2 + $0x160] sm:$0xff]
        %v1177 = vld [vmem:[#allocation2 + $0x168] sm:$0xff]
        %v1178 = vld [vmem:[#allocation2 + $0x170] sm:$0xff]
        %v1179 = vld [vmem:[#allocation2 + $0x178] sm:$0xff]
        %v1180 = vld [vmem:[#allocation2 + $0x180] sm:$0xff]
        %v1181 = vld [vmem:[#allocation2 + $0x188] sm:$0xff]
        %v1182 = vld [vmem:[#allocation2 + $0x190] sm:$0xff]
        %v1183 = vld [vmem:[#allocation2 + $0x198] sm:$0xff]
        %v1184 = vld [vmem:[#allocation2 + $0x1a0] sm:$0xff]
        %v1185 = vld [vmem:[#allocation2 + $0x1a8] sm:$0xff]
        %v1186 = vld [vmem:[#allocation2 + $0x1b0] sm:$0xff]
        %v1187 = vld [vmem:[#allocation2 + $0x1b8] sm:$0xff]
        %v1188 = vld [vmem:[#allocation2 + $0x1c0] sm:$0xff]
        %v1189 = vld [vmem:[#allocation2 + $0x1c8] sm:$0xff]
        %v1190 = vld [vmem:[#allocation2 + $0x1d0] sm:$0xff]
        %v1191 = vld [vmem:[#allocation2 + $0x1d8] sm:$0xff]
        %v1192 = vld [vmem:[#allocation2 + $0x1e0] sm:$0xff]
        %v1193 = vld [vmem:[#allocation2 + $0x1e8] sm:$0xff]
        %v1194 = vld [vmem:[#allocation2 + $0x1f0] sm:$0xff]
        %v1195 = vld [vmem:[#allocation2 + $0x1f8] sm:$0xff]
        %v1196 = vld [vmem:[%s249] sm:$0x1]
        %v1198 = vlaneseq
        %v1199 = vshrl.u32 %v1198, 7
        %v1200 = vsub.s32 0, %v1199
        %v1201 = vrot.slane %v1196, %v1200
        %v1203 = vadd.f32 %v1132, %v1201
        %v1204 = vadd.f32 %v1133, %v1201
        %v1205 = vadd.f32 %v1134, %v1201
        %v1206 = vadd.f32 %v1135, %v1201
        %v1207 = vadd.f32 %v1136, %v1201
        %v1208 = vadd.f32 %v1137, %v1201
        %v1209 = vadd.f32 %v1138, %v1201
        %v1210 = vadd.f32 %v1139, %v1201
        %v1211 = vadd.f32 %v1140, %v1201
        %v1212 = vadd.f32 %v1141, %v1201
        %v1213 = vadd.f32 %v1142, %v1201
        %v1214 = vadd.f32 %v1143, %v1201
        %v1215 = vadd.f32 %v1144, %v1201
        %v1216 = vadd.f32 %v1145, %v1201
        %v1217 = vadd.f32 %v1146, %v1201
        %v1218 = vadd.f32 %v1147, %v1201
        %v1219 = vadd.f32 %v1148, %v1201
        %v1220 = vadd.f32 %v1149, %v1201
        %v1221 = vadd.f32 %v1150, %v1201
        %v1222 = vadd.f32 %v1151, %v1201
        %v1223 = vadd.f32 %v1152, %v1201
        %v1224 = vadd.f32 %v1153, %v1201
        %v1225 = vadd.f32 %v1154, %v1201
        %v1226 = vadd.f32 %v1155, %v1201
        %v1227 = vadd.f32 %v1156, %v1201
        %v1228 = vadd.f32 %v1157, %v1201
        %v1229 = vadd.f32 %v1158, %v1201
        %v1230 = vadd.f32 %v1159, %v1201
        %v1231 = vadd.f32 %v1160, %v1201
        %v1232 = vadd.f32 %v1161, %v1201
        %v1233 = vadd.f32 %v1162, %v1201
        %v1234 = vadd.f32 %v1163, %v1201
        %v1235 = vadd.f32 %v1164, %v1201
        %v1236 = vadd.f32 %v1165, %v1201
        %v1237 = vadd.f32 %v1166, %v1201
        %v1238 = vadd.f32 %v1167, %v1201
        %v1239 = vadd.f32 %v1168, %v1201
        %v1240 = vadd.f32 %v1169, %v1201
        %v1241 = vadd.f32 %v1170, %v1201
        %v1242 = vadd.f32 %v1171, %v1201
        %v1243 = vadd.f32 %v1172, %v1201
        %v1244 = vadd.f32 %v1173, %v1201
        %v1245 = vadd.f32 %v1174, %v1201
        %v1246 = vadd.f32 %v1175, %v1201
        %v1247 = vadd.f32 %v1176, %v1201
        %v1248 = vadd.f32 %v1177, %v1201
        %v1249 = vadd.f32 %v1178, %v1201
        %v1250 = vadd.f32 %v1179, %v1201
        %v1251 = vadd.f32 %v1180, %v1201
        %v1252 = vadd.f32 %v1181, %v1201
        %v1253 = vadd.f32 %v1182, %v1201
        %v1254 = vadd.f32 %v1183, %v1201
        %v1255 = vadd.f32 %v1184, %v1201
        %v1256 = vadd.f32 %v1185, %v1201
        %v1257 = vadd.f32 %v1186, %v1201
        %v1258 = vadd.f32 %v1187, %v1201
        %v1259 = vadd.f32 %v1188, %v1201
        %v1260 = vadd.f32 %v1189, %v1201
        %v1261 = vadd.f32 %v1190, %v1201
        %v1262 = vadd.f32 %v1191, %v1201
        %v1263 = vadd.f32 %v1192, %v1201
        %v1264 = vadd.f32 %v1193, %v1201
        %v1265 = vadd.f32 %v1194, %v1201
        %v1266 = vadd.f32 %v1195, %v1201
        %vm1267 = vcmp.ge.f32.partialorder %v1203, 0.0
        %vm1268 = vcmp.ge.f32.partialorder %v1204, 0.0
        %vm1269 = vcmp.ge.f32.partialorder %v1205, 0.0
        %vm1270 = vcmp.ge.f32.partialorder %v1206, 0.0
        %vm1271 = vcmp.ge.f32.partialorder %v1207, 0.0
        %vm1272 = vcmp.ge.f32.partialorder %v1208, 0.0
        %vm1273 = vcmp.ge.f32.partialorder %v1209, 0.0
        %vm1274 = vcmp.ge.f32.partialorder %v1210, 0.0
        %vm1275 = vcmp.ge.f32.partialorder %v1211, 0.0
        %vm1276 = vcmp.ge.f32.partialorder %v1212, 0.0
        %vm1277 = vcmp.ge.f32.partialorder %v1213, 0.0
        %vm1278 = vcmp.ge.f32.partialorder %v1214, 0.0
        %vm1279 = vcmp.ge.f32.partialorder %v1215, 0.0
        %vm1280 = vcmp.ge.f32.partialorder %v1216, 0.0
        %vm1281 = vcmp.ge.f32.partialorder %v1217, 0.0
        %vm1282 = vcmp.ge.f32.partialorder %v1218, 0.0
        %vm1283 = vcmp.ge.f32.partialorder %v1219, 0.0
        %vm1284 = vcmp.ge.f32.partialorder %v1220, 0.0
        %vm1285 = vcmp.ge.f32.partialorder %v1221, 0.0
        %vm1286 = vcmp.ge.f32.partialorder %v1222, 0.0
        %vm1287 = vcmp.ge.f32.partialorder %v1223, 0.0
        %vm1288 = vcmp.ge.f32.partialorder %v1224, 0.0
        %vm1289 = vcmp.ge.f32.partialorder %v1225, 0.0
        %vm1290 = vcmp.ge.f32.partialorder %v1226, 0.0
        %vm1291 = vcmp.ge.f32.partialorder %v1227, 0.0
        %vm1292 = vcmp.ge.f32.partialorder %v1228, 0.0
        %vm1293 = vcmp.ge.f32.partialorder %v1229, 0.0
        %vm1294 = vcmp.ge.f32.partialorder %v1230, 0.0
        %vm1295 = vcmp.ge.f32.partialorder %v1231, 0.0
        %vm1296 = vcmp.ge.f32.partialorder %v1232, 0.0
        %vm1297 = vcmp.ge.f32.partialorder %v1233, 0.0
        %vm1298 = vcmp.ge.f32.partialorder %v1234, 0.0
        %vm1299 = vcmp.ge.f32.partialorder %v1235, 0.0
        %vm1300 = vcmp.ge.f32.partialorder %v1236, 0.0
        %vm1301 = vcmp.ge.f32.partialorder %v1237, 0.0
        %vm1302 = vcmp.ge.f32.partialorder %v1238, 0.0
        %vm1303 = vcmp.ge.f32.partialorder %v1239, 0.0
        %vm1304 = vcmp.ge.f32.partialorder %v1240, 0.0
        %vm1305 = vcmp.ge.f32.partialorder %v1241, 0.0
        %vm1306 = vcmp.ge.f32.partialorder %v1242, 0.0
        %vm1307 = vcmp.ge.f32.partialorder %v1243, 0.0
        %vm1308 = vcmp.ge.f32.partialorder %v1244, 0.0
        %vm1309 = vcmp.ge.f32.partialorder %v1245, 0.0
        %vm1310 = vcmp.ge.f32.partialorder %v1246, 0.0
        %vm1311 = vcmp.ge.f32.partialorder %v1247, 0.0
        %vm1312 = vcmp.ge.f32.partialorder %v1248, 0.0
        %vm1313 = vcmp.ge.f32.partialorder %v1249, 0.0
        %vm1314 = vcmp.ge.f32.partialorder %v1250, 0.0
        %vm1315 = vcmp.ge.f32.partialorder %v1251, 0.0
        %vm1316 = vcmp.ge.f32.partialorder %v1252, 0.0
        %vm1317 = vcmp.ge.f32.partialorder %v1253, 0.0
        %vm1318 = vcmp.ge.f32.partialorder %v1254, 0.0
        %vm1319 = vcmp.ge.f32.partialorder %v1255, 0.0
        %vm1320 = vcmp.ge.f32.partialorder %v1256, 0.0
        %vm1321 = vcmp.ge.f32.partialorder %v1257, 0.0
        %vm1322 = vcmp.ge.f32.partialorder %v1258, 0.0
        %vm1323 = vcmp.ge.f32.partialorder %v1259, 0.0
        %vm1324 = vcmp.ge.f32.partialorder %v1260, 0.0
        %vm1325 = vcmp.ge.f32.partialorder %v1261, 0.0
        %vm1326 = vcmp.ge.f32.partialorder %v1262, 0.0
        %vm1327 = vcmp.ge.f32.partialorder %v1263, 0.0
        %vm1328 = vcmp.ge.f32.partialorder %v1264, 0.0
        %vm1329 = vcmp.ge.f32.partialorder %v1265, 0.0
        %vm1330 = vcmp.ge.f32.partialorder %v1266, 0.0
        %v1331 = vmul.f32 %v1203, 0.01
        %v1332 = vmul.f32 %v1204, 0.01
        %v1333 = vmul.f32 %v1205, 0.01
        %v1334 = vmul.f32 %v1206, 0.01
        %v1335 = vmul.f32 %v1207, 0.01
        %v1336 = vmul.f32 %v1208, 0.01
        %v1337 = vmul.f32 %v1209, 0.01
        %v1338 = vmul.f32 %v1210, 0.01
        %v1339 = vmul.f32 %v1211, 0.01
        %v1340 = vmul.f32 %v1212, 0.01
        %v1341 = vmul.f32 %v1213, 0.01
        %v1342 = vmul.f32 %v1214, 0.01
        %v1343 = vmul.f32 %v1215, 0.01
        %v1344 = vmul.f32 %v1216, 0.01
        %v1345 = vmul.f32 %v1217, 0.01
        %v1346 = vmul.f32 %v1218, 0.01
        %v1347 = vmul.f32 %v1219, 0.01
        %v1348 = vmul.f32 %v1220, 0.01
        %v1349 = vmul.f32 %v1221, 0.01
        %v1350 = vmul.f32 %v1222, 0.01
        %v1351 = vmul.f32 %v1223, 0.01
        %v1352 = vmul.f32 %v1224, 0.01
        %v1353 = vmul.f32 %v1225, 0.01
        %v1354 = vmul.f32 %v1226, 0.01
        %v1355 = vmul.f32 %v1227, 0.01
        %v1356 = vmul.f32 %v1228, 0.01
        %v1357 = vmul.f32 %v1229, 0.01
        %v1358 = vmul.f32 %v1230, 0.01
        %v1359 = vmul.f32 %v1231, 0.01
        %v1360 = vmul.f32 %v1232, 0.01
        %v1361 = vmul.f32 %v1233, 0.01
        %v1362 = vmul.f32 %v1234, 0.01
        %v1363 = vmul.f32 %v1235, 0.01
        %v1364 = vmul.f32 %v1236, 0.01
        %v1365 = vmul.f32 %v1237, 0.01
        %v1366 = vmul.f32 %v1238, 0.01
        %v1367 = vmul.f32 %v1239, 0.01
        %v1368 = vmul.f32 %v1240, 0.01
        %v1369 = vmul.f32 %v1241, 0.01
        %v1370 = vmul.f32 %v1242, 0.01
        %v1371 = vmul.f32 %v1243, 0.01
        %v1372 = vmul.f32 %v1244, 0.01
        %v1373 = vmul.f32 %v1245, 0.01
        %v1374 = vmul.f32 %v1246, 0.01
        %v1375 = vmul.f32 %v1247, 0.01
        %v1376 = vmul.f32 %v1248, 0.01
        %v1377 = vmul.f32 %v1249, 0.01
        %v1378 = vmul.f32 %v1250, 0.01
        %v1379 = vmul.f32 %v1251, 0.01
        %v1380 = vmul.f32 %v1252, 0.01
        %v1381 = vmul.f32 %v1253, 0.01
        %v1382 = vmul.f32 %v1254, 0.01
        %v1383 = vmul.f32 %v1255, 0.01
        %v1384 = vmul.f32 %v1256, 0.01
        %v1385 = vmul.f32 %v1257, 0.01
        %v1386 = vmul.f32 %v1258, 0.01
        %v1387 = vmul.f32 %v1259, 0.01
        %v1388 = vmul.f32 %v1260, 0.01
        %v1389 = vmul.f32 %v1261, 0.01
        %v1390 = vmul.f32 %v1262, 0.01
        %v1391 = vmul.f32 %v1263, 0.01
        %v1392 = vmul.f32 %v1264, 0.01
        %v1393 = vmul.f32 %v1265, 0.01
        %v1394 = vmul.f32 %v1266, 0.01
        %v1395 = vsel %vm1267, %v1203, %v1331
        %v1396 = vsel %vm1268, %v1204, %v1332
        %v1397 = vsel %vm1269, %v1205, %v1333
        %v1398 = vsel %vm1270, %v1206, %v1334
        %v1399 = vsel %vm1271, %v1207, %v1335
        %v1400 = vsel %vm1272, %v1208, %v1336
        %v1401 = vsel %vm1273, %v1209, %v1337
        %v1402 = vsel %vm1274, %v1210, %v1338
        %v1403 = vsel %vm1275, %v1211, %v1339
        %v1404 = vsel %vm1276, %v1212, %v1340
        %v1405 = vsel %vm1277, %v1213, %v1341
        %v1406 = vsel %vm1278, %v1214, %v1342
        %v1407 = vsel %vm1279, %v1215, %v1343
        %v1408 = vsel %vm1280, %v1216, %v1344
        %v1409 = vsel %vm1281, %v1217, %v1345
        %v1410 = vsel %vm1282, %v1218, %v1346
        %v1411 = vsel %vm1283, %v1219, %v1347
        %v1412 = vsel %vm1284, %v1220, %v1348
        %v1413 = vsel %vm1285, %v1221, %v1349
        %v1414 = vsel %vm1286, %v1222, %v1350
        %v1415 = vsel %vm1287, %v1223, %v1351
        %v1416 = vsel %vm1288, %v1224, %v1352
        %v1417 = vsel %vm1289, %v1225, %v1353
        %v1418 = vsel %vm1290, %v1226, %v1354
        %v1419 = vsel %vm1291, %v1227, %v1355
        %v1420 = vsel %vm1292, %v1228, %v1356
        %v1421 = vsel %vm1293, %v1229, %v1357
        %v1422 = vsel %vm1294, %v1230, %v1358
        %v1423 = vsel %vm1295, %v1231, %v1359
        %v1424 = vsel %vm1296, %v1232, %v1360
        %v1425 = vsel %vm1297, %v1233, %v1361
        %v1426 = vsel %vm1298, %v1234, %v1362
        %v1427 = vsel %vm1299, %v1235, %v1363
        %v1428 = vsel %vm1300, %v1236, %v1364
        %v1429 = vsel %vm1301, %v1237, %v1365
        %v1430 = vsel %vm1302, %v1238, %v1366
        %v1431 = vsel %vm1303, %v1239, %v1367
        %v1432 = vsel %vm1304, %v1240, %v1368
        %v1433 = vsel %vm1305, %v1241, %v1369
        %v1434 = vsel %vm1306, %v1242, %v1370
        %v1435 = vsel %vm1307, %v1243, %v1371
        %v1436 = vsel %vm1308, %v1244, %v1372
        %v1437 = vsel %vm1309, %v1245, %v1373
        %v1438 = vsel %vm1310, %v1246, %v1374
        %v1439 = vsel %vm1311, %v1247, %v1375
        %v1440 = vsel %vm1312, %v1248, %v1376
        %v1441 = vsel %vm1313, %v1249, %v1377
        %v1442 = vsel %vm1314, %v1250, %v1378
        %v1443 = vsel %vm1315, %v1251, %v1379
        %v1444 = vsel %vm1316, %v1252, %v1380
        %v1445 = vsel %vm1317, %v1253, %v1381
        %v1446 = vsel %vm1318, %v1254, %v1382
        %v1447 = vsel %vm1319, %v1255, %v1383
        %v1448 = vsel %vm1320, %v1256, %v1384
        %v1449 = vsel %vm1321, %v1257, %v1385
        %v1450 = vsel %vm1322, %v1258, %v1386
        %v1451 = vsel %vm1323, %v1259, %v1387
        %v1452 = vsel %vm1324, %v1260, %v1388
        %v1453 = vsel %vm1325, %v1261, %v1389
        %v1454 = vsel %vm1326, %v1262, %v1390
        %v1455 = vsel %vm1327, %v1263, %v1391
        %v1456 = vsel %vm1328, %v1264, %v1392
        %v1457 = vsel %vm1329, %v1265, %v1393
        %v1458 = vsel %vm1330, %v1266, %v1394
        %v1459 = vpack.c.bf16 %v1396, %v1395
        %v1460 = vpack.c.bf16 %v1398, %v1397
        %v1461 = vpack.c.bf16 %v1400, %v1399
        %v1462 = vpack.c.bf16 %v1402, %v1401
        %v1463 = vpack.c.bf16 %v1404, %v1403
        %v1464 = vpack.c.bf16 %v1406, %v1405
        %v1465 = vpack.c.bf16 %v1408, %v1407
        %v1466 = vpack.c.bf16 %v1410, %v1409
        %v1467 = vpack.c.bf16 %v1412, %v1411
        %v1468 = vpack.c.bf16 %v1414, %v1413
        %v1469 = vpack.c.bf16 %v1416, %v1415
        %v1470 = vpack.c.bf16 %v1418, %v1417
        %v1471 = vpack.c.bf16 %v1420, %v1419
        %v1472 = vpack.c.bf16 %v1422, %v1421
        %v1473 = vpack.c.bf16 %v1424, %v1423
        %v1474 = vpack.c.bf16 %v1426, %v1425
        %v1475 = vpack.c.bf16 %v1428, %v1427
        %v1476 = vpack.c.bf16 %v1430, %v1429
        %v1477 = vpack.c.bf16 %v1432, %v1431
        %v1478 = vpack.c.bf16 %v1434, %v1433
        %v1479 = vpack.c.bf16 %v1436, %v1435
        %v1480 = vpack.c.bf16 %v1438, %v1437
        %v1481 = vpack.c.bf16 %v1440, %v1439
        %v1482 = vpack.c.bf16 %v1442, %v1441
        %v1483 = vpack.c.bf16 %v1444, %v1443
        %v1484 = vpack.c.bf16 %v1446, %v1445
        %v1485 = vpack.c.bf16 %v1448, %v1447
        %v1486 = vpack.c.bf16 %v1450, %v1449
        %v1487 = vpack.c.bf16 %v1452, %v1451
        %v1488 = vpack.c.bf16 %v1454, %v1453
        %v1489 = vpack.c.bf16 %v1456, %v1455
        %v1490 = vpack.c.bf16 %v1458, %v1457
        %v1523 = vunpack.c.l.b16 %v1459
        %v1524 = vunpack.c.h.b16 %v1459
        %v1525 = vunpack.c.l.b16 %v1460
        %v1526 = vunpack.c.h.b16 %v1460
        %v1527 = vunpack.c.l.b16 %v1461
        %v1528 = vunpack.c.h.b16 %v1461
        %v1529 = vunpack.c.l.b16 %v1462
        %v1530 = vunpack.c.h.b16 %v1462
        %v1531 = vunpack.c.l.b16 %v1463
        %v1532 = vunpack.c.h.b16 %v1463
        %v1533 = vunpack.c.l.b16 %v1464
        %v1534 = vunpack.c.h.b16 %v1464
        %v1535 = vunpack.c.l.b16 %v1465
        %v1536 = vunpack.c.h.b16 %v1465
        %v1537 = vunpack.c.l.b16 %v1466
        %v1538 = vunpack.c.h.b16 %v1466
        %v1539 = vunpack.c.l.b16 %v1467
        %v1540 = vunpack.c.h.b16 %v1467
        %v1541 = vunpack.c.l.b16 %v1468
        %v1542 = vunpack.c.h.b16 %v1468
        %v1543 = vunpack.c.l.b16 %v1469
        %v1544 = vunpack.c.h.b16 %v1469
        %v1545 = vunpack.c.l.b16 %v1470
        %v1546 = vunpack.c.h.b16 %v1470
        %v1547 = vunpack.c.l.b16 %v1471
        %v1548 = vunpack.c.h.b16 %v1471
        %v1549 = vunpack.c.l.b16 %v1472
        %v1550 = vunpack.c.h.b16 %v1472
        %v1551 = vunpack.c.l.b16 %v1473
        %v1552 = vunpack.c.h.b16 %v1473
        %v1553 = vunpack.c.l.b16 %v1474
        %v1554 = vunpack.c.h.b16 %v1474
        %v1555 = vunpack.c.l.b16 %v1475
        %v1556 = vunpack.c.h.b16 %v1475
        %v1557 = vunpack.c.l.b16 %v1476
        %v1558 = vunpack.c.h.b16 %v1476
        %v1559 = vunpack.c.l.b16 %v1477
        %v1560 = vunpack.c.h.b16 %v1477
        %v1561 = vunpack.c.l.b16 %v1478
        %v1562 = vunpack.c.h.b16 %v1478
        %v1563 = vunpack.c.l.b16 %v1479
        %v1564 = vunpack.c.h.b16 %v1479
        %v1565 = vunpack.c.l.b16 %v1480
        %v1566 = vunpack.c.h.b16 %v1480
        %v1567 = vunpack.c.l.b16 %v1481
        %v1568 = vunpack.c.h.b16 %v1481
        %v1569 = vunpack.c.l.b16 %v1482
        %v1570 = vunpack.c.h.b16 %v1482
        %v1571 = vunpack.c.l.b16 %v1483
        %v1572 = vunpack.c.h.b16 %v1483
        %v1573 = vunpack.c.l.b16 %v1484
        %v1574 = vunpack.c.h.b16 %v1484
        %v1575 = vunpack.c.l.b16 %v1485
        %v1576 = vunpack.c.h.b16 %v1485
        %v1577 = vunpack.c.l.b16 %v1486
        %v1578 = vunpack.c.h.b16 %v1486
        %v1579 = vunpack.c.l.b16 %v1487
        %v1580 = vunpack.c.h.b16 %v1487
        %v1581 = vunpack.c.l.b16 %v1488
        %v1582 = vunpack.c.h.b16 %v1488
        %v1583 = vunpack.c.l.b16 %v1489
        %v1584 = vunpack.c.h.b16 %v1489
        %v1585 = vunpack.c.l.b16 %v1490
        %v1586 = vunpack.c.h.b16 %v1490
        %v1587 = vpack.c.b16 %v1523, %v1523
        %v1588 = vpack.c.b16 %v1524, %v1524
        %v1589 = vpack.c.b16 %v1525, %v1525
        %v1590 = vpack.c.b16 %v1526, %v1526
        %v1591 = vpack.c.b16 %v1527, %v1527
        %v1592 = vpack.c.b16 %v1528, %v1528
        %v1593 = vpack.c.b16 %v1529, %v1529
        %v1594 = vpack.c.b16 %v1530, %v1530
        %v1595 = vpack.c.b16 %v1531, %v1531
        %v1596 = vpack.c.b16 %v1532, %v1532
        %v1597 = vpack.c.b16 %v1533, %v1533
        %v1598 = vpack.c.b16 %v1534, %v1534
        %v1599 = vpack.c.b16 %v1535, %v1535
        %v1600 = vpack.c.b16 %v1536, %v1536
        %v1601 = vpack.c.b16 %v1537, %v1537
        %v1602 = vpack.c.b16 %v1538, %v1538
        %v1603 = vpack.c.b16 %v1539, %v1539
        %v1604 = vpack.c.b16 %v1540, %v1540
        %v1605 = vpack.c.b16 %v1541, %v1541
        %v1606 = vpack.c.b16 %v1542, %v1542
        %v1607 = vpack.c.b16 %v1543, %v1543
        %v1608 = vpack.c.b16 %v1544, %v1544
        %v1609 = vpack.c.b16 %v1545, %v1545
        %v1610 = vpack.c.b16 %v1546, %v1546
        %v1611 = vpack.c.b16 %v1547, %v1547
        %v1612 = vpack.c.b16 %v1548, %v1548
        %v1613 = vpack.c.b16 %v1549, %v1549
        %v1614 = vpack.c.b16 %v1550, %v1550
        %v1615 = vpack.c.b16 %v1551, %v1551
        %v1616 = vpack.c.b16 %v1552, %v1552
        %v1617 = vpack.c.b16 %v1553, %v1553
        %v1618 = vpack.c.b16 %v1554, %v1554
        %v1619 = vpack.c.b16 %v1555, %v1555
        %v1620 = vpack.c.b16 %v1556, %v1556
        %v1621 = vpack.c.b16 %v1557, %v1557
        %v1622 = vpack.c.b16 %v1558, %v1558
        %v1623 = vpack.c.b16 %v1559, %v1559
        %v1624 = vpack.c.b16 %v1560, %v1560
        %v1625 = vpack.c.b16 %v1561, %v1561
        %v1626 = vpack.c.b16 %v1562, %v1562
        %v1627 = vpack.c.b16 %v1563, %v1563
        %v1628 = vpack.c.b16 %v1564, %v1564
        %v1629 = vpack.c.b16 %v1565, %v1565
        %v1630 = vpack.c.b16 %v1566, %v1566
        %v1631 = vpack.c.b16 %v1567, %v1567
        %v1632 = vpack.c.b16 %v1568, %v1568
        %v1633 = vpack.c.b16 %v1569, %v1569
        %v1634 = vpack.c.b16 %v1570, %v1570
        %v1635 = vpack.c.b16 %v1571, %v1571
        %v1636 = vpack.c.b16 %v1572, %v1572
        %v1637 = vpack.c.b16 %v1573, %v1573
        %v1638 = vpack.c.b16 %v1574, %v1574
        %v1639 = vpack.c.b16 %v1575, %v1575
        %v1640 = vpack.c.b16 %v1576, %v1576
        %v1641 = vpack.c.b16 %v1577, %v1577
        %v1642 = vpack.c.b16 %v1578, %v1578
        %v1643 = vpack.c.b16 %v1579, %v1579
        %v1644 = vpack.c.b16 %v1580, %v1580
        %v1645 = vpack.c.b16 %v1581, %v1581
        %v1646 = vpack.c.b16 %v1582, %v1582
        %v1647 = vpack.c.b16 %v1583, %v1583
        %v1648 = vpack.c.b16 %v1584, %v1584
        %v1649 = vpack.c.b16 %v1585, %v1585
        %v1650 = vpack.c.b16 %v1586, %v1586
        %1715 = vst [vmem:[%s257] sm:$0xf] %v1587
        %1716 = vst [vmem:[%s257 + $0x4] sm:$0xf] %v1588
        %1717 = vst [vmem:[%s257 + $0x8] sm:$0xf] %v1589
        %1718 = vst [vmem:[%s257 + $0xc] sm:$0xf] %v1590
        %1719 = vst [vmem:[%s257 + $0x10] sm:$0xf] %v1591
        %1720 = vst [vmem:[%s257 + $0x14] sm:$0xf] %v1592
        %1721 = vst [vmem:[%s257 + $0x18] sm:$0xf] %v1593
        %1722 = vst [vmem:[%s257 + $0x1c] sm:$0xf] %v1594
        %1723 = vst [vmem:[%s257 + $0x20] sm:$0xf] %v1595
        %1724 = vst [vmem:[%s257 + $0x24] sm:$0xf] %v1596
        %1725 = vst [vmem:[%s257 + $0x28] sm:$0xf] %v1597
        %1726 = vst [vmem:[%s257 + $0x2c] sm:$0xf] %v1598
        %1727 = vst [vmem:[%s257 + $0x30] sm:$0xf] %v1599
        %1728 = vst [vmem:[%s257 + $0x34] sm:$0xf] %v1600
        %1729 = vst [vmem:[%s257 + $0x38] sm:$0xf] %v1601
        %1730 = vst [vmem:[%s257 + $0x3c] sm:$0xf] %v1602
        %1731 = vst [vmem:[%s257 + $0x40] sm:$0xf] %v1603
        %1732 = vst [vmem:[%s257 + $0x44] sm:$0xf] %v1604
        %1733 = vst [vmem:[%s257 + $0x48] sm:$0xf] %v1605
        %1734 = vst [vmem:[%s257 + $0x4c] sm:$0xf] %v1606
        %1735 = vst [vmem:[%s257 + $0x50] sm:$0xf] %v1607
        %1736 = vst [vmem:[%s257 + $0x54] sm:$0xf] %v1608
        %1737 = vst [vmem:[%s257 + $0x58] sm:$0xf] %v1609
        %1738 = vst [vmem:[%s257 + $0x5c] sm:$0xf] %v1610
        %1739 = vst [vmem:[%s257 + $0x60] sm:$0xf] %v1611
        %1740 = vst [vmem:[%s257 + $0x64] sm:$0xf] %v1612
        %1741 = vst [vmem:[%s257 + $0x68] sm:$0xf] %v1613
        %1742 = vst [vmem:[%s257 + $0x6c] sm:$0xf] %v1614
        %1743 = vst [vmem:[%s257 + $0x70] sm:$0xf] %v1615
        %1744 = vst [vmem:[%s257 + $0x74] sm:$0xf] %v1616
        %1745 = vst [vmem:[%s257 + $0x78] sm:$0xf] %v1617
        %1746 = vst [vmem:[%s257 + $0x7c] sm:$0xf] %v1618
        %1747 = vst [vmem:[%s257 + $0x80] sm:$0xf] %v1619
        %1748 = vst [vmem:[%s257 + $0x84] sm:$0xf] %v1620
        %1749 = vst [vmem:[%s257 + $0x88] sm:$0xf] %v1621
        %1750 = vst [vmem:[%s257 + $0x8c] sm:$0xf] %v1622
        %1751 = vst [vmem:[%s257 + $0x90] sm:$0xf] %v1623
        %1752 = vst [vmem:[%s257 + $0x94] sm:$0xf] %v1624
        %1753 = vst [vmem:[%s257 + $0x98] sm:$0xf] %v1625
        %1754 = vst [vmem:[%s257 + $0x9c] sm:$0xf] %v1626
        %1755 = vst [vmem:[%s257 + $0xa0] sm:$0xf] %v1627
        %1756 = vst [vmem:[%s257 + $0xa4] sm:$0xf] %v1628
        %1757 = vst [vmem:[%s257 + $0xa8] sm:$0xf] %v1629
        %1758 = vst [vmem:[%s257 + $0xac] sm:$0xf] %v1630
        %1759 = vst [vmem:[%s257 + $0xb0] sm:$0xf] %v1631
        %1760 = vst [vmem:[%s257 + $0xb4] sm:$0xf] %v1632
        %1761 = vst [vmem:[%s257 + $0xb8] sm:$0xf] %v1633
        %1762 = vst [vmem:[%s257 + $0xbc] sm:$0xf] %v1634
        %1763 = vst [vmem:[%s257 + $0xc0] sm:$0xf] %v1635
        %1764 = vst [vmem:[%s257 + $0xc4] sm:$0xf] %v1636
        %1765 = vst [vmem:[%s257 + $0xc8] sm:$0xf] %v1637
        %1766 = vst [vmem:[%s257 + $0xcc] sm:$0xf] %v1638
        %1767 = vst [vmem:[%s257 + $0xd0] sm:$0xf] %v1639
        %1768 = vst [vmem:[%s257 + $0xd4] sm:$0xf] %v1640
        %1769 = vst [vmem:[%s257 + $0xd8] sm:$0xf] %v1641
        %1770 = vst [vmem:[%s257 + $0xdc] sm:$0xf] %v1642
        %1771 = vst [vmem:[%s257 + $0xe0] sm:$0xf] %v1643
        %1772 = vst [vmem:[%s257 + $0xe4] sm:$0xf] %v1644
        %1773 = vst [vmem:[%s257 + $0xe8] sm:$0xf] %v1645
        %1774 = vst [vmem:[%s257 + $0xec] sm:$0xf] %v1646
        %1775 = vst [vmem:[%s257 + $0xf0] sm:$0xf] %v1647
        %1776 = vst [vmem:[%s257 + $0xf4] sm:$0xf] %v1648
        %1777 = vst [vmem:[%s257 + $0xf8] sm:$0xf] %v1649
        %1778 = vst [vmem:[%s257 + $0xfc] sm:$0xf] %v1650
      $region40: #{netD_3d_forward.5} parent=31 // pred_fallthru
        _
      %s1779 = smul.u32 64, %s19
      %p1780 = scmp.lt.s32.totalorder %s1779, 127
      %s1781 = scalar_select %p1780, %s1779, 127
      %p1782 = scmp.lt.s32.totalorder %s20, 0
      %s1783 = scalar_select %p1782, %s20, 0
      %s1784 = sadd.s32 %s1783, %s1781
      %s1785 = smul.addr %s1784, 4
      %s1786 = scalar_lea.vmem %s3, %s1785
      // Predicated region
      $region41: #{netD_3d_forward.5} parent=31 // pred_check
        %p1787 = pneg %p135
      $region42: #{netD_3d_forward.5} parent=31 // pred_check_branch
        %1789 = sbr.rel (%p1787) target = $region44
      $region43: #{netD_3d_forward.5} parent=31 // pred_region
        %s1790 = smul.u32 64, %s19
      $region44: #{netD_3d_forward.5} parent=31 // pred_fallthru
        _
    $region32: #{netD_3d_forward.5} parent=5 // pred_fallthru
      _
    %p1791 = scmp.le.s32.totalorder 2, %s9
    // Predicated region
    $region45: #{netD_3d_forward.5} parent=5 // pred_check
      %p1792 = pneg %p1791
    $region46: #{netD_3d_forward.5} parent=5 // pred_check_branch
      %1794 = sbr.rel (%p1792) target = $region48
    $region47: #{netD_3d_forward.5} parent=5 // pred_region
      %s1795 = ssub.s32 %s9, 2
      // Predicated region
      $region49: #{netD_3d_forward.5} parent=47 // pred_check
        %p1796 = pneg %p141
      $region50: #{netD_3d_forward.5} parent=47 // pred_check_branch
        %1798 = sbr.rel (%p1796) target = $region52
      $region51: #{netD_3d_forward.5} parent=47 // pred_region
        %s1799 = smul.u32 64, %s22
        %p1800 = scmp.lt.s32.totalorder %s1799, 127
        %s1801 = scalar_select %p1800, %s1799, 127
        %p1802 = scmp.lt.s32.totalorder %s23, 0
        %s1803 = scalar_select %p1802, %s23, 0
        %s1804 = sadd.s32 %s1803, %s1801
        %s1805 = smul.addr %s1804, 4
        %s1806 = scalar_lea.vmem %s3, %s1805
      $region52: #{netD_3d_forward.5} parent=47 // pred_fallthru
        _
    $region48: #{netD_3d_forward.5} parent=5 // pred_fallthru
      _
  $region6: #{netD_3d_forward.5} parent=0 // loop_footer
    %s13 = sadd.s32 1, %s9
  $region7: #{netD_3d_forward.5} parent=0 // loop_footer_branch
    %8 = sbr.rel target = $region3
  $region8: #{netD_3d_forward.5} parent=0 // loop_exit
    _

// kernel: netD_3d_forward.6
$region0: #{netD_3d_forward.6}
  #allocation0 [shape = 'u32[]', space=smem, size = 0x4, offset = 0x4, fixed_abs, tag = 'smem constant byte address 0x4 - core index']
  #allocation1 [shape = 'u32[144,128]{1,0:T(1,128)}', space=vmem, size = 0x12000, scoped, tag = 'internal scratch']
  #allocation2 [shape = 'f32[128,128]{1,0:T(8,128)}', space=vmem, size = 0x10000, scoped, tag = 'scratch operand']
  %s0 = inlined_call_operand.vmem [shape: bf16[128,256], index: 0, kind: input, shape index: {}]
  %s1 = inlined_call_operand.vmem [shape: bf16[256,128], index: 1, kind: input, shape index: {}]
  %s2 = inlined_call_operand.vmem [shape: f32[1,128], index: 2, kind: input, shape index: {}]
  %s3 = inlined_call_operand.vmem [shape: bf16[128,128], index: 3, kind: output, shape index: {}]
  %s4 = sld [smem:[#allocation0]]
  $region30: #{netD_3d_forward.6} parent=0
    _
  %s6 = ssub.s32 1, %s4
  %s7 = scalar_select 0, %s6, %s4
  // Predicated region
  $region2: #{netD_3d_forward.6} parent=0 // pred_check
    _
  $region3: #{netD_3d_forward.6} parent=0 // pred_check_branch
    %9 = sbr.rel (0) target = $region5
  $region4: #{netD_3d_forward.6} parent=0 // pred_region
    _
  $region5: #{netD_3d_forward.6} parent=0 // pred_fallthru
    _
  // Predicated region
  $region6: #{netD_3d_forward.6} parent=0 // pred_check
    _
  $region7: #{netD_3d_forward.6} parent=0 // pred_check_branch
    %11 = sbr.rel (0) target = $region9
  $region8: #{netD_3d_forward.6} parent=0 // pred_region
    _
  $region9: #{netD_3d_forward.6} parent=0 // pred_fallthru
    _
  // Predicated region
  $region10: #{netD_3d_forward.6} parent=0 // pred_check
    _
  $region11: #{netD_3d_forward.6} parent=0 // pred_check_branch
    %13 = sbr.rel (0) target = $region13
  $region12: #{netD_3d_forward.6} parent=0 // pred_region
    _
  $region13: #{netD_3d_forward.6} parent=0 // pred_fallthru
    _
  %p15 = scmp.eq.s32.totalorder 0, 0
  // Predicated region
  $region14: #{netD_3d_forward.6} parent=0 // pred_check
    %p16 = pneg %p15
  $region15: #{netD_3d_forward.6} parent=0 // pred_check_branch
    %18 = sbr.rel (%p16) target = $region17
  $region16: #{netD_3d_forward.6} parent=0 // pred_region
    %19 = vst [vmem:[#allocation2] sm:$0xff] 0.0
    %20 = vst [vmem:[#allocation2 + $0x8] sm:$0xff] 0.0
    %21 = vst [vmem:[#allocation2 + $0x10] sm:$0xff] 0.0
    %22 = vst [vmem:[#allocation2 + $0x18] sm:$0xff] 0.0
    %23 = vst [vmem:[#allocation2 + $0x20] sm:$0xff] 0.0
    %24 = vst [vmem:[#allocation2 + $0x28] sm:$0xff] 0.0
    %25 = vst [vmem:[#allocation2 + $0x30] sm:$0xff] 0.0
    %26 = vst [vmem:[#allocation2 + $0x38] sm:$0xff] 0.0
    %27 = vst [vmem:[#allocation2 + $0x40] sm:$0xff] 0.0
    %28 = vst [vmem:[#allocation2 + $0x48] sm:$0xff] 0.0
    %29 = vst [vmem:[#allocation2 + $0x50] sm:$0xff] 0.0
    %30 = vst [vmem:[#allocation2 + $0x58] sm:$0xff] 0.0
    %31 = vst [vmem:[#allocation2 + $0x60] sm:$0xff] 0.0
    %32 = vst [vmem:[#allocation2 + $0x68] sm:$0xff] 0.0
    %33 = vst [vmem:[#allocation2 + $0x70] sm:$0xff] 0.0
    %34 = vst [vmem:[#allocation2 + $0x78] sm:$0xff] 0.0
  $region17: #{netD_3d_forward.6} parent=0 // pred_fallthru
    _
  %v35 = vld [vmem:[#allocation2] sm:$0xff]
  %v36 = vld [vmem:[#allocation2 + $0x8] sm:$0xff]
  %v37 = vld [vmem:[#allocation2 + $0x10] sm:$0xff]
  %v38 = vld [vmem:[#allocation2 + $0x18] sm:$0xff]
  %v39 = vld [vmem:[#allocation2 + $0x20] sm:$0xff]
  %v40 = vld [vmem:[#allocation2 + $0x28] sm:$0xff]
  %v41 = vld [vmem:[#allocation2 + $0x30] sm:$0xff]
  %v42 = vld [vmem:[#allocation2 + $0x38] sm:$0xff]
  %v43 = vld [vmem:[#allocation2 + $0x40] sm:$0xff]
  %v44 = vld [vmem:[#allocation2 + $0x48] sm:$0xff]
  %v45 = vld [vmem:[#allocation2 + $0x50] sm:$0xff]
  %v46 = vld [vmem:[#allocation2 + $0x58] sm:$0xff]
  %v47 = vld [vmem:[#allocation2 + $0x60] sm:$0xff]
  %v48 = vld [vmem:[#allocation2 + $0x68] sm:$0xff]
  %v49 = vld [vmem:[#allocation2 + $0x70] sm:$0xff]
  %v50 = vld [vmem:[#allocation2 + $0x78] sm:$0xff]
  %v51 = vld [vmem:[%s0] sm:$0xff]
  %v52 = vld [vmem:[%s0 + $0x8] sm:$0xff]
  %v53 = vld [vmem:[%s0 + $0x10] sm:$0xff]
  %v54 = vld [vmem:[%s0 + $0x18] sm:$0xff]
  %v55 = vld [vmem:[%s0 + $0x20] sm:$0xff]
  %v56 = vld [vmem:[%s0 + $0x28] sm:$0xff]
  %v57 = vld [vmem:[%s0 + $0x30] sm:$0xff]
  %v58 = vld [vmem:[%s0 + $0x38] sm:$0xff]
  %v59 = vld [vmem:[%s0 + $0x40] sm:$0xff]
  %v60 = vld [vmem:[%s0 + $0x48] sm:$0xff]
  %v61 = vld [vmem:[%s0 + $0x50] sm:$0xff]
  %v62 = vld [vmem:[%s0 + $0x58] sm:$0xff]
  %v63 = vld [vmem:[%s0 + $0x60] sm:$0xff]
  %v64 = vld [vmem:[%s0 + $0x68] sm:$0xff]
  %v65 = vld [vmem:[%s0 + $0x70] sm:$0xff]
  %v66 = vld [vmem:[%s0 + $0x78] sm:$0xff]
  %v67 = vld [vmem:[%s1] sm:$0xf]
  %v68 = vld [vmem:[%s1 + $0x4] sm:$0xf]
  %v69 = vld [vmem:[%s1 + $0x8] sm:$0xf]
  %v70 = vld [vmem:[%s1 + $0xc] sm:$0xf]
  %v71 = vld [vmem:[%s1 + $0x10] sm:$0xf]
  %v72 = vld [vmem:[%s1 + $0x14] sm:$0xf]
  %v73 = vld [vmem:[%s1 + $0x18] sm:$0xf]
  %v74 = vld [vmem:[%s1 + $0x1c] sm:$0xf]
  %v75 = vld [vmem:[%s1 + $0x20] sm:$0xf]
  %v76 = vld [vmem:[%s1 + $0x24] sm:$0xf]
  %v77 = vld [vmem:[%s1 + $0x28] sm:$0xf]
  %v78 = vld [vmem:[%s1 + $0x2c] sm:$0xf]
  %v79 = vld [vmem:[%s1 + $0x30] sm:$0xf]
  %v80 = vld [vmem:[%s1 + $0x34] sm:$0xf]
  %v81 = vld [vmem:[%s1 + $0x38] sm:$0xf]
  %v82 = vld [vmem:[%s1 + $0x3c] sm:$0xf]
  %v83 = vld [vmem:[%s1 + $0x40] sm:$0xf]
  %v84 = vld [vmem:[%s1 + $0x44] sm:$0xf]
  %v85 = vld [vmem:[%s1 + $0x48] sm:$0xf]
  %v86 = vld [vmem:[%s1 + $0x4c] sm:$0xf]
  %v87 = vld [vmem:[%s1 + $0x50] sm:$0xf]
  %v88 = vld [vmem:[%s1 + $0x54] sm:$0xf]
  %v89 = vld [vmem:[%s1 + $0x58] sm:$0xf]
  %v90 = vld [vmem:[%s1 + $0x5c] sm:$0xf]
  %v91 = vld [vmem:[%s1 + $0x60] sm:$0xf]
  %v92 = vld [vmem:[%s1 + $0x64] sm:$0xf]
  %v93 = vld [vmem:[%s1 + $0x68] sm:$0xf]
  %v94 = vld [vmem:[%s1 + $0x6c] sm:$0xf]
  %v95 = vld [vmem:[%s1 + $0x70] sm:$0xf]
  %v96 = vld [vmem:[%s1 + $0x74] sm:$0xf]
  %v97 = vld [vmem:[%s1 + $0x78] sm:$0xf]
  %v98 = vld [vmem:[%s1 + $0x7c] sm:$0xf]
  %v115 = vunpack.c.l.b16 %v51
  %v116 = vunpack.c.h.b16 %v51
  %v117 = vunpack.c.l.b16 %v52
  %v118 = vunpack.c.h.b16 %v52
  %v119 = vunpack.c.l.b16 %v53
  %v120 = vunpack.c.h.b16 %v53
  %v121 = vunpack.c.l.b16 %v54
  %v122 = vunpack.c.h.b16 %v54
  %v123 = vunpack.c.l.b16 %v55
  %v124 = vunpack.c.h.b16 %v55
  %v125 = vunpack.c.l.b16 %v56
  %v126 = vunpack.c.h.b16 %v56
  %v127 = vunpack.c.l.b16 %v57
  %v128 = vunpack.c.h.b16 %v57
  %v129 = vunpack.c.l.b16 %v58
  %v130 = vunpack.c.h.b16 %v58
  %v131 = vunpack.c.l.b16 %v59
  %v132 = vunpack.c.h.b16 %v59
  %v133 = vunpack.c.l.b16 %v60
  %v134 = vunpack.c.h.b16 %v60
  %v135 = vunpack.c.l.b16 %v61
  %v136 = vunpack.c.h.b16 %v61
  %v137 = vunpack.c.l.b16 %v62
  %v138 = vunpack.c.h.b16 %v62
  %v139 = vunpack.c.l.b16 %v63
  %v140 = vunpack.c.h.b16 %v63
  %v141 = vunpack.c.l.b16 %v64
  %v142 = vunpack.c.h.b16 %v64
  %v143 = vunpack.c.l.b16 %v65
  %v144 = vunpack.c.h.b16 %v65
  %v145 = vunpack.c.l.b16 %v66
  %v146 = vunpack.c.h.b16 %v66
  %v147 = vpack.c.b16 %v117, %v115
  %v148 = vpack.c.b16 %v118, %v116
  %v149 = vpack.c.b16 %v121, %v119
  %v150 = vpack.c.b16 %v122, %v120
  %v151 = vpack.c.b16 %v125, %v123
  %v152 = vpack.c.b16 %v126, %v124
  %v153 = vpack.c.b16 %v129, %v127
  %v154 = vpack.c.b16 %v130, %v128
  %v155 = vpack.c.b16 %v133, %v131
  %v156 = vpack.c.b16 %v134, %v132
  %v157 = vpack.c.b16 %v137, %v135
  %v158 = vpack.c.b16 %v138, %v136
  %v159 = vpack.c.b16 %v141, %v139
  %v160 = vpack.c.b16 %v142, %v140
  %v161 = vpack.c.b16 %v145, %v143
  %v162 = vpack.c.b16 %v146, %v144
  %v211 = vunpack.c.l.b16 %v67
  %v212 = vunpack.c.l.b16 %v68
  %v213 = vunpack.c.l.b16 %v69
  %v214 = vunpack.c.l.b16 %v70
  %v215 = vunpack.c.l.b16 %v71
  %v216 = vunpack.c.l.b16 %v72
  %v217 = vunpack.c.l.b16 %v73
  %v218 = vunpack.c.l.b16 %v74
  %v219 = vunpack.c.l.b16 %v75
  %v220 = vunpack.c.l.b16 %v76
  %v221 = vunpack.c.l.b16 %v77
  %v222 = vunpack.c.l.b16 %v78
  %v223 = vunpack.c.l.b16 %v79
  %v224 = vunpack.c.l.b16 %v80
  %v225 = vunpack.c.l.b16 %v81
  %v226 = vunpack.c.l.b16 %v82
  %v227 = vunpack.c.l.b16 %v83
  %v228 = vunpack.c.l.b16 %v84
  %v229 = vunpack.c.l.b16 %v85
  %v230 = vunpack.c.l.b16 %v86
  %v231 = vunpack.c.l.b16 %v87
  %v232 = vunpack.c.l.b16 %v88
  %v233 = vunpack.c.l.b16 %v89
  %v234 = vunpack.c.l.b16 %v90
  %v235 = vunpack.c.l.b16 %v91
  %v236 = vunpack.c.l.b16 %v92
  %v237 = vunpack.c.l.b16 %v93
  %v238 = vunpack.c.l.b16 %v94
  %v239 = vunpack.c.l.b16 %v95
  %v240 = vunpack.c.l.b16 %v96
  %v241 = vunpack.c.l.b16 %v97
  %v242 = vunpack.c.l.b16 %v98
  %v243 = vpack.c.b16 %v212, %v211
  %v244 = vpack.c.b16 %v214, %v213
  %v245 = vpack.c.b16 %v216, %v215
  %v246 = vpack.c.b16 %v218, %v217
  %v247 = vpack.c.b16 %v220, %v219
  %v248 = vpack.c.b16 %v222, %v221
  %v249 = vpack.c.b16 %v224, %v223
  %v250 = vpack.c.b16 %v226, %v225
  %v251 = vpack.c.b16 %v228, %v227
  %v252 = vpack.c.b16 %v230, %v229
  %v253 = vpack.c.b16 %v232, %v231
  %v254 = vpack.c.b16 %v234, %v233
  %v255 = vpack.c.b16 %v236, %v235
  %v256 = vpack.c.b16 %v238, %v237
  %v257 = vpack.c.b16 %v240, %v239
  %v258 = vpack.c.b16 %v242, %v241
  %275 = vmatprep.subr.bf16.mxu0 0
  %276 = vmatpush1.bf16.msra.mxu0 %v243
  %277 = vmatprep.subr.bf16.mxu0 0
  %278 = vmatpush1.bf16.msra.mxu0 %v244
  %279 = vmatprep.subr.bf16.mxu0 0
  %280 = vmatpush1.bf16.msra.mxu0 %v245
  %281 = vmatprep.subr.bf16.mxu0 0
  %282 = vmatpush1.bf16.msra.mxu0 %v246
  %283 = vmatprep.subr.bf16.mxu0 0
  %284 = vmatpush1.bf16.msra.mxu0 %v247
  %285 = vmatprep.subr.bf16.mxu0 0
  %286 = vmatpush1.bf16.msra.mxu0 %v248
  %287 = vmatprep.subr.bf16.mxu0 0
  %288 = vmatpush1.bf16.msra.mxu0 %v249
  %289 = vmatprep.subr.bf16.mxu0 0
  %290 = vmatpush1.bf16.msra.mxu0 %v250
  %291 = vmatprep.subr.bf16.mxu0 0
  %292 = vmatpush1.bf16.msra.mxu0 %v251
  %293 = vmatprep.subr.bf16.mxu0 0
  %294 = vmatpush1.bf16.msra.mxu0 %v252
  %295 = vmatprep.subr.bf16.mxu0 0
  %296 = vmatpush1.bf16.msra.mxu0 %v253
  %297 = vmatprep.subr.bf16.mxu0 0
  %298 = vmatpush1.bf16.msra.mxu0 %v254
  %299 = vmatprep.subr.bf16.mxu0 0
  %300 = vmatpush1.bf16.msra.mxu0 %v255
  %301 = vmatprep.subr.bf16.mxu0 0
  %302 = vmatpush1.bf16.msra.mxu0 %v256
  %303 = vmatprep.subr.bf16.mxu0 0
  %304 = vmatpush1.bf16.msra.mxu0 %v257
  %305 = vmatprep.subr.bf16.mxu0 0
  %306 = vmatpush1.bf16.msra.mxu0 %v258
  %307 = vmatprep.mubr.bf16.mxu0 %v148
  %308 = vmatmul.mubr.bf16.gmra.mrb[0].mxu0 %v147
  %v309 = vpop.f32.mrb[0].mxu0
  %v310 = vadd.f32 0.0, %v309
  %v311 = vpop.f32.mrb[0].mxu0
  %v312 = vpop.f32.mrb[0].mxu0
  %v313 = vadd.f32 0.0, %v312
  %v314 = vpop.f32.mrb[0].mxu0
  %315 = vmatprep.mubr.bf16.mxu0 %v150
  %316 = vmatmul.mubr.bf16.gmra.mrb[0].mxu0 %v149
  %v317 = vpop.f32.mrb[0].mxu0
  %v318 = vadd.f32 0.0, %v317
  %v319 = vpop.f32.mrb[0].mxu0
  %v320 = vpop.f32.mrb[0].mxu0
  %v321 = vadd.f32 0.0, %v320
  %v322 = vpop.f32.mrb[0].mxu0
  %323 = vmatprep.mubr.bf16.mxu0 %v152
  %324 = vmatmul.mubr.bf16.gmra.mrb[0].mxu0 %v151
  %v325 = vpop.f32.mrb[0].mxu0
  %v326 = vadd.f32 0.0, %v325
  %v327 = vpop.f32.mrb[0].mxu0
  %v328 = vpop.f32.mrb[0].mxu0
  %v329 = vadd.f32 0.0, %v328
  %v330 = vpop.f32.mrb[0].mxu0
  %331 = vmatprep.mubr.bf16.mxu0 %v154
  %332 = vmatmul.mubr.bf16.gmra.mrb[0].mxu0 %v153
  %v333 = vpop.f32.mrb[0].mxu0
  %v334 = vadd.f32 0.0, %v333
  %v335 = vpop.f32.mrb[0].mxu0
  %v336 = vpop.f32.mrb[0].mxu0
  %v337 = vadd.f32 0.0, %v336
  %v338 = vpop.f32.mrb[0].mxu0
  %339 = vmatprep.mubr.bf16.mxu0 %v156
  %340 = vmatmul.mubr.bf16.gmra.mrb[0].mxu0 %v155
  %v341 = vpop.f32.mrb[0].mxu0
  %v342 = vadd.f32 0.0, %v341
  %v343 = vpop.f32.mrb[0].mxu0
  %v344 = vpop.f32.mrb[0].mxu0
  %v345 = vadd.f32 0.0, %v344
  %v346 = vpop.f32.mrb[0].mxu0
  %347 = vmatprep.mubr.bf16.mxu0 %v158
  %348 = vmatmul.mubr.bf16.gmra.mrb[0].mxu0 %v157
  %v349 = vpop.f32.mrb[0].mxu0
  %v350 = vadd.f32 0.0, %v349
  %v351 = vpop.f32.mrb[0].mxu0
  %v352 = vpop.f32.mrb[0].mxu0
  %v353 = vadd.f32 0.0, %v352
  %v354 = vpop.f32.mrb[0].mxu0
  %355 = vmatprep.mubr.bf16.mxu0 %v160
  %356 = vmatmul.mubr.bf16.gmra.mrb[0].mxu0 %v159
  %v357 = vpop.f32.mrb[0].mxu0
  %v358 = vadd.f32 0.0, %v357
  %v359 = vpop.f32.mrb[0].mxu0
  %v360 = vpop.f32.mrb[0].mxu0
  %v361 = vadd.f32 0.0, %v360
  %v362 = vpop.f32.mrb[0].mxu0
  %363 = vmatprep.mubr.bf16.mxu0 %v162
  %364 = vmatmul.mubr.bf16.gmra.mrb[0].mxu0 %v161
  %v365 = vpop.f32.mrb[0].mxu0
  %v366 = vadd.f32 0.0, %v365
  %v367 = vpop.f32.mrb[0].mxu0
  %v368 = vpop.f32.mrb[0].mxu0
  %v369 = vadd.f32 0.0, %v368
  %v370 = vpop.f32.mrb[0].mxu0
  %371 = vdwg.mxu0
  %v372 = vadd.f32 %v35, %v310
  %v373 = vadd.f32 %v36, %v313
  %v374 = vadd.f32 %v37, %v318
  %v375 = vadd.f32 %v38, %v321
  %v376 = vadd.f32 %v39, %v326
  %v377 = vadd.f32 %v40, %v329
  %v378 = vadd.f32 %v41, %v334
  %v379 = vadd.f32 %v42, %v337
  %v380 = vadd.f32 %v43, %v342
  %v381 = vadd.f32 %v44, %v345
  %v382 = vadd.f32 %v45, %v350
  %v383 = vadd.f32 %v46, %v353
  %v384 = vadd.f32 %v47, %v358
  %v385 = vadd.f32 %v48, %v361
  %v386 = vadd.f32 %v49, %v366
  %v387 = vadd.f32 %v50, %v369
  %388 = vst [vmem:[#allocation2] sm:$0xff] %v372
  %389 = vst [vmem:[#allocation2 + $0x8] sm:$0xff] %v373
  %390 = vst [vmem:[#allocation2 + $0x10] sm:$0xff] %v374
  %391 = vst [vmem:[#allocation2 + $0x18] sm:$0xff] %v375
  %392 = vst [vmem:[#allocation2 + $0x20] sm:$0xff] %v376
  %393 = vst [vmem:[#allocation2 + $0x28] sm:$0xff] %v377
  %394 = vst [vmem:[#allocation2 + $0x30] sm:$0xff] %v378
  %395 = vst [vmem:[#allocation2 + $0x38] sm:$0xff] %v379
  %396 = vst [vmem:[#allocation2 + $0x40] sm:$0xff] %v380
  %397 = vst [vmem:[#allocation2 + $0x48] sm:$0xff] %v381
  %398 = vst [vmem:[#allocation2 + $0x50] sm:$0xff] %v382
  %399 = vst [vmem:[#allocation2 + $0x58] sm:$0xff] %v383
  %400 = vst [vmem:[#allocation2 + $0x60] sm:$0xff] %v384
  %401 = vst [vmem:[#allocation2 + $0x68] sm:$0xff] %v385
  %402 = vst [vmem:[#allocation2 + $0x70] sm:$0xff] %v386
  %403 = vst [vmem:[#allocation2 + $0x78] sm:$0xff] %v387
  // Predicated region
  $region18: #{netD_3d_forward.6} parent=0 // pred_check
    %p404 = pneg %p15
  $region19: #{netD_3d_forward.6} parent=0 // pred_check_branch
    %406 = sbr.rel (%p404) target = $region21
  $region20: #{netD_3d_forward.6} parent=0 // pred_region
    %v407 = vld [vmem:[#allocation2] sm:$0xff]
    %v408 = vld [vmem:[#allocation2 + $0x8] sm:$0xff]
    %v409 = vld [vmem:[#allocation2 + $0x10] sm:$0xff]
    %v410 = vld [vmem:[#allocation2 + $0x18] sm:$0xff]
    %v411 = vld [vmem:[#allocation2 + $0x20] sm:$0xff]
    %v412 = vld [vmem:[#allocation2 + $0x28] sm:$0xff]
    %v413 = vld [vmem:[#allocation2 + $0x30] sm:$0xff]
    %v414 = vld [vmem:[#allocation2 + $0x38] sm:$0xff]
    %v415 = vld [vmem:[#allocation2 + $0x40] sm:$0xff]
    %v416 = vld [vmem:[#allocation2 + $0x48] sm:$0xff]
    %v417 = vld [vmem:[#allocation2 + $0x50] sm:$0xff]
    %v418 = vld [vmem:[#allocation2 + $0x58] sm:$0xff]
    %v419 = vld [vmem:[#allocation2 + $0x60] sm:$0xff]
    %v420 = vld [vmem:[#allocation2 + $0x68] sm:$0xff]
    %v421 = vld [vmem:[#allocation2 + $0x70] sm:$0xff]
    %v422 = vld [vmem:[#allocation2 + $0x78] sm:$0xff]
    %v423 = vld [vmem:[%s2] sm:$0x1]
    %v425 = vlaneseq
    %v426 = vshrl.u32 %v425, 7
    %v427 = vsub.s32 0, %v426
    %v428 = vrot.slane %v423, %v427
    %v430 = vadd.f32 %v407, %v428
    %v431 = vadd.f32 %v408, %v428
    %v432 = vadd.f32 %v409, %v428
    %v433 = vadd.f32 %v410, %v428
    %v434 = vadd.f32 %v411, %v428
    %v435 = vadd.f32 %v412, %v428
    %v436 = vadd.f32 %v413, %v428
    %v437 = vadd.f32 %v414, %v428
    %v438 = vadd.f32 %v415, %v428
    %v439 = vadd.f32 %v416, %v428
    %v440 = vadd.f32 %v417, %v428
    %v441 = vadd.f32 %v418, %v428
    %v442 = vadd.f32 %v419, %v428
    %v443 = vadd.f32 %v420, %v428
    %v444 = vadd.f32 %v421, %v428
    %v445 = vadd.f32 %v422, %v428
    %vm446 = vcmp.ge.f32.partialorder %v430, 0.0
    %vm447 = vcmp.ge.f32.partialorder %v431, 0.0
    %vm448 = vcmp.ge.f32.partialorder %v432, 0.0
    %vm449 = vcmp.ge.f32.partialorder %v433, 0.0
    %vm450 = vcmp.ge.f32.partialorder %v434, 0.0
    %vm451 = vcmp.ge.f32.partialorder %v435, 0.0
    %vm452 = vcmp.ge.f32.partialorder %v436, 0.0
    %vm453 = vcmp.ge.f32.partialorder %v437, 0.0
    %vm454 = vcmp.ge.f32.partialorder %v438, 0.0
    %vm455 = vcmp.ge.f32.partialorder %v439, 0.0
    %vm456 = vcmp.ge.f32.partialorder %v440, 0.0
    %vm457 = vcmp.ge.f32.partialorder %v441, 0.0
    %vm458 = vcmp.ge.f32.partialorder %v442, 0.0
    %vm459 = vcmp.ge.f32.partialorder %v443, 0.0
    %vm460 = vcmp.ge.f32.partialorder %v444, 0.0
    %vm461 = vcmp.ge.f32.partialorder %v445, 0.0
    %v462 = vmul.f32 %v430, 0.01
    %v463 = vmul.f32 %v431, 0.01
    %v464 = vmul.f32 %v432, 0.01
    %v465 = vmul.f32 %v433, 0.01
    %v466 = vmul.f32 %v434, 0.01
    %v467 = vmul.f32 %v435, 0.01
    %v468 = vmul.f32 %v436, 0.01
    %v469 = vmul.f32 %v437, 0.01
    %v470 = vmul.f32 %v438, 0.01
    %v471 = vmul.f32 %v439, 0.01
    %v472 = vmul.f32 %v440, 0.01
    %v473 = vmul.f32 %v441, 0.01
    %v474 = vmul.f32 %v442, 0.01
    %v475 = vmul.f32 %v443, 0.01
    %v476 = vmul.f32 %v444, 0.01
    %v477 = vmul.f32 %v445, 0.01
    %v478 = vsel %vm446, %v430, %v462
    %v479 = vsel %vm447, %v431, %v463
    %v480 = vsel %vm448, %v432, %v464
    %v481 = vsel %vm449, %v433, %v465
    %v482 = vsel %vm450, %v434, %v466
    %v483 = vsel %vm451, %v435, %v467
    %v484 = vsel %vm452, %v436, %v468
    %v485 = vsel %vm453, %v437, %v469
    %v486 = vsel %vm454, %v438, %v470
    %v487 = vsel %vm455, %v439, %v471
    %v488 = vsel %vm456, %v440, %v472
    %v489 = vsel %vm457, %v441, %v473
    %v490 = vsel %vm458, %v442, %v474
    %v491 = vsel %vm459, %v443, %v475
    %v492 = vsel %vm460, %v444, %v476
    %v493 = vsel %vm461, %v445, %v477
    %v494 = vpack.c.bf16 %v479, %v478
    %v495 = vpack.c.bf16 %v481, %v480
    %v496 = vpack.c.bf16 %v483, %v482
    %v497 = vpack.c.bf16 %v485, %v484
    %v498 = vpack.c.bf16 %v487, %v486
    %v499 = vpack.c.bf16 %v489, %v488
    %v500 = vpack.c.bf16 %v491, %v490
    %v501 = vpack.c.bf16 %v493, %v492
    %v510 = vunpack.c.l.b16 %v494
    %v511 = vunpack.c.h.b16 %v494
    %v512 = vunpack.c.l.b16 %v495
    %v513 = vunpack.c.h.b16 %v495
    %v514 = vunpack.c.l.b16 %v496
    %v515 = vunpack.c.h.b16 %v496
    %v516 = vunpack.c.l.b16 %v497
    %v517 = vunpack.c.h.b16 %v497
    %v518 = vunpack.c.l.b16 %v498
    %v519 = vunpack.c.h.b16 %v498
    %v520 = vunpack.c.l.b16 %v499
    %v521 = vunpack.c.h.b16 %v499
    %v522 = vunpack.c.l.b16 %v500
    %v523 = vunpack.c.h.b16 %v500
    %v524 = vunpack.c.l.b16 %v501
    %v525 = vunpack.c.h.b16 %v501
    %v526 = vpack.c.b16 %v510, %v510
    %v527 = vpack.c.b16 %v511, %v511
    %v528 = vpack.c.b16 %v512, %v512
    %v529 = vpack.c.b16 %v513, %v513
    %v530 = vpack.c.b16 %v514, %v514
    %v531 = vpack.c.b16 %v515, %v515
    %v532 = vpack.c.b16 %v516, %v516
    %v533 = vpack.c.b16 %v517, %v517
    %v534 = vpack.c.b16 %v518, %v518
    %v535 = vpack.c.b16 %v519, %v519
    %v536 = vpack.c.b16 %v520, %v520
    %v537 = vpack.c.b16 %v521, %v521
    %v538 = vpack.c.b16 %v522, %v522
    %v539 = vpack.c.b16 %v523, %v523
    %v540 = vpack.c.b16 %v524, %v524
    %v541 = vpack.c.b16 %v525, %v525
    %558 = vst [vmem:[%s3] sm:$0xf] %v526
    %559 = vst [vmem:[%s3 + $0x4] sm:$0xf] %v527
    %560 = vst [vmem:[%s3 + $0x8] sm:$0xf] %v528
    %561 = vst [vmem:[%s3 + $0xc] sm:$0xf] %v529
    %562 = vst [vmem:[%s3 + $0x10] sm:$0xf] %v530
    %563 = vst [vmem:[%s3 + $0x14] sm:$0xf] %v531
    %564 = vst [vmem:[%s3 + $0x18] sm:$0xf] %v532
    %565 = vst [vmem:[%s3 + $0x1c] sm:$0xf] %v533
    %566 = vst [vmem:[%s3 + $0x20] sm:$0xf] %v534
    %567 = vst [vmem:[%s3 + $0x24] sm:$0xf] %v535
    %568 = vst [vmem:[%s3 + $0x28] sm:$0xf] %v536
    %569 = vst [vmem:[%s3 + $0x2c] sm:$0xf] %v537
    %570 = vst [vmem:[%s3 + $0x30] sm:$0xf] %v538
    %571 = vst [vmem:[%s3 + $0x34] sm:$0xf] %v539
    %572 = vst [vmem:[%s3 + $0x38] sm:$0xf] %v540
    %573 = vst [vmem:[%s3 + $0x3c] sm:$0xf] %v541
  $region21: #{netD_3d_forward.6} parent=0 // pred_fallthru
    _
  // Predicated region
  $region22: #{netD_3d_forward.6} parent=0 // pred_check
    _
  $region23: #{netD_3d_forward.6} parent=0 // pred_check_branch
    %575 = sbr.rel (0) target = $region25
  $region24: #{netD_3d_forward.6} parent=0 // pred_region
    _
  $region25: #{netD_3d_forward.6} parent=0 // pred_fallthru
    _
  // Predicated region
  $region26: #{netD_3d_forward.6} parent=0 // pred_check
    _
  $region27: #{netD_3d_forward.6} parent=0 // pred_check_branch
    %577 = sbr.rel (0) target = $region29
  $region28: #{netD_3d_forward.6} parent=0 // pred_region
    _
  $region29: #{netD_3d_forward.6} parent=0 // pred_fallthru
    _

// kernel: netD_3d_forward.7
$region0: #{netD_3d_forward.7}
  #allocation0 [shape = 'u32[]', space=smem, size = 0x4, offset = 0x4, fixed_abs, tag = 'smem constant byte address 0x4 - core index']
  #allocation1 [shape = 'u32[144,128]{1,0:T(1,128)}', space=vmem, size = 0x12000, scoped, tag = 'internal scratch']
  #allocation2 [shape = 'f32[16,128]{1,0:T(8,128)}', space=vmem, size = 0x2000, scoped, tag = 'scratch operand']
  %s0 = inlined_call_operand.vmem [shape: bf16[16,512], index: 0, kind: input, shape index: {}]
  %s1 = inlined_call_operand.vmem [shape: bf16[512,128], index: 1, kind: input, shape index: {}]
  %s2 = inlined_call_operand.vmem [shape: f32[1,128], index: 2, kind: input, shape index: {}]
  %s3 = inlined_call_operand.vmem [shape: bf16[16,128], index: 3, kind: output, shape index: {}]
  %s4 = sld [smem:[#allocation0]]
  $region30: #{netD_3d_forward.7} parent=0
    _
  %s6 = ssub.s32 1, %s4
  %s7 = scalar_select 0, %s6, %s4
  // Predicated region
  $region2: #{netD_3d_forward.7} parent=0 // pred_check
    _
  $region3: #{netD_3d_forward.7} parent=0 // pred_check_branch
    %9 = sbr.rel (0) target = $region5
  $region4: #{netD_3d_forward.7} parent=0 // pred_region
    _
  $region5: #{netD_3d_forward.7} parent=0 // pred_fallthru
    _
  // Predicated region
  $region6: #{netD_3d_forward.7} parent=0 // pred_check
    _
  $region7: #{netD_3d_forward.7} parent=0 // pred_check_branch
    %11 = sbr.rel (0) target = $region9
  $region8: #{netD_3d_forward.7} parent=0 // pred_region
    _
  $region9: #{netD_3d_forward.7} parent=0 // pred_fallthru
    _
  // Predicated region
  $region10: #{netD_3d_forward.7} parent=0 // pred_check
    _
  $region11: #{netD_3d_forward.7} parent=0 // pred_check_branch
    %13 = sbr.rel (0) target = $region13
  $region12: #{netD_3d_forward.7} parent=0 // pred_region
    _
  $region13: #{netD_3d_forward.7} parent=0 // pred_fallthru
    _
  %p15 = scmp.eq.s32.totalorder 0, 0
  // Predicated region
  $region14: #{netD_3d_forward.7} parent=0 // pred_check
    %p16 = pneg %p15
  $region15: #{netD_3d_forward.7} parent=0 // pred_check_branch
    %18 = sbr.rel (%p16) target = $region17
  $region16: #{netD_3d_forward.7} parent=0 // pred_region
    %19 = vst [vmem:[#allocation2] sm:$0xff] 0.0
    %20 = vst [vmem:[#allocation2 + $0x8] sm:$0xff] 0.0
  $region17: #{netD_3d_forward.7} parent=0 // pred_fallthru
    _
  %v21 = vld [vmem:[#allocation2] sm:$0xff]
  %v22 = vld [vmem:[#allocation2 + $0x8] sm:$0xff]
  %v23 = vld [vmem:[%s0] sm:$0xff]
  %v24 = vld [vmem:[%s0 + $0x8] sm:$0xff]
  %v25 = vld [vmem:[%s0 + $0x10] sm:$0xff]
  %v26 = vld [vmem:[%s0 + $0x18] sm:$0xff]
  %v27 = vld [vmem:[%s1] sm:$0xf]
  %v28 = vld [vmem:[%s1 + $0x4] sm:$0xf]
  %v29 = vld [vmem:[%s1 + $0x8] sm:$0xf]
  %v30 = vld [vmem:[%s1 + $0xc] sm:$0xf]
  %v31 = vld [vmem:[%s1 + $0x10] sm:$0xf]
  %v32 = vld [vmem:[%s1 + $0x14] sm:$0xf]
  %v33 = vld [vmem:[%s1 + $0x18] sm:$0xf]
  %v34 = vld [vmem:[%s1 + $0x1c] sm:$0xf]
  %v35 = vld [vmem:[%s1 + $0x20] sm:$0xf]
  %v36 = vld [vmem:[%s1 + $0x24] sm:$0xf]
  %v37 = vld [vmem:[%s1 + $0x28] sm:$0xf]
  %v38 = vld [vmem:[%s1 + $0x2c] sm:$0xf]
  %v39 = vld [vmem:[%s1 + $0x30] sm:$0xf]
  %v40 = vld [vmem:[%s1 + $0x34] sm:$0xf]
  %v41 = vld [vmem:[%s1 + $0x38] sm:$0xf]
  %v42 = vld [vmem:[%s1 + $0x3c] sm:$0xf]
  %v43 = vld [vmem:[%s1 + $0x40] sm:$0xf]
  %v44 = vld [vmem:[%s1 + $0x44] sm:$0xf]
  %v45 = vld [vmem:[%s1 + $0x48] sm:$0xf]
  %v46 = vld [vmem:[%s1 + $0x4c] sm:$0xf]
  %v47 = vld [vmem:[%s1 + $0x50] sm:$0xf]
  %v48 = vld [vmem:[%s1 + $0x54] sm:$0xf]
  %v49 = vld [vmem:[%s1 + $0x58] sm:$0xf]
  %v50 = vld [vmem:[%s1 + $0x5c] sm:$0xf]
  %v51 = vld [vmem:[%s1 + $0x60] sm:$0xf]
  %v52 = vld [vmem:[%s1 + $0x64] sm:$0xf]
  %v53 = vld [vmem:[%s1 + $0x68] sm:$0xf]
  %v54 = vld [vmem:[%s1 + $0x6c] sm:$0xf]
  %v55 = vld [vmem:[%s1 + $0x70] sm:$0xf]
  %v56 = vld [vmem:[%s1 + $0x74] sm:$0xf]
  %v57 = vld [vmem:[%s1 + $0x78] sm:$0xf]
  %v58 = vld [vmem:[%s1 + $0x7c] sm:$0xf]
  %v59 = vld [vmem:[%s1 + $0x80] sm:$0xf]
  %v60 = vld [vmem:[%s1 + $0x84] sm:$0xf]
  %v61 = vld [vmem:[%s1 + $0x88] sm:$0xf]
  %v62 = vld [vmem:[%s1 + $0x8c] sm:$0xf]
  %v63 = vld [vmem:[%s1 + $0x90] sm:$0xf]
  %v64 = vld [vmem:[%s1 + $0x94] sm:$0xf]
  %v65 = vld [vmem:[%s1 + $0x98] sm:$0xf]
  %v66 = vld [vmem:[%s1 + $0x9c] sm:$0xf]
  %v67 = vld [vmem:[%s1 + $0xa0] sm:$0xf]
  %v68 = vld [vmem:[%s1 + $0xa4] sm:$0xf]
  %v69 = vld [vmem:[%s1 + $0xa8] sm:$0xf]
  %v70 = vld [vmem:[%s1 + $0xac] sm:$0xf]
  %v71 = vld [vmem:[%s1 + $0xb0] sm:$0xf]
  %v72 = vld [vmem:[%s1 + $0xb4] sm:$0xf]
  %v73 = vld [vmem:[%s1 + $0xb8] sm:$0xf]
  %v74 = vld [vmem:[%s1 + $0xbc] sm:$0xf]
  %v75 = vld [vmem:[%s1 + $0xc0] sm:$0xf]
  %v76 = vld [vmem:[%s1 + $0xc4] sm:$0xf]
  %v77 = vld [vmem:[%s1 + $0xc8] sm:$0xf]
  %v78 = vld [vmem:[%s1 + $0xcc] sm:$0xf]
  %v79 = vld [vmem:[%s1 + $0xd0] sm:$0xf]
  %v80 = vld [vmem:[%s1 + $0xd4] sm:$0xf]
  %v81 = vld [vmem:[%s1 + $0xd8] sm:$0xf]
  %v82 = vld [vmem:[%s1 + $0xdc] sm:$0xf]
  %v83 = vld [vmem:[%s1 + $0xe0] sm:$0xf]
  %v84 = vld [vmem:[%s1 + $0xe4] sm:$0xf]
  %v85 = vld [vmem:[%s1 + $0xe8] sm:$0xf]
  %v86 = vld [vmem:[%s1 + $0xec] sm:$0xf]
  %v87 = vld [vmem:[%s1 + $0xf0] sm:$0xf]
  %v88 = vld [vmem:[%s1 + $0xf4] sm:$0xf]
  %v89 = vld [vmem:[%s1 + $0xf8] sm:$0xf]
  %v90 = vld [vmem:[%s1 + $0xfc] sm:$0xf]
  %v95 = vunpack.c.l.b16 %v23
  %v96 = vunpack.c.h.b16 %v23
  %v97 = vunpack.c.l.b16 %v24
  %v98 = vunpack.c.h.b16 %v24
  %v99 = vunpack.c.l.b16 %v25
  %v100 = vunpack.c.h.b16 %v25
  %v101 = vunpack.c.l.b16 %v26
  %v102 = vunpack.c.h.b16 %v26
  %v103 = vpack.c.b16 %v99, %v95
  %v104 = vpack.c.b16 %v100, %v96
  %v105 = vpack.c.b16 %v101, %v97
  %v106 = vpack.c.b16 %v102, %v98
  %v175 = vunpack.c.l.b16 %v27
  %v176 = vunpack.c.l.b16 %v28
  %v177 = vunpack.c.l.b16 %v29
  %v178 = vunpack.c.l.b16 %v30
  %v179 = vunpack.c.l.b16 %v31
  %v180 = vunpack.c.l.b16 %v32
  %v181 = vunpack.c.l.b16 %v33
  %v182 = vunpack.c.l.b16 %v34
  %v183 = vunpack.c.l.b16 %v35
  %v184 = vunpack.c.l.b16 %v36
  %v185 = vunpack.c.l.b16 %v37
  %v186 = vunpack.c.l.b16 %v38
  %v187 = vunpack.c.l.b16 %v39
  %v188 = vunpack.c.l.b16 %v40
  %v189 = vunpack.c.l.b16 %v41
  %v190 = vunpack.c.l.b16 %v42
  %v191 = vunpack.c.l.b16 %v43
  %v192 = vunpack.c.l.b16 %v44
  %v193 = vunpack.c.l.b16 %v45
  %v194 = vunpack.c.l.b16 %v46
  %v195 = vunpack.c.l.b16 %v47
  %v196 = vunpack.c.l.b16 %v48
  %v197 = vunpack.c.l.b16 %v49
  %v198 = vunpack.c.l.b16 %v50
  %v199 = vunpack.c.l.b16 %v51
  %v200 = vunpack.c.l.b16 %v52
  %v201 = vunpack.c.l.b16 %v53
  %v202 = vunpack.c.l.b16 %v54
  %v203 = vunpack.c.l.b16 %v55
  %v204 = vunpack.c.l.b16 %v56
  %v205 = vunpack.c.l.b16 %v57
  %v206 = vunpack.c.l.b16 %v58
  %v207 = vunpack.c.l.b16 %v59
  %v208 = vunpack.c.l.b16 %v60
  %v209 = vunpack.c.l.b16 %v61
  %v210 = vunpack.c.l.b16 %v62
  %v211 = vunpack.c.l.b16 %v63
  %v212 = vunpack.c.l.b16 %v64
  %v213 = vunpack.c.l.b16 %v65
  %v214 = vunpack.c.l.b16 %v66
  %v215 = vunpack.c.l.b16 %v67
  %v216 = vunpack.c.l.b16 %v68
  %v217 = vunpack.c.l.b16 %v69
  %v218 = vunpack.c.l.b16 %v70
  %v219 = vunpack.c.l.b16 %v71
  %v220 = vunpack.c.l.b16 %v72
  %v221 = vunpack.c.l.b16 %v73
  %v222 = vunpack.c.l.b16 %v74
  %v223 = vunpack.c.l.b16 %v75
  %v224 = vunpack.c.l.b16 %v76
  %v225 = vunpack.c.l.b16 %v77
  %v226 = vunpack.c.l.b16 %v78
  %v227 = vunpack.c.l.b16 %v79
  %v228 = vunpack.c.l.b16 %v80
  %v229 = vunpack.c.l.b16 %v81
  %v230 = vunpack.c.l.b16 %v82
  %v231 = vunpack.c.l.b16 %v83
  %v232 = vunpack.c.l.b16 %v84
  %v233 = vunpack.c.l.b16 %v85
  %v234 = vunpack.c.l.b16 %v86
  %v235 = vunpack.c.l.b16 %v87
  %v236 = vunpack.c.l.b16 %v88
  %v237 = vunpack.c.l.b16 %v89
  %v238 = vunpack.c.l.b16 %v90
  %v239 = vpack.c.b16 %v176, %v175
  %v240 = vpack.c.b16 %v178, %v177
  %v241 = vpack.c.b16 %v180, %v179
  %v242 = vpack.c.b16 %v182, %v181
  %v243 = vpack.c.b16 %v184, %v183
  %v244 = vpack.c.b16 %v186, %v185
  %v245 = vpack.c.b16 %v188, %v187
  %v246 = vpack.c.b16 %v190, %v189
  %v247 = vpack.c.b16 %v192, %v191
  %v248 = vpack.c.b16 %v194, %v193
  %v249 = vpack.c.b16 %v196, %v195
  %v250 = vpack.c.b16 %v198, %v197
  %v251 = vpack.c.b16 %v200, %v199
  %v252 = vpack.c.b16 %v202, %v201
  %v253 = vpack.c.b16 %v204, %v203
  %v254 = vpack.c.b16 %v206, %v205
  %v255 = vpack.c.b16 %v208, %v207
  %v256 = vpack.c.b16 %v210, %v209
  %v257 = vpack.c.b16 %v212, %v211
  %v258 = vpack.c.b16 %v214, %v213
  %v259 = vpack.c.b16 %v216, %v215
  %v260 = vpack.c.b16 %v218, %v217
  %v261 = vpack.c.b16 %v220, %v219
  %v262 = vpack.c.b16 %v222, %v221
  %v263 = vpack.c.b16 %v224, %v223
  %v264 = vpack.c.b16 %v226, %v225
  %v265 = vpack.c.b16 %v228, %v227
  %v266 = vpack.c.b16 %v230, %v229
  %v267 = vpack.c.b16 %v232, %v231
  %v268 = vpack.c.b16 %v234, %v233
  %v269 = vpack.c.b16 %v236, %v235
  %v270 = vpack.c.b16 %v238, %v237
  %303 = vmatprep.subr.bf16.mxu0 0
  %304 = vmatpush1.bf16.msra.mxu0 %v239
  %305 = vmatprep.subr.bf16.mxu0 0
  %306 = vmatpush1.bf16.msra.mxu0 %v240
  %307 = vmatprep.subr.bf16.mxu0 0
  %308 = vmatpush1.bf16.msra.mxu0 %v241
  %309 = vmatprep.subr.bf16.mxu0 0
  %310 = vmatpush1.bf16.msra.mxu0 %v242
  %311 = vmatprep.subr.bf16.mxu0 0
  %312 = vmatpush1.bf16.msra.mxu0 %v243
  %313 = vmatprep.subr.bf16.mxu0 0
  %314 = vmatpush1.bf16.msra.mxu0 %v244
  %315 = vmatprep.subr.bf16.mxu0 0
  %316 = vmatpush1.bf16.msra.mxu0 %v245
  %317 = vmatprep.subr.bf16.mxu0 0
  %318 = vmatpush1.bf16.msra.mxu0 %v246
  %319 = vmatprep.subr.bf16.mxu0 0
  %320 = vmatpush1.bf16.msra.mxu0 %v247
  %321 = vmatprep.subr.bf16.mxu0 0
  %322 = vmatpush1.bf16.msra.mxu0 %v248
  %323 = vmatprep.subr.bf16.mxu0 0
  %324 = vmatpush1.bf16.msra.mxu0 %v249
  %325 = vmatprep.subr.bf16.mxu0 0
  %326 = vmatpush1.bf16.msra.mxu0 %v250
  %327 = vmatprep.subr.bf16.mxu0 0
  %328 = vmatpush1.bf16.msra.mxu0 %v251
  %329 = vmatprep.subr.bf16.mxu0 0
  %330 = vmatpush1.bf16.msra.mxu0 %v252
  %331 = vmatprep.subr.bf16.mxu0 0
  %332 = vmatpush1.bf16.msra.mxu0 %v253
  %333 = vmatprep.subr.bf16.mxu0 0
  %334 = vmatpush1.bf16.msra.mxu0 %v254
  %335 = vmatprep.mubr.bf16.mxu0 %v104
  %336 = vmatmul.mubr.bf16.gmra.mrb[0].mxu0 %v103
  %v337 = vpop.f32.mrb[0].mxu0
  %v338 = vadd.f32 0.0, %v337
  %v339 = vpop.f32.mrb[0].mxu0
  %v340 = vpop.f32.mrb[0].mxu0
  %v341 = vadd.f32 0.0, %v340
  %v342 = vpop.f32.mrb[0].mxu0
  %343 = vdwg.mxu0
  %344 = vmatprep.subr.bf16.mxu0 0
  %345 = vmatpush1.bf16.msra.mxu0 %v255
  %346 = vmatprep.subr.bf16.mxu0 0
  %347 = vmatpush1.bf16.msra.mxu0 %v256
  %348 = vmatprep.subr.bf16.mxu0 0
  %349 = vmatpush1.bf16.msra.mxu0 %v257
  %350 = vmatprep.subr.bf16.mxu0 0
  %351 = vmatpush1.bf16.msra.mxu0 %v258
  %352 = vmatprep.subr.bf16.mxu0 0
  %353 = vmatpush1.bf16.msra.mxu0 %v259
  %354 = vmatprep.subr.bf16.mxu0 0
  %355 = vmatpush1.bf16.msra.mxu0 %v260
  %356 = vmatprep.subr.bf16.mxu0 0
  %357 = vmatpush1.bf16.msra.mxu0 %v261
  %358 = vmatprep.subr.bf16.mxu0 0
  %359 = vmatpush1.bf16.msra.mxu0 %v262
  %360 = vmatprep.subr.bf16.mxu0 0
  %361 = vmatpush1.bf16.msra.mxu0 %v263
  %362 = vmatprep.subr.bf16.mxu0 0
  %363 = vmatpush1.bf16.msra.mxu0 %v264
  %364 = vmatprep.subr.bf16.mxu0 0
  %365 = vmatpush1.bf16.msra.mxu0 %v265
  %366 = vmatprep.subr.bf16.mxu0 0
  %367 = vmatpush1.bf16.msra.mxu0 %v266
  %368 = vmatprep.subr.bf16.mxu0 0
  %369 = vmatpush1.bf16.msra.mxu0 %v267
  %370 = vmatprep.subr.bf16.mxu0 0
  %371 = vmatpush1.bf16.msra.mxu0 %v268
  %372 = vmatprep.subr.bf16.mxu0 0
  %373 = vmatpush1.bf16.msra.mxu0 %v269
  %374 = vmatprep.subr.bf16.mxu0 0
  %375 = vmatpush1.bf16.msra.mxu0 %v270
  %376 = vmatprep.mubr.bf16.mxu0 %v106
  %377 = vmatmul.mubr.bf16.gmra.mrb[0].mxu0 %v105
  %v378 = vpop.f32.mrb[0].mxu0
  %v379 = vadd.f32 %v338, %v378
  %v380 = vpop.f32.mrb[0].mxu0
  %v381 = vpop.f32.mrb[0].mxu0
  %v382 = vadd.f32 %v341, %v381
  %v383 = vpop.f32.mrb[0].mxu0
  %384 = vdwg.mxu0
  %v385 = vadd.f32 %v21, %v379
  %v386 = vadd.f32 %v22, %v382
  %387 = vst [vmem:[#allocation2] sm:$0xff] %v385
  %388 = vst [vmem:[#allocation2 + $0x8] sm:$0xff] %v386
  // Predicated region
  $region18: #{netD_3d_forward.7} parent=0 // pred_check
    %p389 = pneg %p15
  $region19: #{netD_3d_forward.7} parent=0 // pred_check_branch
    %391 = sbr.rel (%p389) target = $region21
  $region20: #{netD_3d_forward.7} parent=0 // pred_region
    %v392 = vld [vmem:[#allocation2] sm:$0xff]
    %v393 = vld [vmem:[#allocation2 + $0x8] sm:$0xff]
    %v394 = vld [vmem:[%s2] sm:$0x1]
    %v396 = vlaneseq
    %v397 = vshrl.u32 %v396, 7
    %v398 = vsub.s32 0, %v397
    %v399 = vrot.slane %v394, %v398
    %v401 = vadd.f32 %v392, %v399
    %v402 = vadd.f32 %v393, %v399
    %vm403 = vcmp.ge.f32.partialorder %v401, 0.0
    %vm404 = vcmp.ge.f32.partialorder %v402, 0.0
    %v405 = vmul.f32 %v401, 0.01
    %v406 = vmul.f32 %v402, 0.01
    %v407 = vsel %vm403, %v401, %v405
    %v408 = vsel %vm404, %v402, %v406
    %v409 = vpack.c.bf16 %v408, %v407
    %v411 = vunpack.c.l.b16 %v409
    %v412 = vunpack.c.h.b16 %v409
    %v413 = vpack.c.b16 %v411, %v411
    %v414 = vpack.c.b16 %v412, %v412
    %417 = vst [vmem:[%s3] sm:$0xf] %v413
    %418 = vst [vmem:[%s3 + $0x4] sm:$0xf] %v414
  $region21: #{netD_3d_forward.7} parent=0 // pred_fallthru
    _
  // Predicated region
  $region22: #{netD_3d_forward.7} parent=0 // pred_check
    _
  $region23: #{netD_3d_forward.7} parent=0 // pred_check_branch
    %420 = sbr.rel (0) target = $region25
  $region24: #{netD_3d_forward.7} parent=0 // pred_region
    _
  $region25: #{netD_3d_forward.7} parent=0 // pred_fallthru
    _
  // Predicated region
  $region26: #{netD_3d_forward.7} parent=0 // pred_check
    _
  $region27: #{netD_3d_forward.7} parent=0 // pred_check_branch
    %422 = sbr.rel (0) target = $region29
  $region28: #{netD_3d_forward.7} parent=0 // pred_region
    _
  $region29: #{netD_3d_forward.7} parent=0 // pred_fallthru
    _

// kernel: netD_3d_forward.8
$region0: #{netD_3d_forward.8}
  #allocation0 [shape = 'u32[]', space=smem, size = 0x4, offset = 0x4, fixed_abs, tag = 'smem constant byte address 0x4 - core index']
  #allocation1 [shape = 'u32[144,128]{1,0:T(1,128)}', space=vmem, size = 0x12000, scoped, tag = 'internal scratch']
  #allocation2 [shape = 'f32[8,128]{1,0:T(8,128)}', space=vmem, size = 0x1000, scoped, tag = 'scratch operand']
  %s0 = inlined_call_operand.vmem [shape: bf16[8,1024], index: 0, kind: input, shape index: {}]
  %s1 = inlined_call_operand.vmem [shape: bf16[1024,128], index: 1, kind: input, shape index: {}]
  %s2 = inlined_call_operand.vmem [shape: f32[1,128], index: 2, kind: input, shape index: {}]
  %s3 = inlined_call_operand.vmem [shape: bf16[8,128], index: 3, kind: output, shape index: {}]
  %s4 = sld [smem:[#allocation0]]
  $region30: #{netD_3d_forward.8} parent=0
    _
  %s6 = ssub.s32 1, %s4
  %s7 = scalar_select 0, %s6, %s4
  // Predicated region
  $region2: #{netD_3d_forward.8} parent=0 // pred_check
    _
  $region3: #{netD_3d_forward.8} parent=0 // pred_check_branch
    %9 = sbr.rel (0) target = $region5
  $region4: #{netD_3d_forward.8} parent=0 // pred_region
    _
  $region5: #{netD_3d_forward.8} parent=0 // pred_fallthru
    _
  // Predicated region
  $region6: #{netD_3d_forward.8} parent=0 // pred_check
    _
  $region7: #{netD_3d_forward.8} parent=0 // pred_check_branch
    %11 = sbr.rel (0) target = $region9
  $region8: #{netD_3d_forward.8} parent=0 // pred_region
    _
  $region9: #{netD_3d_forward.8} parent=0 // pred_fallthru
    _
  // Predicated region
  $region10: #{netD_3d_forward.8} parent=0 // pred_check
    _
  $region11: #{netD_3d_forward.8} parent=0 // pred_check_branch
    %13 = sbr.rel (0) target = $region13
  $region12: #{netD_3d_forward.8} parent=0 // pred_region
    _
  $region13: #{netD_3d_forward.8} parent=0 // pred_fallthru
    _
  %p15 = scmp.eq.s32.totalorder 0, 0
  // Predicated region
  $region14: #{netD_3d_forward.8} parent=0 // pred_check
    %p16 = pneg %p15
  $region15: #{netD_3d_forward.8} parent=0 // pred_check_branch
    %18 = sbr.rel (%p16) target = $region17
  $region16: #{netD_3d_forward.8} parent=0 // pred_region
    %19 = vst [vmem:[#allocation2] sm:$0xff] 0.0
  $region17: #{netD_3d_forward.8} parent=0 // pred_fallthru
    _
  %v20 = vld [vmem:[#allocation2] sm:$0xff]
  %v21 = vld [vmem:[%s0] sm:$0xff]
  %v22 = vld [vmem:[%s0 + $0x8] sm:$0xff]
  %v23 = vld [vmem:[%s0 + $0x10] sm:$0xff]
  %v24 = vld [vmem:[%s0 + $0x18] sm:$0xff]
  %v25 = vld [vmem:[%s1] sm:$0xf]
  %v26 = vld [vmem:[%s1 + $0x4] sm:$0xf]
  %v27 = vld [vmem:[%s1 + $0x8] sm:$0xf]
  %v28 = vld [vmem:[%s1 + $0xc] sm:$0xf]
  %v29 = vld [vmem:[%s1 + $0x10] sm:$0xf]
  %v30 = vld [vmem:[%s1 + $0x14] sm:$0xf]
  %v31 = vld [vmem:[%s1 + $0x18] sm:$0xf]
  %v32 = vld [vmem:[%s1 + $0x1c] sm:$0xf]
  %v33 = vld [vmem:[%s1 + $0x20] sm:$0xf]
  %v34 = vld [vmem:[%s1 + $0x24] sm:$0xf]
  %v35 = vld [vmem:[%s1 + $0x28] sm:$0xf]
  %v36 = vld [vmem:[%s1 + $0x2c] sm:$0xf]
  %v37 = vld [vmem:[%s1 + $0x30] sm:$0xf]
  %v38 = vld [vmem:[%s1 + $0x34] sm:$0xf]
  %v39 = vld [vmem:[%s1 + $0x38] sm:$0xf]
  %v40 = vld [vmem:[%s1 + $0x3c] sm:$0xf]
  %v41 = vld [vmem:[%s1 + $0x40] sm:$0xf]
  %v42 = vld [vmem:[%s1 + $0x44] sm:$0xf]
  %v43 = vld [vmem:[%s1 + $0x48] sm:$0xf]
  %v44 = vld [vmem:[%s1 + $0x4c] sm:$0xf]
  %v45 = vld [vmem:[%s1 + $0x50] sm:$0xf]
  %v46 = vld [vmem:[%s1 + $0x54] sm:$0xf]
  %v47 = vld [vmem:[%s1 + $0x58] sm:$0xf]
  %v48 = vld [vmem:[%s1 + $0x5c] sm:$0xf]
  %v49 = vld [vmem:[%s1 + $0x60] sm:$0xf]
  %v50 = vld [vmem:[%s1 + $0x64] sm:$0xf]
  %v51 = vld [vmem:[%s1 + $0x68] sm:$0xf]
  %v52 = vld [vmem:[%s1 + $0x6c] sm:$0xf]
  %v53 = vld [vmem:[%s1 + $0x70] sm:$0xf]
  %v54 = vld [vmem:[%s1 + $0x74] sm:$0xf]
  %v55 = vld [vmem:[%s1 + $0x78] sm:$0xf]
  %v56 = vld [vmem:[%s1 + $0x7c] sm:$0xf]
  %v57 = vld [vmem:[%s1 + $0x80] sm:$0xf]
  %v58 = vld [vmem:[%s1 + $0x84] sm:$0xf]
  %v59 = vld [vmem:[%s1 + $0x88] sm:$0xf]
  %v60 = vld [vmem:[%s1 + $0x8c] sm:$0xf]
  %v61 = vld [vmem:[%s1 + $0x90] sm:$0xf]
  %v62 = vld [vmem:[%s1 + $0x94] sm:$0xf]
  %v63 = vld [vmem:[%s1 + $0x98] sm:$0xf]
  %v64 = vld [vmem:[%s1 + $0x9c] sm:$0xf]
  %v65 = vld [vmem:[%s1 + $0xa0] sm:$0xf]
  %v66 = vld [vmem:[%s1 + $0xa4] sm:$0xf]
  %v67 = vld [vmem:[%s1 + $0xa8] sm:$0xf]
  %v68 = vld [vmem:[%s1 + $0xac] sm:$0xf]
  %v69 = vld [vmem:[%s1 + $0xb0] sm:$0xf]
  %v70 = vld [vmem:[%s1 + $0xb4] sm:$0xf]
  %v71 = vld [vmem:[%s1 + $0xb8] sm:$0xf]
  %v72 = vld [vmem:[%s1 + $0xbc] sm:$0xf]
  %v73 = vld [vmem:[%s1 + $0xc0] sm:$0xf]
  %v74 = vld [vmem:[%s1 + $0xc4] sm:$0xf]
  %v75 = vld [vmem:[%s1 + $0xc8] sm:$0xf]
  %v76 = vld [vmem:[%s1 + $0xcc] sm:$0xf]
  %v77 = vld [vmem:[%s1 + $0xd0] sm:$0xf]
  %v78 = vld [vmem:[%s1 + $0xd4] sm:$0xf]
  %v79 = vld [vmem:[%s1 + $0xd8] sm:$0xf]
  %v80 = vld [vmem:[%s1 + $0xdc] sm:$0xf]
  %v81 = vld [vmem:[%s1 + $0xe0] sm:$0xf]
  %v82 = vld [vmem:[%s1 + $0xe4] sm:$0xf]
  %v83 = vld [vmem:[%s1 + $0xe8] sm:$0xf]
  %v84 = vld [vmem:[%s1 + $0xec] sm:$0xf]
  %v85 = vld [vmem:[%s1 + $0xf0] sm:$0xf]
  %v86 = vld [vmem:[%s1 + $0xf4] sm:$0xf]
  %v87 = vld [vmem:[%s1 + $0xf8] sm:$0xf]
  %v88 = vld [vmem:[%s1 + $0xfc] sm:$0xf]
  %v89 = vld [vmem:[%s1 + $0x100] sm:$0xf]
  %v90 = vld [vmem:[%s1 + $0x104] sm:$0xf]
  %v91 = vld [vmem:[%s1 + $0x108] sm:$0xf]
  %v92 = vld [vmem:[%s1 + $0x10c] sm:$0xf]
  %v93 = vld [vmem:[%s1 + $0x110] sm:$0xf]
  %v94 = vld [vmem:[%s1 + $0x114] sm:$0xf]
  %v95 = vld [vmem:[%s1 + $0x118] sm:$0xf]
  %v96 = vld [vmem:[%s1 + $0x11c] sm:$0xf]
  %v97 = vld [vmem:[%s1 + $0x120] sm:$0xf]
  %v98 = vld [vmem:[%s1 + $0x124] sm:$0xf]
  %v99 = vld [vmem:[%s1 + $0x128] sm:$0xf]
  %v100 = vld [vmem:[%s1 + $0x12c] sm:$0xf]
  %v101 = vld [vmem:[%s1 + $0x130] sm:$0xf]
  %v102 = vld [vmem:[%s1 + $0x134] sm:$0xf]
  %v103 = vld [vmem:[%s1 + $0x138] sm:$0xf]
  %v104 = vld [vmem:[%s1 + $0x13c] sm:$0xf]
  %v105 = vld [vmem:[%s1 + $0x140] sm:$0xf]
  %v106 = vld [vmem:[%s1 + $0x144] sm:$0xf]
  %v107 = vld [vmem:[%s1 + $0x148] sm:$0xf]
  %v108 = vld [vmem:[%s1 + $0x14c] sm:$0xf]
  %v109 = vld [vmem:[%s1 + $0x150] sm:$0xf]
  %v110 = vld [vmem:[%s1 + $0x154] sm:$0xf]
  %v111 = vld [vmem:[%s1 + $0x158] sm:$0xf]
  %v112 = vld [vmem:[%s1 + $0x15c] sm:$0xf]
  %v113 = vld [vmem:[%s1 + $0x160] sm:$0xf]
  %v114 = vld [vmem:[%s1 + $0x164] sm:$0xf]
  %v115 = vld [vmem:[%s1 + $0x168] sm:$0xf]
  %v116 = vld [vmem:[%s1 + $0x16c] sm:$0xf]
  %v117 = vld [vmem:[%s1 + $0x170] sm:$0xf]
  %v118 = vld [vmem:[%s1 + $0x174] sm:$0xf]
  %v119 = vld [vmem:[%s1 + $0x178] sm:$0xf]
  %v120 = vld [vmem:[%s1 + $0x17c] sm:$0xf]
  %v121 = vld [vmem:[%s1 + $0x180] sm:$0xf]
  %v122 = vld [vmem:[%s1 + $0x184] sm:$0xf]
  %v123 = vld [vmem:[%s1 + $0x188] sm:$0xf]
  %v124 = vld [vmem:[%s1 + $0x18c] sm:$0xf]
  %v125 = vld [vmem:[%s1 + $0x190] sm:$0xf]
  %v126 = vld [vmem:[%s1 + $0x194] sm:$0xf]
  %v127 = vld [vmem:[%s1 + $0x198] sm:$0xf]
  %v128 = vld [vmem:[%s1 + $0x19c] sm:$0xf]
  %v129 = vld [vmem:[%s1 + $0x1a0] sm:$0xf]
  %v130 = vld [vmem:[%s1 + $0x1a4] sm:$0xf]
  %v131 = vld [vmem:[%s1 + $0x1a8] sm:$0xf]
  %v132 = vld [vmem:[%s1 + $0x1ac] sm:$0xf]
  %v133 = vld [vmem:[%s1 + $0x1b0] sm:$0xf]
  %v134 = vld [vmem:[%s1 + $0x1b4] sm:$0xf]
  %v135 = vld [vmem:[%s1 + $0x1b8] sm:$0xf]
  %v136 = vld [vmem:[%s1 + $0x1bc] sm:$0xf]
  %v137 = vld [vmem:[%s1 + $0x1c0] sm:$0xf]
  %v138 = vld [vmem:[%s1 + $0x1c4] sm:$0xf]
  %v139 = vld [vmem:[%s1 + $0x1c8] sm:$0xf]
  %v140 = vld [vmem:[%s1 + $0x1cc] sm:$0xf]
  %v141 = vld [vmem:[%s1 + $0x1d0] sm:$0xf]
  %v142 = vld [vmem:[%s1 + $0x1d4] sm:$0xf]
  %v143 = vld [vmem:[%s1 + $0x1d8] sm:$0xf]
  %v144 = vld [vmem:[%s1 + $0x1dc] sm:$0xf]
  %v145 = vld [vmem:[%s1 + $0x1e0] sm:$0xf]
  %v146 = vld [vmem:[%s1 + $0x1e4] sm:$0xf]
  %v147 = vld [vmem:[%s1 + $0x1e8] sm:$0xf]
  %v148 = vld [vmem:[%s1 + $0x1ec] sm:$0xf]
  %v149 = vld [vmem:[%s1 + $0x1f0] sm:$0xf]
  %v150 = vld [vmem:[%s1 + $0x1f4] sm:$0xf]
  %v151 = vld [vmem:[%s1 + $0x1f8] sm:$0xf]
  %v152 = vld [vmem:[%s1 + $0x1fc] sm:$0xf]
  %v157 = vunpack.c.l.b16 %v21
  %v158 = vunpack.c.h.b16 %v21
  %v159 = vunpack.c.l.b16 %v22
  %v160 = vunpack.c.h.b16 %v22
  %v161 = vunpack.c.l.b16 %v23
  %v162 = vunpack.c.h.b16 %v23
  %v163 = vunpack.c.l.b16 %v24
  %v164 = vunpack.c.h.b16 %v24
  %v165 = vpack.c.b16 %v157, %v157
  %v166 = vpack.c.b16 %v158, %v158
  %v167 = vpack.c.b16 %v159, %v159
  %v168 = vpack.c.b16 %v160, %v160
  %v169 = vpack.c.b16 %v161, %v161
  %v170 = vpack.c.b16 %v162, %v162
  %v171 = vpack.c.b16 %v163, %v163
  %v172 = vpack.c.b16 %v164, %v164
  %v309 = vunpack.c.l.b16 %v25
  %v310 = vunpack.c.l.b16 %v26
  %v311 = vunpack.c.l.b16 %v27
  %v312 = vunpack.c.l.b16 %v28
  %v313 = vunpack.c.l.b16 %v29
  %v314 = vunpack.c.l.b16 %v30
  %v315 = vunpack.c.l.b16 %v31
  %v316 = vunpack.c.l.b16 %v32
  %v317 = vunpack.c.l.b16 %v33
  %v318 = vunpack.c.l.b16 %v34
  %v319 = vunpack.c.l.b16 %v35
  %v320 = vunpack.c.l.b16 %v36
  %v321 = vunpack.c.l.b16 %v37
  %v322 = vunpack.c.l.b16 %v38
  %v323 = vunpack.c.l.b16 %v39
  %v324 = vunpack.c.l.b16 %v40
  %v325 = vunpack.c.l.b16 %v41
  %v326 = vunpack.c.l.b16 %v42
  %v327 = vunpack.c.l.b16 %v43
  %v328 = vunpack.c.l.b16 %v44
  %v329 = vunpack.c.l.b16 %v45
  %v330 = vunpack.c.l.b16 %v46
  %v331 = vunpack.c.l.b16 %v47
  %v332 = vunpack.c.l.b16 %v48
  %v333 = vunpack.c.l.b16 %v49
  %v334 = vunpack.c.l.b16 %v50
  %v335 = vunpack.c.l.b16 %v51
  %v336 = vunpack.c.l.b16 %v52
  %v337 = vunpack.c.l.b16 %v53
  %v338 = vunpack.c.l.b16 %v54
  %v339 = vunpack.c.l.b16 %v55
  %v340 = vunpack.c.l.b16 %v56
  %v341 = vunpack.c.l.b16 %v57
  %v342 = vunpack.c.l.b16 %v58
  %v343 = vunpack.c.l.b16 %v59
  %v344 = vunpack.c.l.b16 %v60
  %v345 = vunpack.c.l.b16 %v61
  %v346 = vunpack.c.l.b16 %v62
  %v347 = vunpack.c.l.b16 %v63
  %v348 = vunpack.c.l.b16 %v64
  %v349 = vunpack.c.l.b16 %v65
  %v350 = vunpack.c.l.b16 %v66
  %v351 = vunpack.c.l.b16 %v67
  %v352 = vunpack.c.l.b16 %v68
  %v353 = vunpack.c.l.b16 %v69
  %v354 = vunpack.c.l.b16 %v70
  %v355 = vunpack.c.l.b16 %v71
  %v356 = vunpack.c.l.b16 %v72
  %v357 = vunpack.c.l.b16 %v73
  %v358 = vunpack.c.l.b16 %v74
  %v359 = vunpack.c.l.b16 %v75
  %v360 = vunpack.c.l.b16 %v76
  %v361 = vunpack.c.l.b16 %v77
  %v362 = vunpack.c.l.b16 %v78
  %v363 = vunpack.c.l.b16 %v79
  %v364 = vunpack.c.l.b16 %v80
  %v365 = vunpack.c.l.b16 %v81
  %v366 = vunpack.c.l.b16 %v82
  %v367 = vunpack.c.l.b16 %v83
  %v368 = vunpack.c.l.b16 %v84
  %v369 = vunpack.c.l.b16 %v85
  %v370 = vunpack.c.l.b16 %v86
  %v371 = vunpack.c.l.b16 %v87
  %v372 = vunpack.c.l.b16 %v88
  %v373 = vunpack.c.l.b16 %v89
  %v374 = vunpack.c.l.b16 %v90
  %v375 = vunpack.c.l.b16 %v91
  %v376 = vunpack.c.l.b16 %v92
  %v377 = vunpack.c.l.b16 %v93
  %v378 = vunpack.c.l.b16 %v94
  %v379 = vunpack.c.l.b16 %v95
  %v380 = vunpack.c.l.b16 %v96
  %v381 = vunpack.c.l.b16 %v97
  %v382 = vunpack.c.l.b16 %v98
  %v383 = vunpack.c.l.b16 %v99
  %v384 = vunpack.c.l.b16 %v100
  %v385 = vunpack.c.l.b16 %v101
  %v386 = vunpack.c.l.b16 %v102
  %v387 = vunpack.c.l.b16 %v103
  %v388 = vunpack.c.l.b16 %v104
  %v389 = vunpack.c.l.b16 %v105
  %v390 = vunpack.c.l.b16 %v106
  %v391 = vunpack.c.l.b16 %v107
  %v392 = vunpack.c.l.b16 %v108
  %v393 = vunpack.c.l.b16 %v109
  %v394 = vunpack.c.l.b16 %v110
  %v395 = vunpack.c.l.b16 %v111
  %v396 = vunpack.c.l.b16 %v112
  %v397 = vunpack.c.l.b16 %v113
  %v398 = vunpack.c.l.b16 %v114
  %v399 = vunpack.c.l.b16 %v115
  %v400 = vunpack.c.l.b16 %v116
  %v401 = vunpack.c.l.b16 %v117
  %v402 = vunpack.c.l.b16 %v118
  %v403 = vunpack.c.l.b16 %v119
  %v404 = vunpack.c.l.b16 %v120
  %v405 = vunpack.c.l.b16 %v121
  %v406 = vunpack.c.l.b16 %v122
  %v407 = vunpack.c.l.b16 %v123
  %v408 = vunpack.c.l.b16 %v124
  %v409 = vunpack.c.l.b16 %v125
  %v410 = vunpack.c.l.b16 %v126
  %v411 = vunpack.c.l.b16 %v127
  %v412 = vunpack.c.l.b16 %v128
  %v413 = vunpack.c.l.b16 %v129
  %v414 = vunpack.c.l.b16 %v130
  %v415 = vunpack.c.l.b16 %v131
  %v416 = vunpack.c.l.b16 %v132
  %v417 = vunpack.c.l.b16 %v133
  %v418 = vunpack.c.l.b16 %v134
  %v419 = vunpack.c.l.b16 %v135
  %v420 = vunpack.c.l.b16 %v136
  %v421 = vunpack.c.l.b16 %v137
  %v422 = vunpack.c.l.b16 %v138
  %v423 = vunpack.c.l.b16 %v139
  %v424 = vunpack.c.l.b16 %v140
  %v425 = vunpack.c.l.b16 %v141
  %v426 = vunpack.c.l.b16 %v142
  %v427 = vunpack.c.l.b16 %v143
  %v428 = vunpack.c.l.b16 %v144
  %v429 = vunpack.c.l.b16 %v145
  %v430 = vunpack.c.l.b16 %v146
  %v431 = vunpack.c.l.b16 %v147
  %v432 = vunpack.c.l.b16 %v148
  %v433 = vunpack.c.l.b16 %v149
  %v434 = vunpack.c.l.b16 %v150
  %v435 = vunpack.c.l.b16 %v151
  %v436 = vunpack.c.l.b16 %v152
  %v437 = vpack.c.b16 %v310, %v309
  %v438 = vpack.c.b16 %v312, %v311
  %v439 = vpack.c.b16 %v314, %v313
  %v440 = vpack.c.b16 %v316, %v315
  %v441 = vpack.c.b16 %v318, %v317
  %v442 = vpack.c.b16 %v320, %v319
  %v443 = vpack.c.b16 %v322, %v321
  %v444 = vpack.c.b16 %v324, %v323
  %v445 = vpack.c.b16 %v326, %v325
  %v446 = vpack.c.b16 %v328, %v327
  %v447 = vpack.c.b16 %v330, %v329
  %v448 = vpack.c.b16 %v332, %v331
  %v449 = vpack.c.b16 %v334, %v333
  %v450 = vpack.c.b16 %v336, %v335
  %v451 = vpack.c.b16 %v338, %v337
  %v452 = vpack.c.b16 %v340, %v339
  %v453 = vpack.c.b16 %v342, %v341
  %v454 = vpack.c.b16 %v344, %v343
  %v455 = vpack.c.b16 %v346, %v345
  %v456 = vpack.c.b16 %v348, %v347
  %v457 = vpack.c.b16 %v350, %v349
  %v458 = vpack.c.b16 %v352, %v351
  %v459 = vpack.c.b16 %v354, %v353
  %v460 = vpack.c.b16 %v356, %v355
  %v461 = vpack.c.b16 %v358, %v357
  %v462 = vpack.c.b16 %v360, %v359
  %v463 = vpack.c.b16 %v362, %v361
  %v464 = vpack.c.b16 %v364, %v363
  %v465 = vpack.c.b16 %v366, %v365
  %v466 = vpack.c.b16 %v368, %v367
  %v467 = vpack.c.b16 %v370, %v369
  %v468 = vpack.c.b16 %v372, %v371
  %v469 = vpack.c.b16 %v374, %v373
  %v470 = vpack.c.b16 %v376, %v375
  %v471 = vpack.c.b16 %v378, %v377
  %v472 = vpack.c.b16 %v380, %v379
  %v473 = vpack.c.b16 %v382, %v381
  %v474 = vpack.c.b16 %v384, %v383
  %v475 = vpack.c.b16 %v386, %v385
  %v476 = vpack.c.b16 %v388, %v387
  %v477 = vpack.c.b16 %v390, %v389
  %v478 = vpack.c.b16 %v392, %v391
  %v479 = vpack.c.b16 %v394, %v393
  %v480 = vpack.c.b16 %v396, %v395
  %v481 = vpack.c.b16 %v398, %v397
  %v482 = vpack.c.b16 %v400, %v399
  %v483 = vpack.c.b16 %v402, %v401
  %v484 = vpack.c.b16 %v404, %v403
  %v485 = vpack.c.b16 %v406, %v405
  %v486 = vpack.c.b16 %v408, %v407
  %v487 = vpack.c.b16 %v410, %v409
  %v488 = vpack.c.b16 %v412, %v411
  %v489 = vpack.c.b16 %v414, %v413
  %v490 = vpack.c.b16 %v416, %v415
  %v491 = vpack.c.b16 %v418, %v417
  %v492 = vpack.c.b16 %v420, %v419
  %v493 = vpack.c.b16 %v422, %v421
  %v494 = vpack.c.b16 %v424, %v423
  %v495 = vpack.c.b16 %v426, %v425
  %v496 = vpack.c.b16 %v428, %v427
  %v497 = vpack.c.b16 %v430, %v429
  %v498 = vpack.c.b16 %v432, %v431
  %v499 = vpack.c.b16 %v434, %v433
  %v500 = vpack.c.b16 %v436, %v435
  %565 = vmatprep.subr.bf16.mxu0 0
  %566 = vmatpush1.bf16.msra.mxu0 %v437
  %567 = vmatprep.subr.bf16.mxu0 0
  %568 = vmatpush1.bf16.msra.mxu0 %v438
  %569 = vmatprep.subr.bf16.mxu0 0
  %570 = vmatpush1.bf16.msra.mxu0 %v439
  %571 = vmatprep.subr.bf16.mxu0 0
  %572 = vmatpush1.bf16.msra.mxu0 %v440
  %573 = vmatprep.subr.bf16.mxu0 0
  %574 = vmatpush1.bf16.msra.mxu0 %v441
  %575 = vmatprep.subr.bf16.mxu0 0
  %576 = vmatpush1.bf16.msra.mxu0 %v442
  %577 = vmatprep.subr.bf16.mxu0 0
  %578 = vmatpush1.bf16.msra.mxu0 %v443
  %579 = vmatprep.subr.bf16.mxu0 0
  %580 = vmatpush1.bf16.msra.mxu0 %v444
  %581 = vmatprep.subr.bf16.mxu0 0
  %582 = vmatpush1.bf16.msra.mxu0 %v445
  %583 = vmatprep.subr.bf16.mxu0 0
  %584 = vmatpush1.bf16.msra.mxu0 %v446
  %585 = vmatprep.subr.bf16.mxu0 0
  %586 = vmatpush1.bf16.msra.mxu0 %v447
  %587 = vmatprep.subr.bf16.mxu0 0
  %588 = vmatpush1.bf16.msra.mxu0 %v448
  %589 = vmatprep.subr.bf16.mxu0 0
  %590 = vmatpush1.bf16.msra.mxu0 %v449
  %591 = vmatprep.subr.bf16.mxu0 0
  %592 = vmatpush1.bf16.msra.mxu0 %v450
  %593 = vmatprep.subr.bf16.mxu0 0
  %594 = vmatpush1.bf16.msra.mxu0 %v451
  %595 = vmatprep.subr.bf16.mxu0 0
  %596 = vmatpush1.bf16.msra.mxu0 %v452
  %597 = vmatprep.mubr.bf16.mxu0 %v166
  %598 = vmatmul.mubr.bf16.gmra.mrb[0].mxu0 %v165
  %v599 = vpop.f32.mrb[0].mxu0
  %v600 = vadd.f32 0.0, %v599
  %v601 = vpop.f32.mrb[0].mxu0
  %v602 = vpop.f32.mrb[0].mxu0
  %v603 = vpop.f32.mrb[0].mxu0
  %604 = vdwg.mxu0
  %605 = vmatprep.subr.bf16.mxu0 0
  %606 = vmatpush1.bf16.msra.mxu0 %v453
  %607 = vmatprep.subr.bf16.mxu0 0
  %608 = vmatpush1.bf16.msra.mxu0 %v454
  %609 = vmatprep.subr.bf16.mxu0 0
  %610 = vmatpush1.bf16.msra.mxu0 %v455
  %611 = vmatprep.subr.bf16.mxu0 0
  %612 = vmatpush1.bf16.msra.mxu0 %v456
  %613 = vmatprep.subr.bf16.mxu0 0
  %614 = vmatpush1.bf16.msra.mxu0 %v457
  %615 = vmatprep.subr.bf16.mxu0 0
  %616 = vmatpush1.bf16.msra.mxu0 %v458
  %617 = vmatprep.subr.bf16.mxu0 0
  %618 = vmatpush1.bf16.msra.mxu0 %v459
  %619 = vmatprep.subr.bf16.mxu0 0
  %620 = vmatpush1.bf16.msra.mxu0 %v460
  %621 = vmatprep.subr.bf16.mxu0 0
  %622 = vmatpush1.bf16.msra.mxu0 %v461
  %623 = vmatprep.subr.bf16.mxu0 0
  %624 = vmatpush1.bf16.msra.mxu0 %v462
  %625 = vmatprep.subr.bf16.mxu0 0
  %626 = vmatpush1.bf16.msra.mxu0 %v463
  %627 = vmatprep.subr.bf16.mxu0 0
  %628 = vmatpush1.bf16.msra.mxu0 %v464
  %629 = vmatprep.subr.bf16.mxu0 0
  %630 = vmatpush1.bf16.msra.mxu0 %v465
  %631 = vmatprep.subr.bf16.mxu0 0
  %632 = vmatpush1.bf16.msra.mxu0 %v466
  %633 = vmatprep.subr.bf16.mxu0 0
  %634 = vmatpush1.bf16.msra.mxu0 %v467
  %635 = vmatprep.subr.bf16.mxu0 0
  %636 = vmatpush1.bf16.msra.mxu0 %v468
  %637 = vmatprep.mubr.bf16.mxu0 %v168
  %638 = vmatmul.mubr.bf16.gmra.mrb[0].mxu0 %v167
  %v639 = vpop.f32.mrb[0].mxu0
  %v640 = vadd.f32 %v600, %v639
  %v641 = vpop.f32.mrb[0].mxu0
  %v642 = vpop.f32.mrb[0].mxu0
  %v643 = vpop.f32.mrb[0].mxu0
  %644 = vdwg.mxu0
  %645 = vmatprep.subr.bf16.mxu0 0
  %646 = vmatpush1.bf16.msra.mxu0 %v469
  %647 = vmatprep.subr.bf16.mxu0 0
  %648 = vmatpush1.bf16.msra.mxu0 %v470
  %649 = vmatprep.subr.bf16.mxu0 0
  %650 = vmatpush1.bf16.msra.mxu0 %v471
  %651 = vmatprep.subr.bf16.mxu0 0
  %652 = vmatpush1.bf16.msra.mxu0 %v472
  %653 = vmatprep.subr.bf16.mxu0 0
  %654 = vmatpush1.bf16.msra.mxu0 %v473
  %655 = vmatprep.subr.bf16.mxu0 0
  %656 = vmatpush1.bf16.msra.mxu0 %v474
  %657 = vmatprep.subr.bf16.mxu0 0
  %658 = vmatpush1.bf16.msra.mxu0 %v475
  %659 = vmatprep.subr.bf16.mxu0 0
  %660 = vmatpush1.bf16.msra.mxu0 %v476
  %661 = vmatprep.subr.bf16.mxu0 0
  %662 = vmatpush1.bf16.msra.mxu0 %v477
  %663 = vmatprep.subr.bf16.mxu0 0
  %664 = vmatpush1.bf16.msra.mxu0 %v478
  %665 = vmatprep.subr.bf16.mxu0 0
  %666 = vmatpush1.bf16.msra.mxu0 %v479
  %667 = vmatprep.subr.bf16.mxu0 0
  %668 = vmatpush1.bf16.msra.mxu0 %v480
  %669 = vmatprep.subr.bf16.mxu0 0
  %670 = vmatpush1.bf16.msra.mxu0 %v481
  %671 = vmatprep.subr.bf16.mxu0 0
  %672 = vmatpush1.bf16.msra.mxu0 %v482
  %673 = vmatprep.subr.bf16.mxu0 0
  %674 = vmatpush1.bf16.msra.mxu0 %v483
  %675 = vmatprep.subr.bf16.mxu0 0
  %676 = vmatpush1.bf16.msra.mxu0 %v484
  %677 = vmatprep.mubr.bf16.mxu0 %v170
  %678 = vmatmul.mubr.bf16.gmra.mrb[0].mxu0 %v169
  %v679 = vpop.f32.mrb[0].mxu0
  %v680 = vadd.f32 %v640, %v679
  %v681 = vpop.f32.mrb[0].mxu0
  %v682 = vpop.f32.mrb[0].mxu0
  %v683 = vpop.f32.mrb[0].mxu0
  %684 = vdwg.mxu0
  %685 = vmatprep.subr.bf16.mxu0 0
  %686 = vmatpush1.bf16.msra.mxu0 %v485
  %687 = vmatprep.subr.bf16.mxu0 0
  %688 = vmatpush1.bf16.msra.mxu0 %v486
  %689 = vmatprep.subr.bf16.mxu0 0
  %690 = vmatpush1.bf16.msra.mxu0 %v487
  %691 = vmatprep.subr.bf16.mxu0 0
  %692 = vmatpush1.bf16.msra.mxu0 %v488
  %693 = vmatprep.subr.bf16.mxu0 0
  %694 = vmatpush1.bf16.msra.mxu0 %v489
  %695 = vmatprep.subr.bf16.mxu0 0
  %696 = vmatpush1.bf16.msra.mxu0 %v490
  %697 = vmatprep.subr.bf16.mxu0 0
  %698 = vmatpush1.bf16.msra.mxu0 %v491
  %699 = vmatprep.subr.bf16.mxu0 0
  %700 = vmatpush1.bf16.msra.mxu0 %v492
  %701 = vmatprep.subr.bf16.mxu0 0
  %702 = vmatpush1.bf16.msra.mxu0 %v493
  %703 = vmatprep.subr.bf16.mxu0 0
  %704 = vmatpush1.bf16.msra.mxu0 %v494
  %705 = vmatprep.subr.bf16.mxu0 0
  %706 = vmatpush1.bf16.msra.mxu0 %v495
  %707 = vmatprep.subr.bf16.mxu0 0
  %708 = vmatpush1.bf16.msra.mxu0 %v496
  %709 = vmatprep.subr.bf16.mxu0 0
  %710 = vmatpush1.bf16.msra.mxu0 %v497
  %711 = vmatprep.subr.bf16.mxu0 0
  %712 = vmatpush1.bf16.msra.mxu0 %v498
  %713 = vmatprep.subr.bf16.mxu0 0
  %714 = vmatpush1.bf16.msra.mxu0 %v499
  %715 = vmatprep.subr.bf16.mxu0 0
  %716 = vmatpush1.bf16.msra.mxu0 %v500
  %717 = vmatprep.mubr.bf16.mxu0 %v172
  %718 = vmatmul.mubr.bf16.gmra.mrb[0].mxu0 %v171
  %v719 = vpop.f32.mrb[0].mxu0
  %v720 = vadd.f32 %v680, %v719
  %v721 = vpop.f32.mrb[0].mxu0
  %v722 = vpop.f32.mrb[0].mxu0
  %v723 = vpop.f32.mrb[0].mxu0
  %724 = vdwg.mxu0
  %v725 = vadd.f32 %v20, %v720
  %726 = vst [vmem:[#allocation2] sm:$0xff] %v725
  // Predicated region
  $region18: #{netD_3d_forward.8} parent=0 // pred_check
    %p727 = pneg %p15
  $region19: #{netD_3d_forward.8} parent=0 // pred_check_branch
    %729 = sbr.rel (%p727) target = $region21
  $region20: #{netD_3d_forward.8} parent=0 // pred_region
    %v730 = vld [vmem:[#allocation2] sm:$0xff]
    %v731 = vld [vmem:[%s2] sm:$0x1]
    %v733 = vlaneseq
    %v734 = vshrl.u32 %v733, 7
    %v735 = vsub.s32 0, %v734
    %v736 = vrot.slane %v731, %v735
    %v738 = vadd.f32 %v730, %v736
    %vm739 = vcmp.ge.f32.partialorder %v738, 0.0
    %v740 = vmul.f32 %v738, 0.01
    %v741 = vsel %vm739, %v738, %v740
    %v742 = vpack.c.bf16 %v741, %v741
    %743 = vst [vmem:[%s3] sm:$0xf] %v742
  $region21: #{netD_3d_forward.8} parent=0 // pred_fallthru
    _
  // Predicated region
  $region22: #{netD_3d_forward.8} parent=0 // pred_check
    _
  $region23: #{netD_3d_forward.8} parent=0 // pred_check_branch
    %745 = sbr.rel (0) target = $region25
  $region24: #{netD_3d_forward.8} parent=0 // pred_region
    _
  $region25: #{netD_3d_forward.8} parent=0 // pred_fallthru
    _
  // Predicated region
  $region26: #{netD_3d_forward.8} parent=0 // pred_check
    _
  $region27: #{netD_3d_forward.8} parent=0 // pred_check_branch
    %747 = sbr.rel (0) target = $region29
  $region28: #{netD_3d_forward.8} parent=0 // pred_region
    _
  $region29: #{netD_3d_forward.8} parent=0 // pred_fallthru
    _

// kernel: netD_3d_forward.9
$region0: #{netD_3d_forward.9}
  #allocation0 [shape = 'u32[]', space=smem, size = 0x4, offset = 0x4, fixed_abs, tag = 'smem constant byte address 0x4 - core index']
  #allocation1 [shape = 'u32[144,128]{1,0:T(1,128)}', space=vmem, size = 0x12000, scoped, tag = 'internal scratch']
  #allocation2 [shape = 'f32[8,128]{1,0:T(8,128)}', space=vmem, size = 0x1000, scoped, tag = 'scratch operand']
  %s0 = inlined_call_operand.vmem [shape: bf16[8,128], index: 0, kind: input, shape index: {}]
  %s1 = inlined_call_operand.vmem [shape: bf16[128,128], index: 1, kind: input, shape index: {}]
  %s2 = inlined_call_operand.vmem [shape: f32[1,128], index: 2, kind: input, shape index: {}]
  %s3 = inlined_call_operand.vmem [shape: f32[8,128], index: 3, kind: output, shape index: {}]
  %s4 = sld [smem:[#allocation0]]
  $region30: #{netD_3d_forward.9} parent=0
    _
  %s6 = ssub.s32 1, %s4
  %s7 = scalar_select 0, %s6, %s4
  // Predicated region
  $region2: #{netD_3d_forward.9} parent=0 // pred_check
    _
  $region3: #{netD_3d_forward.9} parent=0 // pred_check_branch
    %9 = sbr.rel (0) target = $region5
  $region4: #{netD_3d_forward.9} parent=0 // pred_region
    _
  $region5: #{netD_3d_forward.9} parent=0 // pred_fallthru
    _
  // Predicated region
  $region6: #{netD_3d_forward.9} parent=0 // pred_check
    _
  $region7: #{netD_3d_forward.9} parent=0 // pred_check_branch
    %11 = sbr.rel (0) target = $region9
  $region8: #{netD_3d_forward.9} parent=0 // pred_region
    _
  $region9: #{netD_3d_forward.9} parent=0 // pred_fallthru
    _
  // Predicated region
  $region10: #{netD_3d_forward.9} parent=0 // pred_check
    _
  $region11: #{netD_3d_forward.9} parent=0 // pred_check_branch
    %13 = sbr.rel (0) target = $region13
  $region12: #{netD_3d_forward.9} parent=0 // pred_region
    _
  $region13: #{netD_3d_forward.9} parent=0 // pred_fallthru
    _
  %p15 = scmp.eq.s32.totalorder 0, 0
  // Predicated region
  $region14: #{netD_3d_forward.9} parent=0 // pred_check
    %p16 = pneg %p15
  $region15: #{netD_3d_forward.9} parent=0 // pred_check_branch
    %18 = sbr.rel (%p16) target = $region17
  $region16: #{netD_3d_forward.9} parent=0 // pred_region
    %19 = vst [vmem:[#allocation2] sm:$0xff] 0.0
  $region17: #{netD_3d_forward.9} parent=0 // pred_fallthru
    _
  %v20 = vld [vmem:[#allocation2] sm:$0xff]
  %v21 = vld [vmem:[%s0] sm:$0xf]
  %v22 = vld [vmem:[%s1] sm:$0xf]
  %v23 = vld [vmem:[%s1 + $0x4] sm:$0xf]
  %v24 = vld [vmem:[%s1 + $0x8] sm:$0xf]
  %v25 = vld [vmem:[%s1 + $0xc] sm:$0xf]
  %v26 = vld [vmem:[%s1 + $0x10] sm:$0xf]
  %v27 = vld [vmem:[%s1 + $0x14] sm:$0xf]
  %v28 = vld [vmem:[%s1 + $0x18] sm:$0xf]
  %v29 = vld [vmem:[%s1 + $0x1c] sm:$0xf]
  %v30 = vld [vmem:[%s1 + $0x20] sm:$0xf]
  %v31 = vld [vmem:[%s1 + $0x24] sm:$0xf]
  %v32 = vld [vmem:[%s1 + $0x28] sm:$0xf]
  %v33 = vld [vmem:[%s1 + $0x2c] sm:$0xf]
  %v34 = vld [vmem:[%s1 + $0x30] sm:$0xf]
  %v35 = vld [vmem:[%s1 + $0x34] sm:$0xf]
  %v36 = vld [vmem:[%s1 + $0x38] sm:$0xf]
  %v37 = vld [vmem:[%s1 + $0x3c] sm:$0xf]
  %v54 = vunpack.c.l.b16 %v22
  %v55 = vunpack.c.l.b16 %v23
  %v56 = vunpack.c.l.b16 %v24
  %v57 = vunpack.c.l.b16 %v25
  %v58 = vunpack.c.l.b16 %v26
  %v59 = vunpack.c.l.b16 %v27
  %v60 = vunpack.c.l.b16 %v28
  %v61 = vunpack.c.l.b16 %v29
  %v62 = vunpack.c.l.b16 %v30
  %v63 = vunpack.c.l.b16 %v31
  %v64 = vunpack.c.l.b16 %v32
  %v65 = vunpack.c.l.b16 %v33
  %v66 = vunpack.c.l.b16 %v34
  %v67 = vunpack.c.l.b16 %v35
  %v68 = vunpack.c.l.b16 %v36
  %v69 = vunpack.c.l.b16 %v37
  %v70 = vpack.c.b16 %v55, %v54
  %v71 = vpack.c.b16 %v57, %v56
  %v72 = vpack.c.b16 %v59, %v58
  %v73 = vpack.c.b16 %v61, %v60
  %v74 = vpack.c.b16 %v63, %v62
  %v75 = vpack.c.b16 %v65, %v64
  %v76 = vpack.c.b16 %v67, %v66
  %v77 = vpack.c.b16 %v69, %v68
  %86 = vmatprep.subr.bf16.mxu0 0
  %87 = vmatpush1.bf16.msra.mxu0 %v70
  %88 = vmatprep.subr.bf16.mxu0 0
  %89 = vmatpush1.bf16.msra.mxu0 %v71
  %90 = vmatprep.subr.bf16.mxu0 0
  %91 = vmatpush1.bf16.msra.mxu0 %v72
  %92 = vmatprep.subr.bf16.mxu0 0
  %93 = vmatpush1.bf16.msra.mxu0 %v73
  %94 = vmatprep.subr.bf16.mxu0 0
  %95 = vmatpush1.bf16.msra.mxu0 %v74
  %96 = vmatprep.subr.bf16.mxu0 0
  %97 = vmatpush1.bf16.msra.mxu0 %v75
  %98 = vmatprep.subr.bf16.mxu0 0
  %99 = vmatpush1.bf16.msra.mxu0 %v76
  %100 = vmatprep.subr.bf16.mxu0 0
  %101 = vmatpush1.bf16.msra.mxu0 %v77
  %102 = vmatprep.subr.bf16.mxu0 0
  %103 = vmatpush1.bf16.msra.mxu0 0
  %104 = vmatprep.subr.bf16.mxu0 0
  %105 = vmatpush1.bf16.msra.mxu0 0
  %106 = vmatprep.subr.bf16.mxu0 0
  %107 = vmatpush1.bf16.msra.mxu0 0
  %108 = vmatprep.subr.bf16.mxu0 0
  %109 = vmatpush1.bf16.msra.mxu0 0
  %110 = vmatprep.subr.bf16.mxu0 0
  %111 = vmatpush1.bf16.msra.mxu0 0
  %112 = vmatprep.subr.bf16.mxu0 0
  %113 = vmatpush1.bf16.msra.mxu0 0
  %114 = vmatprep.subr.bf16.mxu0 0
  %115 = vmatpush1.bf16.msra.mxu0 0
  %116 = vmatprep.subr.bf16.mxu0 0
  %117 = vmatpush1.bf16.msra.mxu0 0
  %118 = vmatprep.mubr.bf16.mxu0 0
  %119 = vmatmul.mubr.bf16.gmra.mrb[0].mxu0 %v21
  %v120 = vpop.f32.mrb[0].mxu0
  %v121 = vadd.f32 0.0, %v120
  %v122 = vpop.f32.mrb[0].mxu0
  %v123 = vpop.f32.mrb[0].mxu0
  %v124 = vpop.f32.mrb[0].mxu0
  %125 = vdwg.mxu0
  %v126 = vadd.f32 %v20, %v121
  %127 = vst [vmem:[#allocation2] sm:$0xff] %v126
  // Predicated region
  $region18: #{netD_3d_forward.9} parent=0 // pred_check
    %p128 = pneg %p15
  $region19: #{netD_3d_forward.9} parent=0 // pred_check_branch
    %130 = sbr.rel (%p128) target = $region21
  $region20: #{netD_3d_forward.9} parent=0 // pred_region
    %v131 = vld [vmem:[#allocation2] sm:$0xff]
    %v132 = vld [vmem:[%s2] sm:$0x1]
    %v134 = vlaneseq
    %v135 = vshrl.u32 %v134, 7
    %v136 = vsub.s32 0, %v135
    %v137 = vrot.slane %v132, %v136
    %v139 = vadd.f32 %v131, %v137
    %140 = vst [vmem:[%s3] sm:$0xff] %v139
  $region21: #{netD_3d_forward.9} parent=0 // pred_fallthru
    _
  // Predicated region
  $region22: #{netD_3d_forward.9} parent=0 // pred_check
    _
  $region23: #{netD_3d_forward.9} parent=0 // pred_check_branch
    %142 = sbr.rel (0) target = $region25
  $region24: #{netD_3d_forward.9} parent=0 // pred_region
    _
  $region25: #{netD_3d_forward.9} parent=0 // pred_fallthru
    _
  // Predicated region
  $region26: #{netD_3d_forward.9} parent=0 // pred_check
    _
  $region27: #{netD_3d_forward.9} parent=0 // pred_check_branch
    %144 = sbr.rel (0) target = $region29
  $region28: #{netD_3d_forward.9} parent=0 // pred_region
    _
  $region29: #{netD_3d_forward.9} parent=0 // pred_fallthru
    _

</llo_original>
